<compile_context>
chip_gen: v6e
topology: v6e:2x2x1
jax: 0.10.0
libtpu: 0.0.40
codegen_flags: <defaults>
</compile_context>

<pallas_src>
import functools

import jax
import jax.numpy as jnp
from jax.experimental import pallas as pl
from jax.experimental.pallas import tpu as pltpu


# ----------------------------------------------------------------------------
# Pallas kernel: one MaskGCNLayer, ALL timesteps inside a single kernel call.
#   rows are ordered (node, batch):  row = n * B + b
# ----------------------------------------------------------------------------
def mask_gcn_layer_kernel(
    x_ref,        # [T, N*B, Ci]
    init_ref,     # [N*B, Co]
    sup_ref,      # [K*N*B, N*B]   block-diagonal (over batch) supports, k-stacked
    wzrx_ref,     # [K*N, Ci, 2Co] fused z/r weights, x part
    wzrs_ref,     # [K*N, Co, 2Co] fused z/r weights, state part
    wcx_ref,      # [K*N, Ci, Co]  candidate weights, x part
    wcs_ref,      # [K*N, Co, Co]  candidate weights, state part
    bzr_ref,      # [N*B, 2Co]
    bc_ref,       # [N*B, Co]
    wmx_ref,      # [Ci, 1]        mask net
    wms_ref,      # [Co, 1]
    mbias_ref,    # [T, N*B, 1]    precomputed node + time + bias term of mask logit
    states_ref,   # out: [T, N*B, Co]
    masks_ref,    # out: [T, N*B, 1]
    state_scr,    # scratch VMEM [N*B, Co]
    *, K, N, B, enable_expl, inverse_mask,
):
    T = x_ref.shape[0]
    NB = N * B
    Ci = x_ref.shape[-1]
    Co = init_ref.shape[-1]

    state_scr[...] = init_ref[...]

    @pl.loop(0, T)
    def _(t):
        xt = x_ref[t]                       # [NB, Ci]
        st = state_scr[...]                 # [NB, Co]
        sup = sup_ref[...]                  # [K*NB, NB]

        # ---- explainability node mask --------------------------------------
        logit = (jnp.dot(xt, wmx_ref[...], preferred_element_type=jnp.float32)
                 + jnp.dot(st, wms_ref[...], preferred_element_type=jnp.float32)
                 + mbias_ref[t])                                     # [NB, 1]
        mask = jax.nn.sigmoid(logit)
        applied = (1.0 - mask) if inverse_mask else mask
        xu = xt * applied if enable_expl else xt

        # ---- hoisted, K-stacked support products (shared by all gates) -----
        gx = jnp.dot(sup, xu, preferred_element_type=jnp.float32)    # [K*NB, Ci]
        gs = jnp.dot(sup, st, preferred_element_type=jnp.float32)    # [K*NB, Co]
        gx3 = gx.reshape(K * N, B, Ci)
        gs3 = gs.reshape(K * N, B, Co)

        def per_node(lhs3, w_ref):
            # batched-(k,node) MXU contraction, then reduce over k.
            o = jnp.einsum('xbc,xco->xbo', lhs3, w_ref[...],
                           preferred_element_type=jnp.float32)       # [K*N, B, O]
            out_w = o.shape[-1]
            return jnp.sum(o.reshape(K, N, B, out_w), axis=0).reshape(NB, out_w)

        # ---- z and r gates fused into one 2*Co-wide contraction ------------
        zr = jax.nn.sigmoid(bzr_ref[...]
                            + per_node(gx3, wzrx_ref)
                            + per_node(gs3, wzrs_ref))               # [NB, 2Co]
        z = zr[:, :Co]
        r = zr[:, Co:]

        # ---- candidate: reuse sup@xu, only sup@(z*state) is new ------------
        gzs = jnp.dot(sup, z * st, preferred_element_type=jnp.float32)
        hc = jnp.tanh(bc_ref[...]
                      + per_node(gx3, wcx_ref)
                      + per_node(gzs.reshape(K * N, B, Co), wcs_ref))
        h = r * st + (1.0 - r) * hc

        state_scr[...] = h
        states_ref[t] = h
        masks_ref[t] = mask


# ----------------------------------------------------------------------------
# Time-invariant precompute (plain JAX, outside the kernel)
# ----------------------------------------------------------------------------
def cheb_supports(E, K):
    N = E.shape[0]
    A = jax.nn.softmax(jax.nn.relu(E @ E.T), axis=1)
    s = [jnp.eye(N, dtype=E.dtype), A]
    for _ in range(2, K):
        s.append(2.0 * A @ s[-1] - s[-2])
    return jnp.stack(s[:K], axis=0)


def make_layer_pools(key, Ci, Co, K, De):
    ks = jax.random.split(key, 6)
    return dict(
        wpool_gate=0.1 * jax.random.normal(ks[0], (De, K, Ci + Co, 2 * Co), jnp.float32),
        bpool_gate=0.1 * jax.random.normal(ks[1], (De, 2 * Co), jnp.float32),
        wpool_up=0.1 * jax.random.normal(ks[2], (De, K, Ci + Co, Co), jnp.float32),
        bpool_up=0.1 * jax.random.normal(ks[3], (De, Co), jnp.float32),
        wm=0.1 * jax.random.normal(ks[4], (Ci + Co + 2 * De, 1), jnp.float32),
        bm=0.1 * jax.random.normal(ks[5], (1, 1), jnp.float32),
    )


def derive_layer_params(E, pools, Ci, Co, De):
    Wg = jnp.einsum('nd,dkio->nkio', E, pools['wpool_gate'])   # [N,K,Ci+Co,2Co]
    bg = E @ pools['bpool_gate']                               # [N,2Co]
    Wu = jnp.einsum('nd,dkio->nkio', E, pools['wpool_up'])     # [N,K,Ci+Co,Co]
    bu = E @ pools['bpool_up']                                 # [N,Co]
    wm = pools['wm']
    return dict(
        Wz_x=Wg[:, :, :Ci, :Co], Wz_s=Wg[:, :, Ci:, :Co], bz=bg[:, :Co],
        Wr_x=Wg[:, :, :Ci, Co:], Wr_s=Wg[:, :, Ci:, Co:], br=bg[:, Co:],
        Wc_x=Wu[:, :, :Ci, :], Wc_s=Wu[:, :, Ci:, :], bc=bu,
        wm_x=wm[:Ci], wm_s=wm[Ci:Ci + Co],
        wm_e=wm[Ci + Co:Ci + Co + De], wm_t=wm[Ci + Co + De:],
        bm=pools['bm'],
    )


def pack_layer_operands(p, supports, E, time_emb, B):
    """Repack per-layer params into the fused, row-stacked kernel operands."""
    N, K, Ci, Co = p['Wz_x'].shape
    NB = N * B
    eyeB = jnp.eye(B, dtype=supports.dtype)
    # block-diagonal (over batch) supports, stacked over k: [K*NB, NB]
    sup_s = jnp.stack([jnp.kron(supports[k], eyeB) for k in range(K)], 0)
    sup_s = sup_s.reshape(K * NB, NB)

    def stack_kn(w):   # [N, K, C, O] -> [K*N, C, O]
        return jnp.transpose(w, (1, 0, 2, 3)).reshape(K * N, w.shape[2], w.shape[3])

    wzrx = stack_kn(jnp.concatenate([p['Wz_x'], p['Wr_x']], axis=-1))   # [K*N,Ci,2Co]
    wzrs = stack_kn(jnp.concatenate([p['Wz_s'], p['Wr_s']], axis=-1))   # [K*N,Co,2Co]
    wcx = stack_kn(p['Wc_x'])                                           # [K*N,Ci,Co]
    wcs = stack_kn(p['Wc_s'])                                           # [K*N,Co,Co]
    bzr = jnp.repeat(jnp.concatenate([p['bz'], p['br']], axis=-1), B, axis=0)
    bc = jnp.repeat(p['bc'], B, axis=0)
    # precomputed (node + bias + time) part of the mask logit: [T, NB, 1]
    mbias = (jnp.repeat(E @ p['wm_e'] + p['bm'], B, axis=0)[None]
             + (time_emb @ p['wm_t'])[:, None, :])
    return dict(sup_s=sup_s, wzrx=wzrx, wzrs=wzrs, wcx=wcx, wcs=wcs,
                bzr=bzr, bc=bc, wmx=p['wm_x'], wms=p['wm_s'], mbias=mbias)


# ----------------------------------------------------------------------------
# One layer = one (gridless) pallas_call; whole recurrence inside the kernel.
# ----------------------------------------------------------------------------
def run_layer_pallas(x_tnb, init_nb, ops, K, N, B, Co, enable_expl, inverse_mask):
    T = x_tnb.shape[0]
    NB = N * B
    kernel = functools.partial(
        mask_gcn_layer_kernel, K=K, N=N, B=B,
        enable_expl=enable_expl, inverse_mask=inverse_mask)

    states, masks = pl.pallas_call(
        kernel,
        out_shape=(jax.ShapeDtypeStruct((T, NB, Co), jnp.float32),
                   jax.ShapeDtypeStruct((T, NB, 1), jnp.float32)),
        scratch_shapes=[pltpu.VMEM((NB, Co), jnp.float32)],
    )(x_tnb, init_nb, ops['sup_s'], ops['wzrx'], ops['wzrs'], ops['wcx'],
      ops['wcs'], ops['bzr'], ops['bc'], ops['wmx'], ops['wms'], ops['mbias'])
    return states, masks


def mask_gcn_stack_pallas(x, init_states, E, time_emb, layer_params,
                          cheb_k, enable_expl, inverse_mask):
    B, T, N, _ = x.shape
    supports = cheb_supports(E, cheb_k)
    # kernel-friendly layout: [T, N*B, C], rows ordered (node, batch)
    cur = jnp.transpose(x, (1, 2, 0, 3)).reshape(T, N * B, -1)

    output_hidden, all_masks, all_losses = [], [], []
    for li, p in enumerate(layer_params):
        Co = p['bz'].shape[-1]
        ops = pack_layer_operands(p, supports, E, time_emb, B)
        init_nb = jnp.transpose(init_states[li], (1, 0, 2)).reshape(N * B, Co)
        states, masks = run_layer_pallas(
            cur, init_nb, ops, cheb_k, N, B, Co, enable_expl, inverse_mask)

        masks_btn = jnp.transpose(masks[..., 0].reshape(T, N, B), (2, 0, 1))  # [B,T,N]
        losses_bt = jnp.mean(jnp.abs(masks_btn), axis=2)                      # [B,T]
        hid = jnp.transpose(states[-1].reshape(N, B, Co), (1, 0, 2))          # [B,N,Co]

        output_hidden.append(hid)
        all_masks.append(masks_btn)
        all_losses.append(losses_bt)
        cur = states
    out = jnp.transpose(cur.reshape(T, N, B, -1), (2, 0, 1, 3))               # [B,T,N,Co]
    return out, output_hidden, all_masks, all_losses


# ----------------------------------------------------------------------------
# Pure-JAX reference (same math) for the correctness check.
# ----------------------------------------------------------------------------
def run_layer_ref(x, init_state, E, time_emb, p, cheb_k,
                  enable_expl, inverse_mask):
    B, T, N, Ci = x.shape
    sup = cheb_supports(E, cheb_k)

    def gcn(xin, sin, wx, ws, bias):
        gx = jnp.einsum('knm,bmi->bnki', sup, xin)
        gs = jnp.einsum('knm,bmj->bnkj', sup, sin)
        return (jnp.einsum('bnki,nkio->bno', gx, wx)
                + jnp.einsum('bnkj,nkjo->bno', gs, ws) + bias[None])

    def cell(st, xt, te):
        logit = (xt @ p['wm_x'] + st @ p['wm_s'] + (E @ p['wm_e'])[None]
                 + (te @ p['wm_t'])[0] + p['bm'][None])
        mask = jax.nn.sigmoid(logit)
        applied = (1.0 - mask) if inverse_mask else mask
        xu = xt * applied if enable_expl else xt
        mloss = jnp.mean(jnp.abs(mask), axis=(1, 2))
        z = jax.nn.sigmoid(gcn(xu, st, p['Wz_x'], p['Wz_s'], p['bz']))
        r = jax.nn.sigmoid(gcn(xu, st, p['Wr_x'], p['Wr_s'], p['br']))
        hc = jnp.tanh(gcn(xu, z * st, p['Wc_x'], p['Wc_s'], p['bc']))
        h = r * st + (1.0 - r) * hc
        return h, mask[..., 0], mloss

    st, states, masks, losses = init_state, [], [], []
    for t in range(T):
        st, m, l = cell(st, x[:, t], time_emb[t])
        states.append(st); masks.append(m); losses.append(l)
    return jnp.stack(states, 1), jnp.stack(masks, 1), jnp.stack(losses, 1)


def mask_gcn_stack_ref(x, init_states, E, time_emb, layer_params,
                       cheb_k, enable_expl, inverse_mask):
    current = x
    output_hidden, all_masks, all_losses = [], [], []
    for li, p in enumerate(layer_params):
        states, masks, losses = run_layer_ref(
            current, init_states[li], E, time_emb, p, cheb_k,
            enable_expl, inverse_mask)
        output_hidden.append(states[:, -1])
        all_masks.append(masks)
        all_losses.append(losses)
        current = states
    return current, output_hidden, all_masks, all_losses


# ----------------------------------------------------------------------------
if __name__ == "__main__":
    B, T, N = 2, 8, 8
    dim_in, dim_out, cheb_k, De = 2, 16, 2, 4
    num_layers = 2
    enable_explainability, inverse_mask = True, False

    key = jax.random.PRNGKey(0)
    k_x, k_e, k_te, k_p = jax.random.split(key, 4)

    x = jax.random.normal(k_x, (B, T, N, dim_in), jnp.float32)
    E = jax.random.normal(k_e, (N, De), jnp.float32)          # weight_embeddings
    time_emb = jax.random.normal(k_te, (T, De), jnp.float32)  # time_embeddings
    init_states = jnp.zeros((num_layers, B, N, dim_out), jnp.float32)

    layer_keys = jax.random.split(k_p, num_layers)
    layer_params = []
    for li in range(num_layers):
        Ci = dim_in if li == 0 else dim_out
        pools = make_layer_pools(layer_keys[li], Ci, dim_out, cheb_k, De)
        layer_params.append(derive_layer_params(E, pools, Ci, dim_out, De))

    out, hidden, masks, losses = mask_gcn_stack_pallas(
        x, init_states, E, time_emb, layer_params, cheb_k,
        enable_explainability, inverse_mask)
    jax.block_until_ready(out)

    # correctness check against the pure-JAX reference
    out_r, hidden_r, masks_r, losses_r = mask_gcn_stack_ref(
        x, init_states, E, time_emb, layer_params, cheb_k,
        enable_explainability, inverse_mask)
    assert jnp.allclose(out, out_r, atol=2e-3, rtol=2e-3)
    for a, b in zip(masks, masks_r):
        assert jnp.allclose(a, b, atol=2e-3, rtol=2e-3)
    for a, b in zip(losses, losses_r):
        assert jnp.allclose(a, b, atol=2e-3, rtol=2e-3)
    for a, b in zip(hidden, hidden_r):
        assert jnp.allclose(a, b, atol=2e-3, rtol=2e-3)

    print("KERNEL_OK")
</pallas_src>

<mosaic_0001>
module attributes {stable_mosaic.version = 11 : i64} {
  func.func @mask_gcn_layer_kernel(%arg0: memref<8x16x2xf32, #tpu.memory_space<vmem>>, %arg1: memref<16x16xf32, #tpu.memory_space<vmem>>, %arg2: memref<32x16xf32, #tpu.memory_space<vmem>>, %arg3: memref<16x2x32xf32, #tpu.memory_space<vmem>>, %arg4: memref<16x16x32xf32, #tpu.memory_space<vmem>>, %arg5: memref<16x2x16xf32, #tpu.memory_space<vmem>>, %arg6: memref<16x16x16xf32, #tpu.memory_space<vmem>>, %arg7: memref<16x32xf32, #tpu.memory_space<vmem>>, %arg8: memref<16x16xf32, #tpu.memory_space<vmem>>, %arg9: memref<2x1xf32, #tpu.memory_space<vmem>>, %arg10: memref<16x1xf32, #tpu.memory_space<vmem>>, %arg11: memref<8x16x1xf32, #tpu.memory_space<vmem>>, %arg12: memref<8x16x16xf32, #tpu.memory_space<vmem>>, %arg13: memref<8x16x1xf32, #tpu.memory_space<vmem>>, %arg14: memref<16x16xf32, #tpu.memory_space<vmem>>) attributes {dimension_semantics = [], scalar_prefetch = 0 : i64, scratch_operands = 1 : i64, tpu.core_type = #tpu.core_type<tc>} {
    %c0 = arith.constant 0 : index
    %c0_0 = arith.constant 0 : index
    %0 = vector.load %arg1[%c0, %c0_0] : memref<16x16xf32, #tpu.memory_space<vmem>>, vector<16x16xf32>
    %c0_1 = arith.constant 0 : index
    %c0_2 = arith.constant 0 : index
    %1 = vector.load %arg14[%c0_1, %c0_2] : memref<16x16xf32, #tpu.memory_space<vmem>>, vector<16x16xf32>
    tpu.vector_store %arg14[%c0_1, %c0_2], %0 {strides = array<i32>} : memref<16x16xf32, #tpu.memory_space<vmem>>, vector<16x16xf32>,
    %c0_i32 = arith.constant 0 : i32
    %c8_i32 = arith.constant 8 : i32
    %2 = arith.addi %c0_i32, %c8_i32 : i32
    %c1_i32 = arith.constant 1 : i32
    scf.for %arg15 = %c0_i32 to %2 step %c1_i32  : i32 {
      %c1_i32_4 = arith.constant 1 : i32
      %3 = arith.muli %arg15, %c1_i32_4 : i32
      %c0_i32_5 = arith.constant 0 : i32
      %4 = arith.addi %c0_i32_5, %3 : i32
      %5 = arith.index_cast %4 : i32 to index
      %c0_6 = arith.constant 0 : index
      %c0_7 = arith.constant 0 : index
      %6 = vector.load %arg0[%5, %c0_6, %c0_7] : memref<8x16x2xf32, #tpu.memory_space<vmem>>, vector<1x16x2xf32>
      %7 = vector.shape_cast %6 : vector<1x16x2xf32> to vector<16x2xf32>
      %c0_8 = arith.constant 0 : index
      %c0_9 = arith.constant 0 : index
      %8 = vector.load %arg14[%c0_8, %c0_9] : memref<16x16xf32, #tpu.memory_space<vmem>>, vector<16x16xf32>
      %c0_10 = arith.constant 0 : index
      %c0_11 = arith.constant 0 : index
      %9 = vector.load %arg2[%c0_10, %c0_11] : memref<32x16xf32, #tpu.memory_space<vmem>>, vector<32x16xf32>
      %c0_12 = arith.constant 0 : index
      %c0_13 = arith.constant 0 : index
      %10 = vector.load %arg9[%c0_12, %c0_13] : memref<2x1xf32, #tpu.memory_space<vmem>>, vector<2x1xf32>
      %cst = arith.constant dense<0.000000e+00> : vector<16x1xf32>
      %11 = tpu.matmul %7, %10, %cst {dimension_numbers = #tpu.dot_dimension_numbers<[1], [0], [0], [1], [0, 0, 1, 1], [], []>} : vector<16x2xf32>, vector<2x1xf32>, vector<16x1xf32> -> vector<16x1xf32>
      %c0_14 = arith.constant 0 : index
      %c0_15 = arith.constant 0 : index
      %12 = vector.load %arg10[%c0_14, %c0_15] : memref<16x1xf32, #tpu.memory_space<vmem>>, vector<16x1xf32>
      %cst_16 = arith.constant dense<0.000000e+00> : vector<16x1xf32>
      %13 = tpu.matmul %8, %12, %cst_16 {dimension_numbers = #tpu.dot_dimension_numbers<[1], [0], [0], [1], [0, 0, 1, 1], [], []>} : vector<16x16xf32>, vector<16x1xf32>, vector<16x1xf32> -> vector<16x1xf32>
      %14 = arith.addf %11, %13 : vector<16x1xf32>
      %15 = arith.index_cast %4 : i32 to index
      %c0_17 = arith.constant 0 : index
      %c0_18 = arith.constant 0 : index
      %16 = vector.load %arg11[%15, %c0_17, %c0_18] : memref<8x16x1xf32, #tpu.memory_space<vmem>>, vector<1x16x1xf32>
      %17 = vector.shape_cast %16 : vector<1x16x1xf32> to vector<16x1xf32>
      %18 = arith.addf %14, %17 : vector<16x1xf32>
      %19 = arith.negf %18 : vector<16x1xf32>
      %20 = math.exp %19 : vector<16x1xf32>
      %cst_19 = arith.constant 1.000000e+00 : f32
      %21 = vector.broadcast %cst_19 : f32 to vector<16x1xf32>
      %22 = arith.addf %21, %20 : vector<16x1xf32>
      %23 = arith.divf %21, %22 : vector<16x1xf32>
      %24 = vector.broadcast %23 : vector<16x1xf32> to vector<16x2xf32>
      %25 = arith.mulf %7, %24 : vector<16x2xf32>
      %cst_20 = arith.constant dense<0.000000e+00> : vector<32x2xf32>
      %26 = tpu.matmul %9, %25, %cst_20 {dimension_numbers = #tpu.dot_dimension_numbers<[1], [0], [0], [1], [0, 0, 1, 1], [], []>} : vector<32x16xf32>, vector<16x2xf32>, vector<32x2xf32> -> vector<32x2xf32>
      %cst_21 = arith.constant dense<0.000000e+00> : vector<32x16xf32>
      %27 = tpu.matmul %9, %8, %cst_21 {dimension_numbers = #tpu.dot_dimension_numbers<[1], [0], [0], [1], [0, 0, 1, 1], [], []>} : vector<32x16xf32>, vector<16x16xf32>, vector<32x16xf32> -> vector<32x16xf32>
      %28 = vector.shape_cast %26 : vector<32x2xf32> to vector<16x2x2xf32>
      %29 = vector.shape_cast %27 : vector<32x16xf32> to vector<16x2x16xf32>
      %c0_22 = arith.constant 0 : index
      %c0_23 = arith.constant 0 : index
      %30 = vector.load %arg7[%c0_22, %c0_23] : memref<16x32xf32, #tpu.memory_space<vmem>>, vector<16x32xf32>
      %c0_24 = arith.constant 0 : index
      %c0_25 = arith.constant 0 : index
      %c0_26 = arith.constant 0 : index
      %31 = vector.load %arg3[%c0_24, %c0_25, %c0_26] : memref<16x2x32xf32, #tpu.memory_space<vmem>>, vector<16x2x32xf32>
      "tpu.trace_start"() <{level = 10 : i32, message = "xbc,xco->xbo"}> : () -> ()
      %cst_27 = arith.constant dense<0.000000e+00> : vector<16x2x32xf32>
      %32 = tpu.matmul %28, %31, %cst_27 {dimension_numbers = #tpu.dot_dimension_numbers<[2], [1], [1], [2], [0, 0, 0, 1, 1, 2], [0], [0]>} : vector<16x2x2xf32>, vector<16x2x32xf32>, vector<16x2x32xf32> -> vector<16x2x32xf32>
      "tpu.trace_stop"() : () -> ()
      %33 = vector.shape_cast %32 : vector<16x2x32xf32> to vector<2x8x2x32xf32>
      %cst_28 = arith.constant dense<0.000000e+00> : vector<8x2x32xf32>
      %34 = vector.multi_reduction <add>, %33, %cst_28 [0] : vector<2x8x2x32xf32> to vector<8x2x32xf32>
      %35 = vector.shape_cast %34 : vector<8x2x32xf32> to vector<16x32xf32>
      %36 = arith.addf %30, %35 : vector<16x32xf32>
      %c0_29 = arith.constant 0 : index
      %c0_30 = arith.constant 0 : index
      %c0_31 = arith.constant 0 : index
      %37 = vector.load %arg4[%c0_29, %c0_30, %c0_31] : memref<16x16x32xf32, #tpu.memory_space<vmem>>, vector<16x16x32xf32>
      "tpu.trace_start"() <{level = 10 : i32, message = "xbc,xco->xbo"}> : () -> ()
      %cst_32 = arith.constant dense<0.000000e+00> : vector<16x2x32xf32>
      %38 = tpu.matmul %29, %37, %cst_32 {dimension_numbers = #tpu.dot_dimension_numbers<[2], [1], [1], [2], [0, 0, 0, 1, 1, 2], [0], [0]>} : vector<16x2x16xf32>, vector<16x16x32xf32>, vector<16x2x32xf32> -> vector<16x2x32xf32>
      "tpu.trace_stop"() : () -> ()
      %39 = vector.shape_cast %38 : vector<16x2x32xf32> to vector<2x8x2x32xf32>
      %cst_33 = arith.constant dense<0.000000e+00> : vector<8x2x32xf32>
      %40 = vector.multi_reduction <add>, %39, %cst_33 [0] : vector<2x8x2x32xf32> to vector<8x2x32xf32>
      %41 = vector.shape_cast %40 : vector<8x2x32xf32> to vector<16x32xf32>
      %42 = arith.addf %36, %41 : vector<16x32xf32>
      %43 = arith.negf %42 : vector<16x32xf32>
      %44 = math.exp %43 : vector<16x32xf32>
      %cst_34 = arith.constant 1.000000e+00 : f32
      %45 = vector.broadcast %cst_34 : f32 to vector<16x32xf32>
      %46 = arith.addf %45, %44 : vector<16x32xf32>
      %47 = arith.divf %45, %46 : vector<16x32xf32>
      %48 = vector.extract_strided_slice %47 {offsets = [0, 0], sizes = [16, 16], strides = [1, 1]} : vector<16x32xf32> to vector<16x16xf32>
      %49 = vector.extract_strided_slice %47 {offsets = [0, 16], sizes = [16, 16], strides = [1, 1]} : vector<16x32xf32> to vector<16x16xf32>
      %50 = arith.mulf %48, %8 : vector<16x16xf32>
      %cst_35 = arith.constant dense<0.000000e+00> : vector<32x16xf32>
      %51 = tpu.matmul %9, %50, %cst_35 {dimension_numbers = #tpu.dot_dimension_numbers<[1], [0], [0], [1], [0, 0, 1, 1], [], []>} : vector<32x16xf32>, vector<16x16xf32>, vector<32x16xf32> -> vector<32x16xf32>
      %c0_36 = arith.constant 0 : index
      %c0_37 = arith.constant 0 : index
      %52 = vector.load %arg8[%c0_36, %c0_37] : memref<16x16xf32, #tpu.memory_space<vmem>>, vector<16x16xf32>
      %c0_38 = arith.constant 0 : index
      %c0_39 = arith.constant 0 : index
      %c0_40 = arith.constant 0 : index
      %53 = vector.load %arg5[%c0_38, %c0_39, %c0_40] : memref<16x2x16xf32, #tpu.memory_space<vmem>>, vector<16x2x16xf32>
      "tpu.trace_start"() <{level = 10 : i32, message = "xbc,xco->xbo"}> : () -> ()
      %cst_41 = arith.constant dense<0.000000e+00> : vector<16x2x16xf32>
      %54 = tpu.matmul %28, %53, %cst_41 {dimension_numbers = #tpu.dot_dimension_numbers<[2], [1], [1], [2], [0, 0, 0, 1, 1, 2], [0], [0]>} : vector<16x2x2xf32>, vector<16x2x16xf32>, vector<16x2x16xf32> -> vector<16x2x16xf32>
      "tpu.trace_stop"() : () -> ()
      %55 = vector.shape_cast %54 : vector<16x2x16xf32> to vector<2x8x2x16xf32>
      %cst_42 = arith.constant dense<0.000000e+00> : vector<8x2x16xf32>
      %56 = vector.multi_reduction <add>, %55, %cst_42 [0] : vector<2x8x2x16xf32> to vector<8x2x16xf32>
      %57 = vector.shape_cast %56 : vector<8x2x16xf32> to vector<16x16xf32>
      %58 = arith.addf %52, %57 : vector<16x16xf32>
      %59 = vector.shape_cast %51 : vector<32x16xf32> to vector<16x2x16xf32>
      %c0_43 = arith.constant 0 : index
      %c0_44 = arith.constant 0 : index
      %c0_45 = arith.constant 0 : index
      %60 = vector.load %arg6[%c0_43, %c0_44, %c0_45] : memref<16x16x16xf32, #tpu.memory_space<vmem>>, vector<16x16x16xf32>
      "tpu.trace_start"() <{level = 10 : i32, message = "xbc,xco->xbo"}> : () -> ()
      %cst_46 = arith.constant dense<0.000000e+00> : vector<16x2x16xf32>
      %61 = tpu.matmul %59, %60, %cst_46 {dimension_numbers = #tpu.dot_dimension_numbers<[2], [1], [1], [2], [0, 0, 0, 1, 1, 2], [0], [0]>} : vector<16x2x16xf32>, vector<16x16x16xf32>, vector<16x2x16xf32> -> vector<16x2x16xf32>
      "tpu.trace_stop"() : () -> ()
      %62 = vector.shape_cast %61 : vector<16x2x16xf32> to vector<2x8x2x16xf32>
      %cst_47 = arith.constant dense<0.000000e+00> : vector<8x2x16xf32>
      %63 = vector.multi_reduction <add>, %62, %cst_47 [0] : vector<2x8x2x16xf32> to vector<8x2x16xf32>
      %64 = vector.shape_cast %63 : vector<8x2x16xf32> to vector<16x16xf32>
      %65 = arith.addf %58, %64 : vector<16x16xf32>
      %66 = math.tanh %65 : vector<16x16xf32>
      %67 = arith.mulf %49, %8 : vector<16x16xf32>
      %cst_48 = arith.constant 1.000000e+00 : f32
      %68 = vector.broadcast %cst_48 : f32 to vector<16x16xf32>
      %69 = arith.subf %68, %49 : vector<16x16xf32>
      %70 = arith.mulf %69, %66 : vector<16x16xf32>
      %71 = arith.addf %67, %70 : vector<16x16xf32>
      %c0_49 = arith.constant 0 : index
      %c0_50 = arith.constant 0 : index
      %72 = vector.load %arg14[%c0_49, %c0_50] : memref<16x16xf32, #tpu.memory_space<vmem>>, vector<16x16xf32>
      tpu.vector_store %arg14[%c0_49, %c0_50], %71 {strides = array<i32>} : memref<16x16xf32, #tpu.memory_space<vmem>>, vector<16x16xf32>,
      %73 = arith.index_cast %4 : i32 to index
      %c0_51 = arith.constant 0 : index
      %c0_52 = arith.constant 0 : index
      %74 = vector.load %arg12[%73, %c0_51, %c0_52] : memref<8x16x16xf32, #tpu.memory_space<vmem>>, vector<1x16x16xf32>
      %75 = vector.shape_cast %74 : vector<1x16x16xf32> to vector<16x16xf32>
      %76 = vector.shape_cast %71 : vector<16x16xf32> to vector<1x16x16xf32>
      tpu.vector_store %arg12[%73, %c0_51, %c0_52], %76 {strides = array<i32>} : memref<8x16x16xf32, #tpu.memory_space<vmem>>, vector<1x16x16xf32>,
      %77 = arith.index_cast %4 : i32 to index
      %c0_53 = arith.constant 0 : index
      %c0_54 = arith.constant 0 : index
      %78 = vector.load %arg13[%77, %c0_53, %c0_54] : memref<8x16x1xf32, #tpu.memory_space<vmem>>, vector<1x16x1xf32>
      %79 = vector.shape_cast %78 : vector<1x16x1xf32> to vector<16x1xf32>
      %80 = vector.shape_cast %23 : vector<16x1xf32> to vector<1x16x1xf32>
      tpu.vector_store %arg13[%77, %c0_53, %c0_54], %80 {strides = array<i32>} : memref<8x16x1xf32, #tpu.memory_space<vmem>>, vector<1x16x1xf32>,
    }
    %c8_i32_3 = arith.constant 8 : i32
    return
  }
}

</mosaic_0001>

<llo_original>
// kernel: tpu_custom_call.1
$region0: #{tpu_custom_call.1}
  #allocation0 [shape = 'u32[]', space=smem, size = 0x4, offset = 0x4, fixed_abs, tag = 'smem constant byte address 0x4 - core index']
  #allocation1 [shape = 'u32[144,128]{1,0:T(1,128)}', space=vmem, size = 0x12000, scoped, tag = 'internal scratch']
  #allocation2 [shape = 'f32[16,16]{1,0:T(8,128)}', space=vmem, size = 0x2000, scoped, tag = 'scratch operand']
  %s0 = inlined_call_operand.vmem [shape: f32[8,16,2], index: 0, kind: input, shape index: {}]
  %s1 = inlined_call_operand.vmem [shape: f32[16,16], index: 1, kind: input, shape index: {}]
  %s2 = inlined_call_operand.vmem [shape: f32[32,16], index: 2, kind: input, shape index: {}]
  %s3 = inlined_call_operand.vmem [shape: f32[16,2,32], index: 3, kind: input, shape index: {}]
  %s4 = inlined_call_operand.vmem [shape: f32[16,16,32], index: 4, kind: input, shape index: {}]
  %s5 = inlined_call_operand.vmem [shape: f32[16,2,16], index: 5, kind: input, shape index: {}]
  %s6 = inlined_call_operand.hbm [shape: f32[16,16,16], index: 6, kind: input, shape index: {}]
  %s7 = inlined_call_operand.vmem [shape: f32[16,32], index: 7, kind: input, shape index: {}]
  %s8 = inlined_call_operand.hbm [shape: f32[16,16], index: 8, kind: input, shape index: {}]
  %s9 = inlined_call_operand.vmem [shape: f32[2,1], index: 9, kind: input, shape index: {}]
  %s10 = inlined_call_operand.vmem [shape: f32[16,1], index: 10, kind: input, shape index: {}]
  %s11 = inlined_call_operand.vmem [shape: f32[8,16,1], index: 11, kind: input, shape index: {}]
  %s12 = inlined_call_operand.hbm [shape: f32[8,16,16], index: 12, kind: output, shape index: {0}]
  %s13 = inlined_call_operand.vmem [shape: f32[8,16,1], index: 13, kind: output, shape index: {1}]
  %14 = xla_tuple %s12, %s13
  %s15 = sld [smem:[#allocation0]]
  $region81: #{tpu_custom_call.1} parent=0
    _
  %s17 = ssub.s32 1, %s15
  %s18 = scalar_select 0, %s17, %s15
  $region1: #{tpu_custom_call.1} parent=0
    #allocation3 [shape = 'u8[131072]{0}', space=vmem, size = 0x20000, scoped, tag = 'input window, operand 6, single buffered']
    #allocation4 [shape = 's32[1]{0}', space=sflag, size = 0x4, scoped, tag = 'scoped memory for tpu_custom_call.1']
    #allocation5 [shape = 's32[1]{0}', space=sflag, size = 0x4, scoped, tag = 'scoped memory for tpu_custom_call.1']
    #allocation6 [shape = 'u8[8192]{0}', space=vmem, size = 0x2000, scoped, tag = 'input window, operand 8, single buffered']
    #allocation7 [shape = 's32[1]{0}', space=sflag, size = 0x4, scoped, tag = 'scoped memory for tpu_custom_call.1']
    #allocation8 [shape = 'u8[65536]{0}', space=vmem, size = 0x10000, scoped, tag = 'output window, operand 0, single buffered']
    %19 = vsyncpa [#allocation4], 0
    %20 = vsyncpa [#allocation7], 0
    %21 = vsyncpa [#allocation5], 0
    // Predicated region
    $region2: #{tpu_custom_call.1} parent=1 // pred_check
      _
    $region3: #{tpu_custom_call.1} parent=1 // pred_check_branch
      %23 = sbr.rel (0) target = $region5
    $region4: #{tpu_custom_call.1} parent=1 // pred_region
      _
    $region5: #{tpu_custom_call.1} parent=1 // pred_fallthru
      _
    // Predicated region
    $region6: #{tpu_custom_call.1} parent=1 // pred_check
      _
    $region7: #{tpu_custom_call.1} parent=1 // pred_check_branch
      %25 = sbr.rel (0) target = $region9
    $region8: #{tpu_custom_call.1} parent=1 // pred_region
      _
    $region9: #{tpu_custom_call.1} parent=1 // pred_fallthru
      _
    // Predicated region
    $region10: #{tpu_custom_call.1} parent=1 // pred_check
      _
    $region11: #{tpu_custom_call.1} parent=1 // pred_check_branch
      %27 = sbr.rel (0) target = $region13
    $region12: #{tpu_custom_call.1} parent=1 // pred_region
      _
    $region13: #{tpu_custom_call.1} parent=1 // pred_fallthru
      _
    // Predicated region
    $region14: #{tpu_custom_call.1} parent=1 // pred_check
      _
    $region15: #{tpu_custom_call.1} parent=1 // pred_check_branch
      %29 = sbr.rel (0) target = $region17
    $region16: #{tpu_custom_call.1} parent=1 // pred_region
      _
    $region17: #{tpu_custom_call.1} parent=1 // pred_fallthru
      _
    // Predicated region
    $region18: #{tpu_custom_call.1} parent=1 // pred_check
      _
    $region19: #{tpu_custom_call.1} parent=1 // pred_check_branch
      %31 = sbr.rel (0) target = $region21
    $region20: #{tpu_custom_call.1} parent=1 // pred_region
      _
    $region21: #{tpu_custom_call.1} parent=1 // pred_fallthru
      _
    // Predicated region
    $region22: #{tpu_custom_call.1} parent=1 // pred_check
      _
    $region23: #{tpu_custom_call.1} parent=1 // pred_check_branch
      %33 = sbr.rel (0) target = $region25
    $region24: #{tpu_custom_call.1} parent=1 // pred_region
      _
    $region25: #{tpu_custom_call.1} parent=1 // pred_fallthru
      _
    // Predicated region
    $region26: #{tpu_custom_call.1} parent=1 // pred_check
      _
    $region27: #{tpu_custom_call.1} parent=1 // pred_check_branch
      %35 = sbr.rel (0) target = $region29
    $region28: #{tpu_custom_call.1} parent=1 // pred_region
      %s37 = ssub.s32 4096, 4096
      %38 = vsyncadd [#allocation4], %s37
      %s39 = sshll.u32 [#allocation3], 4
      %s40 = int_to_ptr.vmem [resolvable:$true] %s39
      %45 = dma.hbm_to_vmem [thread:$0]  %s6, 4096, %s40, [#allocation4], 128, 128, 8
    $region29: #{tpu_custom_call.1} parent=1 // pred_fallthru
      _
    // Predicated region
    $region30: #{tpu_custom_call.1} parent=1 // pred_check
      _
    $region31: #{tpu_custom_call.1} parent=1 // pred_check_branch
      %47 = sbr.rel (0) target = $region33
    $region32: #{tpu_custom_call.1} parent=1 // pred_region
      _
    $region33: #{tpu_custom_call.1} parent=1 // pred_fallthru
      _
    // Predicated region
    $region34: #{tpu_custom_call.1} parent=1 // pred_check
      _
    $region35: #{tpu_custom_call.1} parent=1 // pred_check_branch
      %49 = sbr.rel (0) target = $region37
    $region36: #{tpu_custom_call.1} parent=1 // pred_region
      %s51 = ssub.s32 256, 256
      %52 = vsyncadd [#allocation7], %s51
      %s53 = sshll.u32 [#allocation6], 4
      %s54 = int_to_ptr.vmem [resolvable:$true] %s53
      %59 = dma.hbm_to_vmem [thread:$0]  %s8, 256, %s54, [#allocation7], 128, 128, 8
    $region37: #{tpu_custom_call.1} parent=1 // pred_fallthru
      _
    // Predicated region
    $region38: #{tpu_custom_call.1} parent=1 // pred_check
      _
    $region39: #{tpu_custom_call.1} parent=1 // pred_check_branch
      %61 = sbr.rel (0) target = $region41
    $region40: #{tpu_custom_call.1} parent=1 // pred_region
      _
    $region41: #{tpu_custom_call.1} parent=1 // pred_fallthru
      _
    // Predicated region
    $region42: #{tpu_custom_call.1} parent=1 // pred_check
      _
    $region43: #{tpu_custom_call.1} parent=1 // pred_check_branch
      %63 = sbr.rel (0) target = $region45
    $region44: #{tpu_custom_call.1} parent=1 // pred_region
      _
    $region45: #{tpu_custom_call.1} parent=1 // pred_fallthru
      _
    // Predicated region
    $region46: #{tpu_custom_call.1} parent=1 // pred_check
      _
    $region47: #{tpu_custom_call.1} parent=1 // pred_check_branch
      %65 = sbr.rel (0) target = $region49
    $region48: #{tpu_custom_call.1} parent=1 // pred_region
      _
    $region49: #{tpu_custom_call.1} parent=1 // pred_fallthru
      _
    // Predicated region
    $region50: #{tpu_custom_call.1} parent=1 // pred_check
      _
    $region51: #{tpu_custom_call.1} parent=1 // pred_check_branch
      %67 = sbr.rel (0) target = $region53
    $region52: #{tpu_custom_call.1} parent=1 // pred_region
      %68 = dma.done [#allocation4], 4096
    $region53: #{tpu_custom_call.1} parent=1 // pred_fallthru
      _
    // Predicated region
    $region54: #{tpu_custom_call.1} parent=1 // pred_check
      _
    $region55: #{tpu_custom_call.1} parent=1 // pred_check_branch
      %70 = sbr.rel (0) target = $region57
    $region56: #{tpu_custom_call.1} parent=1 // pred_region
      %71 = dma.done [#allocation7], 256
    $region57: #{tpu_custom_call.1} parent=1 // pred_fallthru
      _
    %v72 = vld [vmem:[%s1] sm:$0xff]
    %v73 = vld [vmem:[%s1 + $0x8] sm:$0xff]
    %vm74 = vcmask 130048
    %75 = vst.msk [vmem:[#allocation2] sm:$0xff] %vm74, %v72
    %76 = vst.msk [vmem:[#allocation2 + $0x8] sm:$0xff] %vm74, %v73
    loop: start=0, step=1, limit=8
    $region58: #{tpu_custom_call.1} parent=1 // loop_pre_header
      _
    $region59: #{tpu_custom_call.1} parent=1 // loop_header
      %s78 = sphi 0, %s82
      %p79 = scmp.ge.s32.totalorder %s78, 8
    $region60: #{tpu_custom_call.1} parent=1 // loop_header_branch
      %81 = sbr.rel (%p79) target = $region64
    $region61: #{tpu_custom_call.1} parent=1 // loop_body
      %s83 = smul.u32 %s78, 16
      %s84 = scalar_lea.vmem %s0, %s83
      %v85 = vld [vmem:[%s84] sm:$0xff]
      %v86 = vld [vmem:[%s84 + $0x8] sm:$0xff]
      %v87 = vld [vmem:[#allocation2] sm:$0xff]
      %v88 = vld [vmem:[#allocation2 + $0x8] sm:$0xff]
      %v89 = vld [vmem:[%s2] sm:$0xff]
      %v90 = vld [vmem:[%s2 + $0x8] sm:$0xff]
      %v91 = vld [vmem:[%s2 + $0x10] sm:$0xff]
      %v92 = vld [vmem:[%s2 + $0x18] sm:$0xff]
      %v93 = vld [vmem:[%s9] sm:$0x3]
      %v94 = vld [vmem:[%s10] sm:$0xff]
      %v95 = vld [vmem:[%s10 + $0x8] sm:$0xff]
      %v97 = vsel %vm74, %v87, 0
      %v100 = vsel %vm74, %v88, 0
      %102 = vmatprep.subr.mxu0 0.0
      %103 = vmatpush1.msra.mxu0 0.0
      %104 = vmatprep.subr.mxu0 0.0
      %105 = vmatpush1.msra.mxu0 0.0
      %106 = vmatprep.subr.mxu0 0.0
      %107 = vmatpush1.msra.mxu0 0.0
      %108 = vmatprep.subr.mxu0 0.0
      %109 = vmatpush1.msra.mxu0 0.0
      %110 = vmatprep.subr.mxu0 0.0
      %111 = vmatpush1.msra.mxu0 0.0
      %112 = vmatprep.subr.mxu0 0.0
      %113 = vmatpush1.msra.mxu0 0.0
      %114 = vmatprep.subr.mxu0 0.0
      %115 = vmatpush1.msra.mxu0 0.0
      %116 = vmatprep.subr.mxu0 0.0
      %117 = vmatpush1.msra.mxu0 0.0
      %118 = vmatprep.subr.mxu0 0.0
      %119 = vmatpush1.msra.mxu0 0.0
      %120 = vmatprep.subr.mxu0 0.0
      %121 = vmatpush1.msra.mxu0 0.0
      %122 = vmatprep.subr.mxu0 0.0
      %123 = vmatpush1.msra.mxu0 0.0
      %124 = vmatprep.subr.mxu0 0.0
      %125 = vmatpush1.msra.mxu0 0.0
      %126 = vmatprep.subr.mxu0 0.0
      %127 = vmatpush1.msra.mxu0 0.0
      %128 = vmatprep.subr.mxu0 0.0
      %129 = vmatpush1.msra.mxu0 0.0
      %130 = vmatprep.subr.mxu0 0.0
      %131 = vmatpush1.msra.mxu0 %v95
      %132 = vmatprep.subr.mxu0 0.0
      %133 = vmatpush1.msra.mxu0 %v94
      %134 = vmatprep.subr.mxu0 0.0
      %135 = vmatpush2.msra.mxu0 0.0
      %136 = vmatprep.subr.mxu0 0.0
      %137 = vmatpush2.msra.mxu0 0.0
      %138 = vmatprep.subr.mxu0 0.0
      %139 = vmatpush2.msra.mxu0 0.0
      %140 = vmatprep.subr.mxu0 0.0
      %141 = vmatpush2.msra.mxu0 0.0
      %142 = vmatprep.subr.mxu0 0.0
      %143 = vmatpush2.msra.mxu0 0.0
      %144 = vmatprep.subr.mxu0 0.0
      %145 = vmatpush2.msra.mxu0 0.0
      %146 = vmatprep.subr.mxu0 0.0
      %147 = vmatpush2.msra.mxu0 0.0
      %148 = vmatprep.subr.mxu0 0.0
      %149 = vmatpush2.msra.mxu0 0.0
      %150 = vmatprep.subr.mxu0 0.0
      %151 = vmatpush2.msra.mxu0 0.0
      %152 = vmatprep.subr.mxu0 0.0
      %153 = vmatpush2.msra.mxu0 0.0
      %154 = vmatprep.subr.mxu0 0.0
      %155 = vmatpush2.msra.mxu0 0.0
      %156 = vmatprep.subr.mxu0 0.0
      %157 = vmatpush2.msra.mxu0 0.0
      %158 = vmatprep.subr.mxu0 0.0
      %159 = vmatpush2.msra.mxu0 0.0
      %160 = vmatprep.subr.mxu0 0.0
      %161 = vmatpush2.msra.mxu0 0.0
      %162 = vmatprep.subr.mxu0 0.0
      %163 = vmatpush2.msra.mxu0 0.0
      %164 = vmatprep.subr.mxu0 0.0
      %165 = vmatpush2.msra.mxu0 0.0
      %166 = vmatprep.mubr.f32.mxu0 0.0
      %167 = vmatmul.mubr.f32.gmra.mxu0 %v97
      %v168 = vpop.f32.mrf.mxu0
      %v169 = vadd.f32 0.0, %v168
      %v170 = vpop.f32.mrf.mxu0
      %171 = vmatprep.mubr.f32.mxu0 0.0
      %172 = vmatmul.mubr.f32.gmra.mxu0 %v100
      %v173 = vpop.f32.mrf.mxu0
      %v174 = vadd.f32 0.0, %v173
      %v175 = vpop.f32.mrf.mxu0
      %176 = vdwg.mxu0
      %vm177 = vcmask 15360
      %v179 = vsel %vm177, %v85, 0
      %v182 = vsel %vm177, %v86, 0
      %vm184 = vcmask 1041408
      %v186 = vsel %vm184, %v93, 0
      %188 = vmatprep.subr.mxu0 0.0
      %189 = vmatpush1.msra.mxu0 0.0
      %190 = vmatprep.subr.mxu0 0.0
      %191 = vmatpush1.msra.mxu0 0.0
      %192 = vmatprep.subr.mxu0 0.0
      %193 = vmatpush1.msra.mxu0 0.0
      %194 = vmatprep.subr.mxu0 0.0
      %195 = vmatpush1.msra.mxu0 0.0
      %196 = vmatprep.subr.mxu0 0.0
      %197 = vmatpush1.msra.mxu0 0.0
      %198 = vmatprep.subr.mxu0 0.0
      %199 = vmatpush1.msra.mxu0 0.0
      %200 = vmatprep.subr.mxu0 0.0
      %201 = vmatpush1.msra.mxu0 0.0
      %202 = vmatprep.subr.mxu0 0.0
      %203 = vmatpush1.msra.mxu0 0.0
      %204 = vmatprep.subr.mxu0 0.0
      %205 = vmatpush1.msra.mxu0 0.0
      %206 = vmatprep.subr.mxu0 0.0
      %207 = vmatpush1.msra.mxu0 0.0
      %208 = vmatprep.subr.mxu0 0.0
      %209 = vmatpush1.msra.mxu0 0.0
      %210 = vmatprep.subr.mxu0 0.0
      %211 = vmatpush1.msra.mxu0 0.0
      %212 = vmatprep.subr.mxu0 0.0
      %213 = vmatpush1.msra.mxu0 0.0
      %214 = vmatprep.subr.mxu0 0.0
      %215 = vmatpush1.msra.mxu0 0.0
      %216 = vmatprep.subr.mxu0 0.0
      %217 = vmatpush1.msra.mxu0 0.0
      %218 = vmatprep.subr.mxu0 0.0
      %219 = vmatpush1.msra.mxu0 %v186
      %220 = vmatprep.subr.mxu0 0.0
      %221 = vmatpush2.msra.mxu0 0.0
      %222 = vmatprep.subr.mxu0 0.0
      %223 = vmatpush2.msra.mxu0 0.0
      %224 = vmatprep.subr.mxu0 0.0
      %225 = vmatpush2.msra.mxu0 0.0
      %226 = vmatprep.subr.mxu0 0.0
      %227 = vmatpush2.msra.mxu0 0.0
      %228 = vmatprep.subr.mxu0 0.0
      %229 = vmatpush2.msra.mxu0 0.0
      %230 = vmatprep.subr.mxu0 0.0
      %231 = vmatpush2.msra.mxu0 0.0
      %232 = vmatprep.subr.mxu0 0.0
      %233 = vmatpush2.msra.mxu0 0.0
      %234 = vmatprep.subr.mxu0 0.0
      %235 = vmatpush2.msra.mxu0 0.0
      %236 = vmatprep.subr.mxu0 0.0
      %237 = vmatpush2.msra.mxu0 0.0
      %238 = vmatprep.subr.mxu0 0.0
      %239 = vmatpush2.msra.mxu0 0.0
      %240 = vmatprep.subr.mxu0 0.0
      %241 = vmatpush2.msra.mxu0 0.0
      %242 = vmatprep.subr.mxu0 0.0
      %243 = vmatpush2.msra.mxu0 0.0
      %244 = vmatprep.subr.mxu0 0.0
      %245 = vmatpush2.msra.mxu0 0.0
      %246 = vmatprep.subr.mxu0 0.0
      %247 = vmatpush2.msra.mxu0 0.0
      %248 = vmatprep.subr.mxu0 0.0
      %249 = vmatpush2.msra.mxu0 0.0
      %250 = vmatprep.subr.mxu0 0.0
      %251 = vmatpush2.msra.mxu0 0.0
      %252 = vmatprep.mubr.f32.mxu0 0.0
      %253 = vmatmul.mubr.f32.gmra.mxu0 %v179
      %v254 = vpop.f32.mrf.mxu0
      %v255 = vadd.f32 %v169, %v254
      %v256 = vpop.f32.mrf.mxu0
      %257 = vmatprep.mubr.f32.mxu0 0.0
      %258 = vmatmul.mubr.f32.gmra.mxu0 %v182
      %v259 = vpop.f32.mrf.mxu0
      %v260 = vadd.f32 %v174, %v259
      %v261 = vpop.f32.mrf.mxu0
      %262 = vdwg.mxu0
      %s263 = scalar_lea.vmem %s11, %s83
      %v264 = vld [vmem:[%s263] sm:$0xff]
      %v265 = vld [vmem:[%s263 + $0x8] sm:$0xff]
      %v266 = vadd.f32 %v255, %v264
      %v267 = vadd.f32 %v260, %v265
      %v268 = vxor.u32 %v266, 2147483648
      %v269 = vxor.u32 %v267, 2147483648
      %v270 = vmul.f32 %v268, 1.442695
      %v271 = vpow.pop %v270
      %v272 = vmul.f32 %v269, 1.442695
      %v273 = vpow.pop %v272
      %v274 = vadd.f32 %v271, 1.0
      %v275 = vadd.f32 %v273, 1.0
      %v276 = vrcp.pop %v274
      %v277 = vmul.f32 1.0, %v276
      %v278 = vrcp.pop %v275
      %v279 = vmul.f32 1.0, %v278
      %281 = vset.pattern.permute.xlu0 0
      %282 = vperm.xlu0 %281, %v277
      %v283 = vpop.permute.xlu0 %282
      %286 = vset.pattern.permute.xlu0 0
      %287 = vperm.xlu0 %286, %v279
      %v288 = vpop.permute.xlu0 %287
      %v290 = vmul.f32 %v85, %v283
      %v291 = vmul.f32 %v86, %v288
      %v293 = vsel %vm74, %v89, 0
      %v296 = vsel %vm74, %v90, 0
      %v299 = vsel %vm74, %v91, 0
      %v302 = vsel %vm74, %v92, 0
      %304 = vmatprep.subr.mxu0 0.0
      %305 = vmatpush1.msra.mxu0 0.0
      %306 = vmatprep.subr.mxu0 0.0
      %307 = vmatpush1.msra.mxu0 0.0
      %308 = vmatprep.subr.mxu0 0.0
      %309 = vmatpush1.msra.mxu0 0.0
      %310 = vmatprep.subr.mxu0 0.0
      %311 = vmatpush1.msra.mxu0 0.0
      %312 = vmatprep.subr.mxu0 0.0
      %313 = vmatpush1.msra.mxu0 0.0
      %314 = vmatprep.subr.mxu0 0.0
      %315 = vmatpush1.msra.mxu0 0.0
      %316 = vmatprep.subr.mxu0 0.0
      %317 = vmatpush1.msra.mxu0 0.0
      %318 = vmatprep.subr.mxu0 0.0
      %319 = vmatpush1.msra.mxu0 0.0
      %320 = vmatprep.subr.mxu0 0.0
      %321 = vmatpush1.msra.mxu0 0.0
      %322 = vmatprep.subr.mxu0 0.0
      %323 = vmatpush1.msra.mxu0 0.0
      %324 = vmatprep.subr.mxu0 0.0
      %325 = vmatpush1.msra.mxu0 0.0
      %326 = vmatprep.subr.mxu0 0.0
      %327 = vmatpush1.msra.mxu0 0.0
      %328 = vmatprep.subr.mxu0 0.0
      %329 = vmatpush1.msra.mxu0 0.0
      %330 = vmatprep.subr.mxu0 0.0
      %331 = vmatpush1.msra.mxu0 0.0
      %332 = vmatprep.subr.mxu0 0.0
      %333 = vmatpush1.msra.mxu0 %v291
      %334 = vmatprep.subr.mxu0 0.0
      %335 = vmatpush1.msra.mxu0 %v290
      %336 = vmatprep.subr.mxu0 0.0
      %337 = vmatpush2.msra.mxu0 0.0
      %338 = vmatprep.subr.mxu0 0.0
      %339 = vmatpush2.msra.mxu0 0.0
      %340 = vmatprep.subr.mxu0 0.0
      %341 = vmatpush2.msra.mxu0 0.0
      %342 = vmatprep.subr.mxu0 0.0
      %343 = vmatpush2.msra.mxu0 0.0
      %344 = vmatprep.subr.mxu0 0.0
      %345 = vmatpush2.msra.mxu0 0.0
      %346 = vmatprep.subr.mxu0 0.0
      %347 = vmatpush2.msra.mxu0 0.0
      %348 = vmatprep.subr.mxu0 0.0
      %349 = vmatpush2.msra.mxu0 0.0
      %350 = vmatprep.subr.mxu0 0.0
      %351 = vmatpush2.msra.mxu0 0.0
      %352 = vmatprep.subr.mxu0 0.0
      %353 = vmatpush2.msra.mxu0 0.0
      %354 = vmatprep.subr.mxu0 0.0
      %355 = vmatpush2.msra.mxu0 0.0
      %356 = vmatprep.subr.mxu0 0.0
      %357 = vmatpush2.msra.mxu0 0.0
      %358 = vmatprep.subr.mxu0 0.0
      %359 = vmatpush2.msra.mxu0 0.0
      %360 = vmatprep.subr.mxu0 0.0
      %361 = vmatpush2.msra.mxu0 0.0
      %362 = vmatprep.subr.mxu0 0.0
      %363 = vmatpush2.msra.mxu0 0.0
      %364 = vmatprep.subr.mxu0 0.0
      %365 = vmatpush2.msra.mxu0 0.0
      %366 = vmatprep.subr.mxu0 0.0
      %367 = vmatpush2.msra.mxu0 0.0
      %368 = vmatprep.mubr.f32.mxu0 0.0
      %369 = vmatmul.mubr.f32.gmra.mxu0 %v293
      %v370 = vpop.f32.mrf.mxu0
      %v371 = vadd.f32 0.0, %v370
      %v372 = vpop.f32.mrf.mxu0
      %373 = vmatprep.mubr.f32.mxu0 0.0
      %374 = vmatmul.mubr.f32.gmra.mxu0 %v296
      %v375 = vpop.f32.mrf.mxu0
      %v376 = vadd.f32 0.0, %v375
      %v377 = vpop.f32.mrf.mxu0
      %378 = vmatprep.mubr.f32.mxu0 0.0
      %379 = vmatmul.mubr.f32.gmra.mxu0 %v299
      %v380 = vpop.f32.mrf.mxu0
      %v381 = vadd.f32 0.0, %v380
      %v382 = vpop.f32.mrf.mxu0
      %383 = vmatprep.mubr.f32.mxu0 0.0
      %384 = vmatmul.mubr.f32.gmra.mxu0 %v302
      %v385 = vpop.f32.mrf.mxu0
      %v386 = vadd.f32 0.0, %v385
      %v387 = vpop.f32.mrf.mxu0
      %388 = vdwg.mxu0
      %389 = vmatprep.subr.mxu0 0.0
      %390 = vmatpush1.msra.mxu0 0.0
      %391 = vmatprep.subr.mxu0 0.0
      %392 = vmatpush1.msra.mxu0 0.0
      %393 = vmatprep.subr.mxu0 0.0
      %394 = vmatpush1.msra.mxu0 0.0
      %395 = vmatprep.subr.mxu0 0.0
      %396 = vmatpush1.msra.mxu0 0.0
      %397 = vmatprep.subr.mxu0 0.0
      %398 = vmatpush1.msra.mxu0 0.0
      %399 = vmatprep.subr.mxu0 0.0
      %400 = vmatpush1.msra.mxu0 0.0
      %401 = vmatprep.subr.mxu0 0.0
      %402 = vmatpush1.msra.mxu0 0.0
      %403 = vmatprep.subr.mxu0 0.0
      %404 = vmatpush1.msra.mxu0 0.0
      %405 = vmatprep.subr.mxu0 0.0
      %406 = vmatpush1.msra.mxu0 0.0
      %407 = vmatprep.subr.mxu0 0.0
      %408 = vmatpush1.msra.mxu0 0.0
      %409 = vmatprep.subr.mxu0 0.0
      %410 = vmatpush1.msra.mxu0 0.0
      %411 = vmatprep.subr.mxu0 0.0
      %412 = vmatpush1.msra.mxu0 0.0
      %413 = vmatprep.subr.mxu0 0.0
      %414 = vmatpush1.msra.mxu0 0.0
      %415 = vmatprep.subr.mxu0 0.0
      %416 = vmatpush1.msra.mxu0 0.0
      %417 = vmatprep.subr.mxu0 0.0
      %418 = vmatpush1.msra.mxu0 %v88
      %419 = vmatprep.subr.mxu0 0.0
      %420 = vmatpush1.msra.mxu0 %v87
      %421 = vmatprep.subr.mxu0 0.0
      %422 = vmatpush2.msra.mxu0 0.0
      %423 = vmatprep.subr.mxu0 0.0
      %424 = vmatpush2.msra.mxu0 0.0
      %425 = vmatprep.subr.mxu0 0.0
      %426 = vmatpush2.msra.mxu0 0.0
      %427 = vmatprep.subr.mxu0 0.0
      %428 = vmatpush2.msra.mxu0 0.0
      %429 = vmatprep.subr.mxu0 0.0
      %430 = vmatpush2.msra.mxu0 0.0
      %431 = vmatprep.subr.mxu0 0.0
      %432 = vmatpush2.msra.mxu0 0.0
      %433 = vmatprep.subr.mxu0 0.0
      %434 = vmatpush2.msra.mxu0 0.0
      %435 = vmatprep.subr.mxu0 0.0
      %436 = vmatpush2.msra.mxu0 0.0
      %437 = vmatprep.subr.mxu0 0.0
      %438 = vmatpush2.msra.mxu0 0.0
      %439 = vmatprep.subr.mxu0 0.0
      %440 = vmatpush2.msra.mxu0 0.0
      %441 = vmatprep.subr.mxu0 0.0
      %442 = vmatpush2.msra.mxu0 0.0
      %443 = vmatprep.subr.mxu0 0.0
      %444 = vmatpush2.msra.mxu0 0.0
      %445 = vmatprep.subr.mxu0 0.0
      %446 = vmatpush2.msra.mxu0 0.0
      %447 = vmatprep.subr.mxu0 0.0
      %448 = vmatpush2.msra.mxu0 0.0
      %449 = vmatprep.subr.mxu0 0.0
      %450 = vmatpush2.msra.mxu0 0.0
      %451 = vmatprep.subr.mxu0 0.0
      %452 = vmatpush2.msra.mxu0 0.0
      %453 = vmatprep.mubr.f32.mxu0 0.0
      %454 = vmatmul.mubr.f32.gmra.mxu0 %v293
      %v455 = vpop.f32.mrf.mxu0
      %v456 = vadd.f32 0.0, %v455
      %v457 = vpop.f32.mrf.mxu0
      %458 = vmatprep.mubr.f32.mxu0 0.0
      %459 = vmatmul.mubr.f32.gmra.mxu0 %v296
      %v460 = vpop.f32.mrf.mxu0
      %v461 = vadd.f32 0.0, %v460
      %v462 = vpop.f32.mrf.mxu0
      %463 = vmatprep.mubr.f32.mxu0 0.0
      %464 = vmatmul.mubr.f32.gmra.mxu0 %v299
      %v465 = vpop.f32.mrf.mxu0
      %v466 = vadd.f32 0.0, %v465
      %v467 = vpop.f32.mrf.mxu0
      %468 = vmatprep.mubr.f32.mxu0 0.0
      %469 = vmatmul.mubr.f32.gmra.mxu0 %v302
      %v470 = vpop.f32.mrf.mxu0
      %v471 = vadd.f32 0.0, %v470
      %v472 = vpop.f32.mrf.mxu0
      %473 = vdwg.mxu0
      %v478 = vcombine.high %v371, %v371
      %v480 = vunpack.c.l.s4 1983009808
      %v481 = vunpack.c.0.s8 %v480
      %v482 = vlaneseq
      %v483 = vshrl.u32 %v482, 7
      %v484 = vsub.s32 %v481, %v483
      %v485 = vrot.slane %v371, %v484
      %v487 = vunpack.c.l.s4 1983009808
      %v488 = vunpack.c.0.s8 %v487
      %v489 = vlaneseq
      %v490 = vshrl.u32 %v489, 7
      %v491 = vsub.s32 %v488, %v490
      %v492 = vrot.slane %v478, %v491
      %v493 = vcombine.high %v485, %v485
      %v494 = vcombine.high %v492, %v492
      %v495 = vcombine.high %v376, %v376
      %v497 = vunpack.c.l.s4 1983009808
      %v498 = vunpack.c.0.s8 %v497
      %v499 = vlaneseq
      %v500 = vshrl.u32 %v499, 7
      %v501 = vsub.s32 %v498, %v500
      %v502 = vrot.slane %v376, %v501
      %v504 = vunpack.c.l.s4 1983009808
      %v505 = vunpack.c.0.s8 %v504
      %v506 = vlaneseq
      %v507 = vshrl.u32 %v506, 7
      %v508 = vsub.s32 %v505, %v507
      %v509 = vrot.slane %v495, %v508
      %v510 = vcombine.high %v502, %v502
      %v511 = vcombine.high %v509, %v509
      %v512 = vcombine.high %v381, %v381
      %v514 = vunpack.c.l.s4 1983009808
      %v515 = vunpack.c.0.s8 %v514
      %v516 = vlaneseq
      %v517 = vshrl.u32 %v516, 7
      %v518 = vsub.s32 %v515, %v517
      %v519 = vrot.slane %v381, %v518
      %v521 = vunpack.c.l.s4 1983009808
      %v522 = vunpack.c.0.s8 %v521
      %v523 = vlaneseq
      %v524 = vshrl.u32 %v523, 7
      %v525 = vsub.s32 %v522, %v524
      %v526 = vrot.slane %v512, %v525
      %v527 = vcombine.high %v519, %v519
      %v528 = vcombine.high %v526, %v526
      %v529 = vcombine.high %v386, %v386
      %v531 = vunpack.c.l.s4 1983009808
      %v532 = vunpack.c.0.s8 %v531
      %v533 = vlaneseq
      %v534 = vshrl.u32 %v533, 7
      %v535 = vsub.s32 %v532, %v534
      %v536 = vrot.slane %v386, %v535
      %v538 = vunpack.c.l.s4 1983009808
      %v539 = vunpack.c.0.s8 %v538
      %v540 = vlaneseq
      %v541 = vshrl.u32 %v540, 7
      %v542 = vsub.s32 %v539, %v541
      %v543 = vrot.slane %v529, %v542
      %v544 = vcombine.high %v536, %v536
      %v545 = vcombine.high %v543, %v543
      %v550 = vcombine.high %v456, %v456
      %v552 = vunpack.c.l.s4 1983009808
      %v553 = vunpack.c.0.s8 %v552
      %v554 = vlaneseq
      %v555 = vshrl.u32 %v554, 7
      %v556 = vsub.s32 %v553, %v555
      %v557 = vrot.slane %v456, %v556
      %v559 = vunpack.c.l.s4 1983009808
      %v560 = vunpack.c.0.s8 %v559
      %v561 = vlaneseq
      %v562 = vshrl.u32 %v561, 7
      %v563 = vsub.s32 %v560, %v562
      %v564 = vrot.slane %v550, %v563
      %v565 = vcombine.high %v557, %v557
      %v566 = vcombine.high %v564, %v564
      %v567 = vcombine.high %v461, %v461
      %v569 = vunpack.c.l.s4 1983009808
      %v570 = vunpack.c.0.s8 %v569
      %v571 = vlaneseq
      %v572 = vshrl.u32 %v571, 7
      %v573 = vsub.s32 %v570, %v572
      %v574 = vrot.slane %v461, %v573
      %v576 = vunpack.c.l.s4 1983009808
      %v577 = vunpack.c.0.s8 %v576
      %v578 = vlaneseq
      %v579 = vshrl.u32 %v578, 7
      %v580 = vsub.s32 %v577, %v579
      %v581 = vrot.slane %v567, %v580
      %v582 = vcombine.high %v574, %v574
      %v583 = vcombine.high %v581, %v581
      %v584 = vcombine.high %v466, %v466
      %v586 = vunpack.c.l.s4 1983009808
      %v587 = vunpack.c.0.s8 %v586
      %v588 = vlaneseq
      %v589 = vshrl.u32 %v588, 7
      %v590 = vsub.s32 %v587, %v589
      %v591 = vrot.slane %v466, %v590
      %v593 = vunpack.c.l.s4 1983009808
      %v594 = vunpack.c.0.s8 %v593
      %v595 = vlaneseq
      %v596 = vshrl.u32 %v595, 7
      %v597 = vsub.s32 %v594, %v596
      %v598 = vrot.slane %v584, %v597
      %v599 = vcombine.high %v591, %v591
      %v600 = vcombine.high %v598, %v598
      %v601 = vcombine.high %v471, %v471
      %v603 = vunpack.c.l.s4 1983009808
      %v604 = vunpack.c.0.s8 %v603
      %v605 = vlaneseq
      %v606 = vshrl.u32 %v605, 7
      %v607 = vsub.s32 %v604, %v606
      %v608 = vrot.slane %v471, %v607
      %v610 = vunpack.c.l.s4 1983009808
      %v611 = vunpack.c.0.s8 %v610
      %v612 = vlaneseq
      %v613 = vshrl.u32 %v612, 7
      %v614 = vsub.s32 %v611, %v613
      %v615 = vrot.slane %v601, %v614
      %v616 = vcombine.high %v608, %v608
      %v617 = vcombine.high %v615, %v615
      %v618 = vld [vmem:[%s7] sm:$0xff]
      %v619 = vld [vmem:[%s7 + $0x8] sm:$0xff]
      %v620 = vld [vmem:[%s3] sm:$0x3]
      %v621 = vld [vmem:[%s3 + $0x2] sm:$0x3]
      %v622 = vld [vmem:[%s3 + $0x4] sm:$0x3]
      %v623 = vld [vmem:[%s3 + $0x6] sm:$0x3]
      %v624 = vld [vmem:[%s3 + $0x8] sm:$0x3]
      %v625 = vld [vmem:[%s3 + $0xa] sm:$0x3]
      %v626 = vld [vmem:[%s3 + $0xc] sm:$0x3]
      %v627 = vld [vmem:[%s3 + $0xe] sm:$0x3]
      %v628 = vld [vmem:[%s3 + $0x10] sm:$0x3]
      %v629 = vld [vmem:[%s3 + $0x12] sm:$0x3]
      %v630 = vld [vmem:[%s3 + $0x14] sm:$0x3]
      %v631 = vld [vmem:[%s3 + $0x16] sm:$0x3]
      %v632 = vld [vmem:[%s3 + $0x18] sm:$0x3]
      %v633 = vld [vmem:[%s3 + $0x1a] sm:$0x3]
      %v634 = vld [vmem:[%s3 + $0x1c] sm:$0x3]
      %v635 = vld [vmem:[%s3 + $0x1e] sm:$0x3]
      %v636 = vsel %vm177, %v485, 0
      %v639 = vsel %vm184, %v620, 0
      %641 = vmatprep.subr.mxu0 0.0
      %642 = vmatpush1.msra.mxu0 0.0
      %643 = vmatprep.subr.mxu0 0.0
      %644 = vmatpush1.msra.mxu0 0.0
      %645 = vmatprep.subr.mxu0 0.0
      %646 = vmatpush1.msra.mxu0 0.0
      %647 = vmatprep.subr.mxu0 0.0
      %648 = vmatpush1.msra.mxu0 0.0
      %649 = vmatprep.subr.mxu0 0.0
      %650 = vmatpush1.msra.mxu0 0.0
      %651 = vmatprep.subr.mxu0 0.0
      %652 = vmatpush1.msra.mxu0 0.0
      %653 = vmatprep.subr.mxu0 0.0
      %654 = vmatpush1.msra.mxu0 0.0
      %655 = vmatprep.subr.mxu0 0.0
      %656 = vmatpush1.msra.mxu0 0.0
      %657 = vmatprep.subr.mxu0 0.0
      %658 = vmatpush1.msra.mxu0 0.0
      %659 = vmatprep.subr.mxu0 0.0
      %660 = vmatpush1.msra.mxu0 0.0
      %661 = vmatprep.subr.mxu0 0.0
      %662 = vmatpush1.msra.mxu0 0.0
      %663 = vmatprep.subr.mxu0 0.0
      %664 = vmatpush1.msra.mxu0 0.0
      %665 = vmatprep.subr.mxu0 0.0
      %666 = vmatpush1.msra.mxu0 0.0
      %667 = vmatprep.subr.mxu0 0.0
      %668 = vmatpush1.msra.mxu0 0.0
      %669 = vmatprep.subr.mxu0 0.0
      %670 = vmatpush1.msra.mxu0 0.0
      %671 = vmatprep.subr.mxu0 0.0
      %672 = vmatpush1.msra.mxu0 %v639
      %673 = vmatprep.subr.mxu0 0.0
      %674 = vmatpush2.msra.mxu0 0.0
      %675 = vmatprep.subr.mxu0 0.0
      %676 = vmatpush2.msra.mxu0 0.0
      %677 = vmatprep.subr.mxu0 0.0
      %678 = vmatpush2.msra.mxu0 0.0
      %679 = vmatprep.subr.mxu0 0.0
      %680 = vmatpush2.msra.mxu0 0.0
      %681 = vmatprep.subr.mxu0 0.0
      %682 = vmatpush2.msra.mxu0 0.0
      %683 = vmatprep.subr.mxu0 0.0
      %684 = vmatpush2.msra.mxu0 0.0
      %685 = vmatprep.subr.mxu0 0.0
      %686 = vmatpush2.msra.mxu0 0.0
      %687 = vmatprep.subr.mxu0 0.0
      %688 = vmatpush2.msra.mxu0 0.0
      %689 = vmatprep.subr.mxu0 0.0
      %690 = vmatpush2.msra.mxu0 0.0
      %691 = vmatprep.subr.mxu0 0.0
      %692 = vmatpush2.msra.mxu0 0.0
      %693 = vmatprep.subr.mxu0 0.0
      %694 = vmatpush2.msra.mxu0 0.0
      %695 = vmatprep.subr.mxu0 0.0
      %696 = vmatpush2.msra.mxu0 0.0
      %697 = vmatprep.subr.mxu0 0.0
      %698 = vmatpush2.msra.mxu0 0.0
      %699 = vmatprep.subr.mxu0 0.0
      %700 = vmatpush2.msra.mxu0 0.0
      %701 = vmatprep.subr.mxu0 0.0
      %702 = vmatpush2.msra.mxu0 0.0
      %703 = vmatprep.subr.mxu0 0.0
      %704 = vmatpush2.msra.mxu0 0.0
      %705 = vmatprep.mubr.f32.mxu0 0.0
      %706 = vmatmul.mubr.f32.gmra.mxu0 %v636
      %v707 = vpop.f32.mrf.mxu0
      %v708 = vadd.f32 0.0, %v707
      %v709 = vpop.f32.mrf.mxu0
      %710 = vdwg.mxu0
      %v711 = vsel %vm177, %v493, 0
      %v714 = vsel %vm184, %v621, 0
      %716 = vmatprep.subr.mxu0 0.0
      %717 = vmatpush1.msra.mxu0 0.0
      %718 = vmatprep.subr.mxu0 0.0
      %719 = vmatpush1.msra.mxu0 0.0
      %720 = vmatprep.subr.mxu0 0.0
      %721 = vmatpush1.msra.mxu0 0.0
      %722 = vmatprep.subr.mxu0 0.0
      %723 = vmatpush1.msra.mxu0 0.0
      %724 = vmatprep.subr.mxu0 0.0
      %725 = vmatpush1.msra.mxu0 0.0
      %726 = vmatprep.subr.mxu0 0.0
      %727 = vmatpush1.msra.mxu0 0.0
      %728 = vmatprep.subr.mxu0 0.0
      %729 = vmatpush1.msra.mxu0 0.0
      %730 = vmatprep.subr.mxu0 0.0
      %731 = vmatpush1.msra.mxu0 0.0
      %732 = vmatprep.subr.mxu0 0.0
      %733 = vmatpush1.msra.mxu0 0.0
      %734 = vmatprep.subr.mxu0 0.0
      %735 = vmatpush1.msra.mxu0 0.0
      %736 = vmatprep.subr.mxu0 0.0
      %737 = vmatpush1.msra.mxu0 0.0
      %738 = vmatprep.subr.mxu0 0.0
      %739 = vmatpush1.msra.mxu0 0.0
      %740 = vmatprep.subr.mxu0 0.0
      %741 = vmatpush1.msra.mxu0 0.0
      %742 = vmatprep.subr.mxu0 0.0
      %743 = vmatpush1.msra.mxu0 0.0
      %744 = vmatprep.subr.mxu0 0.0
      %745 = vmatpush1.msra.mxu0 0.0
      %746 = vmatprep.subr.mxu0 0.0
      %747 = vmatpush1.msra.mxu0 %v714
      %748 = vmatprep.subr.mxu0 0.0
      %749 = vmatpush2.msra.mxu0 0.0
      %750 = vmatprep.subr.mxu0 0.0
      %751 = vmatpush2.msra.mxu0 0.0
      %752 = vmatprep.subr.mxu0 0.0
      %753 = vmatpush2.msra.mxu0 0.0
      %754 = vmatprep.subr.mxu0 0.0
      %755 = vmatpush2.msra.mxu0 0.0
      %756 = vmatprep.subr.mxu0 0.0
      %757 = vmatpush2.msra.mxu0 0.0
      %758 = vmatprep.subr.mxu0 0.0
      %759 = vmatpush2.msra.mxu0 0.0
      %760 = vmatprep.subr.mxu0 0.0
      %761 = vmatpush2.msra.mxu0 0.0
      %762 = vmatprep.subr.mxu0 0.0
      %763 = vmatpush2.msra.mxu0 0.0
      %764 = vmatprep.subr.mxu0 0.0
      %765 = vmatpush2.msra.mxu0 0.0
      %766 = vmatprep.subr.mxu0 0.0
      %767 = vmatpush2.msra.mxu0 0.0
      %768 = vmatprep.subr.mxu0 0.0
      %769 = vmatpush2.msra.mxu0 0.0
      %770 = vmatprep.subr.mxu0 0.0
      %771 = vmatpush2.msra.mxu0 0.0
      %772 = vmatprep.subr.mxu0 0.0
      %773 = vmatpush2.msra.mxu0 0.0
      %774 = vmatprep.subr.mxu0 0.0
      %775 = vmatpush2.msra.mxu0 0.0
      %776 = vmatprep.subr.mxu0 0.0
      %777 = vmatpush2.msra.mxu0 0.0
      %778 = vmatprep.subr.mxu0 0.0
      %779 = vmatpush2.msra.mxu0 0.0
      %780 = vmatprep.mubr.f32.mxu0 0.0
      %781 = vmatmul.mubr.f32.gmra.mxu0 %v711
      %v782 = vpop.f32.mrf.mxu0
      %v783 = vadd.f32 0.0, %v782
      %v784 = vpop.f32.mrf.mxu0
      %785 = vdwg.mxu0
      %v786 = vsel %vm177, %v492, 0
      %v789 = vsel %vm184, %v622, 0
      %791 = vmatprep.subr.mxu0 0.0
      %792 = vmatpush1.msra.mxu0 0.0
      %793 = vmatprep.subr.mxu0 0.0
      %794 = vmatpush1.msra.mxu0 0.0
      %795 = vmatprep.subr.mxu0 0.0
      %796 = vmatpush1.msra.mxu0 0.0
      %797 = vmatprep.subr.mxu0 0.0
      %798 = vmatpush1.msra.mxu0 0.0
      %799 = vmatprep.subr.mxu0 0.0
      %800 = vmatpush1.msra.mxu0 0.0
      %801 = vmatprep.subr.mxu0 0.0
      %802 = vmatpush1.msra.mxu0 0.0
      %803 = vmatprep.subr.mxu0 0.0
      %804 = vmatpush1.msra.mxu0 0.0
      %805 = vmatprep.subr.mxu0 0.0
      %806 = vmatpush1.msra.mxu0 0.0
      %807 = vmatprep.subr.mxu0 0.0
      %808 = vmatpush1.msra.mxu0 0.0
      %809 = vmatprep.subr.mxu0 0.0
      %810 = vmatpush1.msra.mxu0 0.0
      %811 = vmatprep.subr.mxu0 0.0
      %812 = vmatpush1.msra.mxu0 0.0
      %813 = vmatprep.subr.mxu0 0.0
      %814 = vmatpush1.msra.mxu0 0.0
      %815 = vmatprep.subr.mxu0 0.0
      %816 = vmatpush1.msra.mxu0 0.0
      %817 = vmatprep.subr.mxu0 0.0
      %818 = vmatpush1.msra.mxu0 0.0
      %819 = vmatprep.subr.mxu0 0.0
      %820 = vmatpush1.msra.mxu0 0.0
      %821 = vmatprep.subr.mxu0 0.0
      %822 = vmatpush1.msra.mxu0 %v789
      %823 = vmatprep.subr.mxu0 0.0
      %824 = vmatpush2.msra.mxu0 0.0
      %825 = vmatprep.subr.mxu0 0.0
      %826 = vmatpush2.msra.mxu0 0.0
      %827 = vmatprep.subr.mxu0 0.0
      %828 = vmatpush2.msra.mxu0 0.0
      %829 = vmatprep.subr.mxu0 0.0
      %830 = vmatpush2.msra.mxu0 0.0
      %831 = vmatprep.subr.mxu0 0.0
      %832 = vmatpush2.msra.mxu0 0.0
      %833 = vmatprep.subr.mxu0 0.0
      %834 = vmatpush2.msra.mxu0 0.0
      %835 = vmatprep.subr.mxu0 0.0
      %836 = vmatpush2.msra.mxu0 0.0
      %837 = vmatprep.subr.mxu0 0.0
      %838 = vmatpush2.msra.mxu0 0.0
      %839 = vmatprep.subr.mxu0 0.0
      %840 = vmatpush2.msra.mxu0 0.0
      %841 = vmatprep.subr.mxu0 0.0
      %842 = vmatpush2.msra.mxu0 0.0
      %843 = vmatprep.subr.mxu0 0.0
      %844 = vmatpush2.msra.mxu0 0.0
      %845 = vmatprep.subr.mxu0 0.0
      %846 = vmatpush2.msra.mxu0 0.0
      %847 = vmatprep.subr.mxu0 0.0
      %848 = vmatpush2.msra.mxu0 0.0
      %849 = vmatprep.subr.mxu0 0.0
      %850 = vmatpush2.msra.mxu0 0.0
      %851 = vmatprep.subr.mxu0 0.0
      %852 = vmatpush2.msra.mxu0 0.0
      %853 = vmatprep.subr.mxu0 0.0
      %854 = vmatpush2.msra.mxu0 0.0
      %855 = vmatprep.mubr.f32.mxu0 0.0
      %856 = vmatmul.mubr.f32.gmra.mxu0 %v786
      %v857 = vpop.f32.mrf.mxu0
      %v858 = vadd.f32 0.0, %v857
      %v859 = vpop.f32.mrf.mxu0
      %860 = vdwg.mxu0
      %v861 = vsel %vm177, %v494, 0
      %v864 = vsel %vm184, %v623, 0
      %866 = vmatprep.subr.mxu0 0.0
      %867 = vmatpush1.msra.mxu0 0.0
      %868 = vmatprep.subr.mxu0 0.0
      %869 = vmatpush1.msra.mxu0 0.0
      %870 = vmatprep.subr.mxu0 0.0
      %871 = vmatpush1.msra.mxu0 0.0
      %872 = vmatprep.subr.mxu0 0.0
      %873 = vmatpush1.msra.mxu0 0.0
      %874 = vmatprep.subr.mxu0 0.0
      %875 = vmatpush1.msra.mxu0 0.0
      %876 = vmatprep.subr.mxu0 0.0
      %877 = vmatpush1.msra.mxu0 0.0
      %878 = vmatprep.subr.mxu0 0.0
      %879 = vmatpush1.msra.mxu0 0.0
      %880 = vmatprep.subr.mxu0 0.0
      %881 = vmatpush1.msra.mxu0 0.0
      %882 = vmatprep.subr.mxu0 0.0
      %883 = vmatpush1.msra.mxu0 0.0
      %884 = vmatprep.subr.mxu0 0.0
      %885 = vmatpush1.msra.mxu0 0.0
      %886 = vmatprep.subr.mxu0 0.0
      %887 = vmatpush1.msra.mxu0 0.0
      %888 = vmatprep.subr.mxu0 0.0
      %889 = vmatpush1.msra.mxu0 0.0
      %890 = vmatprep.subr.mxu0 0.0
      %891 = vmatpush1.msra.mxu0 0.0
      %892 = vmatprep.subr.mxu0 0.0
      %893 = vmatpush1.msra.mxu0 0.0
      %894 = vmatprep.subr.mxu0 0.0
      %895 = vmatpush1.msra.mxu0 0.0
      %896 = vmatprep.subr.mxu0 0.0
      %897 = vmatpush1.msra.mxu0 %v864
      %898 = vmatprep.subr.mxu0 0.0
      %899 = vmatpush2.msra.mxu0 0.0
      %900 = vmatprep.subr.mxu0 0.0
      %901 = vmatpush2.msra.mxu0 0.0
      %902 = vmatprep.subr.mxu0 0.0
      %903 = vmatpush2.msra.mxu0 0.0
      %904 = vmatprep.subr.mxu0 0.0
      %905 = vmatpush2.msra.mxu0 0.0
      %906 = vmatprep.subr.mxu0 0.0
      %907 = vmatpush2.msra.mxu0 0.0
      %908 = vmatprep.subr.mxu0 0.0
      %909 = vmatpush2.msra.mxu0 0.0
      %910 = vmatprep.subr.mxu0 0.0
      %911 = vmatpush2.msra.mxu0 0.0
      %912 = vmatprep.subr.mxu0 0.0
      %913 = vmatpush2.msra.mxu0 0.0
      %914 = vmatprep.subr.mxu0 0.0
      %915 = vmatpush2.msra.mxu0 0.0
      %916 = vmatprep.subr.mxu0 0.0
      %917 = vmatpush2.msra.mxu0 0.0
      %918 = vmatprep.subr.mxu0 0.0
      %919 = vmatpush2.msra.mxu0 0.0
      %920 = vmatprep.subr.mxu0 0.0
      %921 = vmatpush2.msra.mxu0 0.0
      %922 = vmatprep.subr.mxu0 0.0
      %923 = vmatpush2.msra.mxu0 0.0
      %924 = vmatprep.subr.mxu0 0.0
      %925 = vmatpush2.msra.mxu0 0.0
      %926 = vmatprep.subr.mxu0 0.0
      %927 = vmatpush2.msra.mxu0 0.0
      %928 = vmatprep.subr.mxu0 0.0
      %929 = vmatpush2.msra.mxu0 0.0
      %930 = vmatprep.mubr.f32.mxu0 0.0
      %931 = vmatmul.mubr.f32.gmra.mxu0 %v861
      %v932 = vpop.f32.mrf.mxu0
      %v933 = vadd.f32 0.0, %v932
      %v934 = vpop.f32.mrf.mxu0
      %935 = vdwg.mxu0
      %v936 = vsel %vm177, %v502, 0
      %v939 = vsel %vm184, %v624, 0
      %941 = vmatprep.subr.mxu0 0.0
      %942 = vmatpush1.msra.mxu0 0.0
      %943 = vmatprep.subr.mxu0 0.0
      %944 = vmatpush1.msra.mxu0 0.0
      %945 = vmatprep.subr.mxu0 0.0
      %946 = vmatpush1.msra.mxu0 0.0
      %947 = vmatprep.subr.mxu0 0.0
      %948 = vmatpush1.msra.mxu0 0.0
      %949 = vmatprep.subr.mxu0 0.0
      %950 = vmatpush1.msra.mxu0 0.0
      %951 = vmatprep.subr.mxu0 0.0
      %952 = vmatpush1.msra.mxu0 0.0
      %953 = vmatprep.subr.mxu0 0.0
      %954 = vmatpush1.msra.mxu0 0.0
      %955 = vmatprep.subr.mxu0 0.0
      %956 = vmatpush1.msra.mxu0 0.0
      %957 = vmatprep.subr.mxu0 0.0
      %958 = vmatpush1.msra.mxu0 0.0
      %959 = vmatprep.subr.mxu0 0.0
      %960 = vmatpush1.msra.mxu0 0.0
      %961 = vmatprep.subr.mxu0 0.0
      %962 = vmatpush1.msra.mxu0 0.0
      %963 = vmatprep.subr.mxu0 0.0
      %964 = vmatpush1.msra.mxu0 0.0
      %965 = vmatprep.subr.mxu0 0.0
      %966 = vmatpush1.msra.mxu0 0.0
      %967 = vmatprep.subr.mxu0 0.0
      %968 = vmatpush1.msra.mxu0 0.0
      %969 = vmatprep.subr.mxu0 0.0
      %970 = vmatpush1.msra.mxu0 0.0
      %971 = vmatprep.subr.mxu0 0.0
      %972 = vmatpush1.msra.mxu0 %v939
      %973 = vmatprep.subr.mxu0 0.0
      %974 = vmatpush2.msra.mxu0 0.0
      %975 = vmatprep.subr.mxu0 0.0
      %976 = vmatpush2.msra.mxu0 0.0
      %977 = vmatprep.subr.mxu0 0.0
      %978 = vmatpush2.msra.mxu0 0.0
      %979 = vmatprep.subr.mxu0 0.0
      %980 = vmatpush2.msra.mxu0 0.0
      %981 = vmatprep.subr.mxu0 0.0
      %982 = vmatpush2.msra.mxu0 0.0
      %983 = vmatprep.subr.mxu0 0.0
      %984 = vmatpush2.msra.mxu0 0.0
      %985 = vmatprep.subr.mxu0 0.0
      %986 = vmatpush2.msra.mxu0 0.0
      %987 = vmatprep.subr.mxu0 0.0
      %988 = vmatpush2.msra.mxu0 0.0
      %989 = vmatprep.subr.mxu0 0.0
      %990 = vmatpush2.msra.mxu0 0.0
      %991 = vmatprep.subr.mxu0 0.0
      %992 = vmatpush2.msra.mxu0 0.0
      %993 = vmatprep.subr.mxu0 0.0
      %994 = vmatpush2.msra.mxu0 0.0
      %995 = vmatprep.subr.mxu0 0.0
      %996 = vmatpush2.msra.mxu0 0.0
      %997 = vmatprep.subr.mxu0 0.0
      %998 = vmatpush2.msra.mxu0 0.0
      %999 = vmatprep.subr.mxu0 0.0
      %1000 = vmatpush2.msra.mxu0 0.0
      %1001 = vmatprep.subr.mxu0 0.0
      %1002 = vmatpush2.msra.mxu0 0.0
      %1003 = vmatprep.subr.mxu0 0.0
      %1004 = vmatpush2.msra.mxu0 0.0
      %1005 = vmatprep.mubr.f32.mxu0 0.0
      %1006 = vmatmul.mubr.f32.gmra.mxu0 %v936
      %v1007 = vpop.f32.mrf.mxu0
      %v1008 = vadd.f32 0.0, %v1007
      %v1009 = vpop.f32.mrf.mxu0
      %1010 = vdwg.mxu0
      %v1011 = vsel %vm177, %v510, 0
      %v1014 = vsel %vm184, %v625, 0
      %1016 = vmatprep.subr.mxu0 0.0
      %1017 = vmatpush1.msra.mxu0 0.0
      %1018 = vmatprep.subr.mxu0 0.0
      %1019 = vmatpush1.msra.mxu0 0.0
      %1020 = vmatprep.subr.mxu0 0.0
      %1021 = vmatpush1.msra.mxu0 0.0
      %1022 = vmatprep.subr.mxu0 0.0
      %1023 = vmatpush1.msra.mxu0 0.0
      %1024 = vmatprep.subr.mxu0 0.0
      %1025 = vmatpush1.msra.mxu0 0.0
      %1026 = vmatprep.subr.mxu0 0.0
      %1027 = vmatpush1.msra.mxu0 0.0
      %1028 = vmatprep.subr.mxu0 0.0
      %1029 = vmatpush1.msra.mxu0 0.0
      %1030 = vmatprep.subr.mxu0 0.0
      %1031 = vmatpush1.msra.mxu0 0.0
      %1032 = vmatprep.subr.mxu0 0.0
      %1033 = vmatpush1.msra.mxu0 0.0
      %1034 = vmatprep.subr.mxu0 0.0
      %1035 = vmatpush1.msra.mxu0 0.0
      %1036 = vmatprep.subr.mxu0 0.0
      %1037 = vmatpush1.msra.mxu0 0.0
      %1038 = vmatprep.subr.mxu0 0.0
      %1039 = vmatpush1.msra.mxu0 0.0
      %1040 = vmatprep.subr.mxu0 0.0
      %1041 = vmatpush1.msra.mxu0 0.0
      %1042 = vmatprep.subr.mxu0 0.0
      %1043 = vmatpush1.msra.mxu0 0.0
      %1044 = vmatprep.subr.mxu0 0.0
      %1045 = vmatpush1.msra.mxu0 0.0
      %1046 = vmatprep.subr.mxu0 0.0
      %1047 = vmatpush1.msra.mxu0 %v1014
      %1048 = vmatprep.subr.mxu0 0.0
      %1049 = vmatpush2.msra.mxu0 0.0
      %1050 = vmatprep.subr.mxu0 0.0
      %1051 = vmatpush2.msra.mxu0 0.0
      %1052 = vmatprep.subr.mxu0 0.0
      %1053 = vmatpush2.msra.mxu0 0.0
      %1054 = vmatprep.subr.mxu0 0.0
      %1055 = vmatpush2.msra.mxu0 0.0
      %1056 = vmatprep.subr.mxu0 0.0
      %1057 = vmatpush2.msra.mxu0 0.0
      %1058 = vmatprep.subr.mxu0 0.0
      %1059 = vmatpush2.msra.mxu0 0.0
      %1060 = vmatprep.subr.mxu0 0.0
      %1061 = vmatpush2.msra.mxu0 0.0
      %1062 = vmatprep.subr.mxu0 0.0
      %1063 = vmatpush2.msra.mxu0 0.0
      %1064 = vmatprep.subr.mxu0 0.0
      %1065 = vmatpush2.msra.mxu0 0.0
      %1066 = vmatprep.subr.mxu0 0.0
      %1067 = vmatpush2.msra.mxu0 0.0
      %1068 = vmatprep.subr.mxu0 0.0
      %1069 = vmatpush2.msra.mxu0 0.0
      %1070 = vmatprep.subr.mxu0 0.0
      %1071 = vmatpush2.msra.mxu0 0.0
      %1072 = vmatprep.subr.mxu0 0.0
      %1073 = vmatpush2.msra.mxu0 0.0
      %1074 = vmatprep.subr.mxu0 0.0
      %1075 = vmatpush2.msra.mxu0 0.0
      %1076 = vmatprep.subr.mxu0 0.0
      %1077 = vmatpush2.msra.mxu0 0.0
      %1078 = vmatprep.subr.mxu0 0.0
      %1079 = vmatpush2.msra.mxu0 0.0
      %1080 = vmatprep.mubr.f32.mxu0 0.0
      %1081 = vmatmul.mubr.f32.gmra.mxu0 %v1011
      %v1082 = vpop.f32.mrf.mxu0
      %v1083 = vadd.f32 0.0, %v1082
      %v1084 = vpop.f32.mrf.mxu0
      %1085 = vdwg.mxu0
      %v1086 = vsel %vm177, %v509, 0
      %v1089 = vsel %vm184, %v626, 0
      %1091 = vmatprep.subr.mxu0 0.0
      %1092 = vmatpush1.msra.mxu0 0.0
      %1093 = vmatprep.subr.mxu0 0.0
      %1094 = vmatpush1.msra.mxu0 0.0
      %1095 = vmatprep.subr.mxu0 0.0
      %1096 = vmatpush1.msra.mxu0 0.0
      %1097 = vmatprep.subr.mxu0 0.0
      %1098 = vmatpush1.msra.mxu0 0.0
      %1099 = vmatprep.subr.mxu0 0.0
      %1100 = vmatpush1.msra.mxu0 0.0
      %1101 = vmatprep.subr.mxu0 0.0
      %1102 = vmatpush1.msra.mxu0 0.0
      %1103 = vmatprep.subr.mxu0 0.0
      %1104 = vmatpush1.msra.mxu0 0.0
      %1105 = vmatprep.subr.mxu0 0.0
      %1106 = vmatpush1.msra.mxu0 0.0
      %1107 = vmatprep.subr.mxu0 0.0
      %1108 = vmatpush1.msra.mxu0 0.0
      %1109 = vmatprep.subr.mxu0 0.0
      %1110 = vmatpush1.msra.mxu0 0.0
      %1111 = vmatprep.subr.mxu0 0.0
      %1112 = vmatpush1.msra.mxu0 0.0
      %1113 = vmatprep.subr.mxu0 0.0
      %1114 = vmatpush1.msra.mxu0 0.0
      %1115 = vmatprep.subr.mxu0 0.0
      %1116 = vmatpush1.msra.mxu0 0.0
      %1117 = vmatprep.subr.mxu0 0.0
      %1118 = vmatpush1.msra.mxu0 0.0
      %1119 = vmatprep.subr.mxu0 0.0
      %1120 = vmatpush1.msra.mxu0 0.0
      %1121 = vmatprep.subr.mxu0 0.0
      %1122 = vmatpush1.msra.mxu0 %v1089
      %1123 = vmatprep.subr.mxu0 0.0
      %1124 = vmatpush2.msra.mxu0 0.0
      %1125 = vmatprep.subr.mxu0 0.0
      %1126 = vmatpush2.msra.mxu0 0.0
      %1127 = vmatprep.subr.mxu0 0.0
      %1128 = vmatpush2.msra.mxu0 0.0
      %1129 = vmatprep.subr.mxu0 0.0
      %1130 = vmatpush2.msra.mxu0 0.0
      %1131 = vmatprep.subr.mxu0 0.0
      %1132 = vmatpush2.msra.mxu0 0.0
      %1133 = vmatprep.subr.mxu0 0.0
      %1134 = vmatpush2.msra.mxu0 0.0
      %1135 = vmatprep.subr.mxu0 0.0
      %1136 = vmatpush2.msra.mxu0 0.0
      %1137 = vmatprep.subr.mxu0 0.0
      %1138 = vmatpush2.msra.mxu0 0.0
      %1139 = vmatprep.subr.mxu0 0.0
      %1140 = vmatpush2.msra.mxu0 0.0
      %1141 = vmatprep.subr.mxu0 0.0
      %1142 = vmatpush2.msra.mxu0 0.0
      %1143 = vmatprep.subr.mxu0 0.0
      %1144 = vmatpush2.msra.mxu0 0.0
      %1145 = vmatprep.subr.mxu0 0.0
      %1146 = vmatpush2.msra.mxu0 0.0
      %1147 = vmatprep.subr.mxu0 0.0
      %1148 = vmatpush2.msra.mxu0 0.0
      %1149 = vmatprep.subr.mxu0 0.0
      %1150 = vmatpush2.msra.mxu0 0.0
      %1151 = vmatprep.subr.mxu0 0.0
      %1152 = vmatpush2.msra.mxu0 0.0
      %1153 = vmatprep.subr.mxu0 0.0
      %1154 = vmatpush2.msra.mxu0 0.0
      %1155 = vmatprep.mubr.f32.mxu0 0.0
      %1156 = vmatmul.mubr.f32.gmra.mxu0 %v1086
      %v1157 = vpop.f32.mrf.mxu0
      %v1158 = vadd.f32 0.0, %v1157
      %v1159 = vpop.f32.mrf.mxu0
      %1160 = vdwg.mxu0
      %v1161 = vsel %vm177, %v511, 0
      %v1164 = vsel %vm184, %v627, 0
      %1166 = vmatprep.subr.mxu0 0.0
      %1167 = vmatpush1.msra.mxu0 0.0
      %1168 = vmatprep.subr.mxu0 0.0
      %1169 = vmatpush1.msra.mxu0 0.0
      %1170 = vmatprep.subr.mxu0 0.0
      %1171 = vmatpush1.msra.mxu0 0.0
      %1172 = vmatprep.subr.mxu0 0.0
      %1173 = vmatpush1.msra.mxu0 0.0
      %1174 = vmatprep.subr.mxu0 0.0
      %1175 = vmatpush1.msra.mxu0 0.0
      %1176 = vmatprep.subr.mxu0 0.0
      %1177 = vmatpush1.msra.mxu0 0.0
      %1178 = vmatprep.subr.mxu0 0.0
      %1179 = vmatpush1.msra.mxu0 0.0
      %1180 = vmatprep.subr.mxu0 0.0
      %1181 = vmatpush1.msra.mxu0 0.0
      %1182 = vmatprep.subr.mxu0 0.0
      %1183 = vmatpush1.msra.mxu0 0.0
      %1184 = vmatprep.subr.mxu0 0.0
      %1185 = vmatpush1.msra.mxu0 0.0
      %1186 = vmatprep.subr.mxu0 0.0
      %1187 = vmatpush1.msra.mxu0 0.0
      %1188 = vmatprep.subr.mxu0 0.0
      %1189 = vmatpush1.msra.mxu0 0.0
      %1190 = vmatprep.subr.mxu0 0.0
      %1191 = vmatpush1.msra.mxu0 0.0
      %1192 = vmatprep.subr.mxu0 0.0
      %1193 = vmatpush1.msra.mxu0 0.0
      %1194 = vmatprep.subr.mxu0 0.0
      %1195 = vmatpush1.msra.mxu0 0.0
      %1196 = vmatprep.subr.mxu0 0.0
      %1197 = vmatpush1.msra.mxu0 %v1164
      %1198 = vmatprep.subr.mxu0 0.0
      %1199 = vmatpush2.msra.mxu0 0.0
      %1200 = vmatprep.subr.mxu0 0.0
      %1201 = vmatpush2.msra.mxu0 0.0
      %1202 = vmatprep.subr.mxu0 0.0
      %1203 = vmatpush2.msra.mxu0 0.0
      %1204 = vmatprep.subr.mxu0 0.0
      %1205 = vmatpush2.msra.mxu0 0.0
      %1206 = vmatprep.subr.mxu0 0.0
      %1207 = vmatpush2.msra.mxu0 0.0
      %1208 = vmatprep.subr.mxu0 0.0
      %1209 = vmatpush2.msra.mxu0 0.0
      %1210 = vmatprep.subr.mxu0 0.0
      %1211 = vmatpush2.msra.mxu0 0.0
      %1212 = vmatprep.subr.mxu0 0.0
      %1213 = vmatpush2.msra.mxu0 0.0
      %1214 = vmatprep.subr.mxu0 0.0
      %1215 = vmatpush2.msra.mxu0 0.0
      %1216 = vmatprep.subr.mxu0 0.0
      %1217 = vmatpush2.msra.mxu0 0.0
      %1218 = vmatprep.subr.mxu0 0.0
      %1219 = vmatpush2.msra.mxu0 0.0
      %1220 = vmatprep.subr.mxu0 0.0
      %1221 = vmatpush2.msra.mxu0 0.0
      %1222 = vmatprep.subr.mxu0 0.0
      %1223 = vmatpush2.msra.mxu0 0.0
      %1224 = vmatprep.subr.mxu0 0.0
      %1225 = vmatpush2.msra.mxu0 0.0
      %1226 = vmatprep.subr.mxu0 0.0
      %1227 = vmatpush2.msra.mxu0 0.0
      %1228 = vmatprep.subr.mxu0 0.0
      %1229 = vmatpush2.msra.mxu0 0.0
      %1230 = vmatprep.mubr.f32.mxu0 0.0
      %1231 = vmatmul.mubr.f32.gmra.mxu0 %v1161
      %v1232 = vpop.f32.mrf.mxu0
      %v1233 = vadd.f32 0.0, %v1232
      %v1234 = vpop.f32.mrf.mxu0
      %1235 = vdwg.mxu0
      %v1236 = vsel %vm177, %v519, 0
      %v1239 = vsel %vm184, %v628, 0
      %1241 = vmatprep.subr.mxu0 0.0
      %1242 = vmatpush1.msra.mxu0 0.0
      %1243 = vmatprep.subr.mxu0 0.0
      %1244 = vmatpush1.msra.mxu0 0.0
      %1245 = vmatprep.subr.mxu0 0.0
      %1246 = vmatpush1.msra.mxu0 0.0
      %1247 = vmatprep.subr.mxu0 0.0
      %1248 = vmatpush1.msra.mxu0 0.0
      %1249 = vmatprep.subr.mxu0 0.0
      %1250 = vmatpush1.msra.mxu0 0.0
      %1251 = vmatprep.subr.mxu0 0.0
      %1252 = vmatpush1.msra.mxu0 0.0
      %1253 = vmatprep.subr.mxu0 0.0
      %1254 = vmatpush1.msra.mxu0 0.0
      %1255 = vmatprep.subr.mxu0 0.0
      %1256 = vmatpush1.msra.mxu0 0.0
      %1257 = vmatprep.subr.mxu0 0.0
      %1258 = vmatpush1.msra.mxu0 0.0
      %1259 = vmatprep.subr.mxu0 0.0
      %1260 = vmatpush1.msra.mxu0 0.0
      %1261 = vmatprep.subr.mxu0 0.0
      %1262 = vmatpush1.msra.mxu0 0.0
      %1263 = vmatprep.subr.mxu0 0.0
      %1264 = vmatpush1.msra.mxu0 0.0
      %1265 = vmatprep.subr.mxu0 0.0
      %1266 = vmatpush1.msra.mxu0 0.0
      %1267 = vmatprep.subr.mxu0 0.0
      %1268 = vmatpush1.msra.mxu0 0.0
      %1269 = vmatprep.subr.mxu0 0.0
      %1270 = vmatpush1.msra.mxu0 0.0
      %1271 = vmatprep.subr.mxu0 0.0
      %1272 = vmatpush1.msra.mxu0 %v1239
      %1273 = vmatprep.subr.mxu0 0.0
      %1274 = vmatpush2.msra.mxu0 0.0
      %1275 = vmatprep.subr.mxu0 0.0
      %1276 = vmatpush2.msra.mxu0 0.0
      %1277 = vmatprep.subr.mxu0 0.0
      %1278 = vmatpush2.msra.mxu0 0.0
      %1279 = vmatprep.subr.mxu0 0.0
      %1280 = vmatpush2.msra.mxu0 0.0
      %1281 = vmatprep.subr.mxu0 0.0
      %1282 = vmatpush2.msra.mxu0 0.0
      %1283 = vmatprep.subr.mxu0 0.0
      %1284 = vmatpush2.msra.mxu0 0.0
      %1285 = vmatprep.subr.mxu0 0.0
      %1286 = vmatpush2.msra.mxu0 0.0
      %1287 = vmatprep.subr.mxu0 0.0
      %1288 = vmatpush2.msra.mxu0 0.0
      %1289 = vmatprep.subr.mxu0 0.0
      %1290 = vmatpush2.msra.mxu0 0.0
      %1291 = vmatprep.subr.mxu0 0.0
      %1292 = vmatpush2.msra.mxu0 0.0
      %1293 = vmatprep.subr.mxu0 0.0
      %1294 = vmatpush2.msra.mxu0 0.0
      %1295 = vmatprep.subr.mxu0 0.0
      %1296 = vmatpush2.msra.mxu0 0.0
      %1297 = vmatprep.subr.mxu0 0.0
      %1298 = vmatpush2.msra.mxu0 0.0
      %1299 = vmatprep.subr.mxu0 0.0
      %1300 = vmatpush2.msra.mxu0 0.0
      %1301 = vmatprep.subr.mxu0 0.0
      %1302 = vmatpush2.msra.mxu0 0.0
      %1303 = vmatprep.subr.mxu0 0.0
      %1304 = vmatpush2.msra.mxu0 0.0
      %1305 = vmatprep.mubr.f32.mxu0 0.0
      %1306 = vmatmul.mubr.f32.gmra.mxu0 %v1236
      %v1307 = vpop.f32.mrf.mxu0
      %v1308 = vadd.f32 0.0, %v1307
      %v1309 = vpop.f32.mrf.mxu0
      %1310 = vdwg.mxu0
      %v1311 = vsel %vm177, %v527, 0
      %v1314 = vsel %vm184, %v629, 0
      %1316 = vmatprep.subr.mxu0 0.0
      %1317 = vmatpush1.msra.mxu0 0.0
      %1318 = vmatprep.subr.mxu0 0.0
      %1319 = vmatpush1.msra.mxu0 0.0
      %1320 = vmatprep.subr.mxu0 0.0
      %1321 = vmatpush1.msra.mxu0 0.0
      %1322 = vmatprep.subr.mxu0 0.0
      %1323 = vmatpush1.msra.mxu0 0.0
      %1324 = vmatprep.subr.mxu0 0.0
      %1325 = vmatpush1.msra.mxu0 0.0
      %1326 = vmatprep.subr.mxu0 0.0
      %1327 = vmatpush1.msra.mxu0 0.0
      %1328 = vmatprep.subr.mxu0 0.0
      %1329 = vmatpush1.msra.mxu0 0.0
      %1330 = vmatprep.subr.mxu0 0.0
      %1331 = vmatpush1.msra.mxu0 0.0
      %1332 = vmatprep.subr.mxu0 0.0
      %1333 = vmatpush1.msra.mxu0 0.0
      %1334 = vmatprep.subr.mxu0 0.0
      %1335 = vmatpush1.msra.mxu0 0.0
      %1336 = vmatprep.subr.mxu0 0.0
      %1337 = vmatpush1.msra.mxu0 0.0
      %1338 = vmatprep.subr.mxu0 0.0
      %1339 = vmatpush1.msra.mxu0 0.0
      %1340 = vmatprep.subr.mxu0 0.0
      %1341 = vmatpush1.msra.mxu0 0.0
      %1342 = vmatprep.subr.mxu0 0.0
      %1343 = vmatpush1.msra.mxu0 0.0
      %1344 = vmatprep.subr.mxu0 0.0
      %1345 = vmatpush1.msra.mxu0 0.0
      %1346 = vmatprep.subr.mxu0 0.0
      %1347 = vmatpush1.msra.mxu0 %v1314
      %1348 = vmatprep.subr.mxu0 0.0
      %1349 = vmatpush2.msra.mxu0 0.0
      %1350 = vmatprep.subr.mxu0 0.0
      %1351 = vmatpush2.msra.mxu0 0.0
      %1352 = vmatprep.subr.mxu0 0.0
      %1353 = vmatpush2.msra.mxu0 0.0
      %1354 = vmatprep.subr.mxu0 0.0
      %1355 = vmatpush2.msra.mxu0 0.0
      %1356 = vmatprep.subr.mxu0 0.0
      %1357 = vmatpush2.msra.mxu0 0.0
      %1358 = vmatprep.subr.mxu0 0.0
      %1359 = vmatpush2.msra.mxu0 0.0
      %1360 = vmatprep.subr.mxu0 0.0
      %1361 = vmatpush2.msra.mxu0 0.0
      %1362 = vmatprep.subr.mxu0 0.0
      %1363 = vmatpush2.msra.mxu0 0.0
      %1364 = vmatprep.subr.mxu0 0.0
      %1365 = vmatpush2.msra.mxu0 0.0
      %1366 = vmatprep.subr.mxu0 0.0
      %1367 = vmatpush2.msra.mxu0 0.0
      %1368 = vmatprep.subr.mxu0 0.0
      %1369 = vmatpush2.msra.mxu0 0.0
      %1370 = vmatprep.subr.mxu0 0.0
      %1371 = vmatpush2.msra.mxu0 0.0
      %1372 = vmatprep.subr.mxu0 0.0
      %1373 = vmatpush2.msra.mxu0 0.0
      %1374 = vmatprep.subr.mxu0 0.0
      %1375 = vmatpush2.msra.mxu0 0.0
      %1376 = vmatprep.subr.mxu0 0.0
      %1377 = vmatpush2.msra.mxu0 0.0
      %1378 = vmatprep.subr.mxu0 0.0
      %1379 = vmatpush2.msra.mxu0 0.0
      %1380 = vmatprep.mubr.f32.mxu0 0.0
      %1381 = vmatmul.mubr.f32.gmra.mxu0 %v1311
      %v1382 = vpop.f32.mrf.mxu0
      %v1383 = vadd.f32 0.0, %v1382
      %v1384 = vpop.f32.mrf.mxu0
      %1385 = vdwg.mxu0
      %v1386 = vsel %vm177, %v526, 0
      %v1389 = vsel %vm184, %v630, 0
      %1391 = vmatprep.subr.mxu0 0.0
      %1392 = vmatpush1.msra.mxu0 0.0
      %1393 = vmatprep.subr.mxu0 0.0
      %1394 = vmatpush1.msra.mxu0 0.0
      %1395 = vmatprep.subr.mxu0 0.0
      %1396 = vmatpush1.msra.mxu0 0.0
      %1397 = vmatprep.subr.mxu0 0.0
      %1398 = vmatpush1.msra.mxu0 0.0
      %1399 = vmatprep.subr.mxu0 0.0
      %1400 = vmatpush1.msra.mxu0 0.0
      %1401 = vmatprep.subr.mxu0 0.0
      %1402 = vmatpush1.msra.mxu0 0.0
      %1403 = vmatprep.subr.mxu0 0.0
      %1404 = vmatpush1.msra.mxu0 0.0
      %1405 = vmatprep.subr.mxu0 0.0
      %1406 = vmatpush1.msra.mxu0 0.0
      %1407 = vmatprep.subr.mxu0 0.0
      %1408 = vmatpush1.msra.mxu0 0.0
      %1409 = vmatprep.subr.mxu0 0.0
      %1410 = vmatpush1.msra.mxu0 0.0
      %1411 = vmatprep.subr.mxu0 0.0
      %1412 = vmatpush1.msra.mxu0 0.0
      %1413 = vmatprep.subr.mxu0 0.0
      %1414 = vmatpush1.msra.mxu0 0.0
      %1415 = vmatprep.subr.mxu0 0.0
      %1416 = vmatpush1.msra.mxu0 0.0
      %1417 = vmatprep.subr.mxu0 0.0
      %1418 = vmatpush1.msra.mxu0 0.0
      %1419 = vmatprep.subr.mxu0 0.0
      %1420 = vmatpush1.msra.mxu0 0.0
      %1421 = vmatprep.subr.mxu0 0.0
      %1422 = vmatpush1.msra.mxu0 %v1389
      %1423 = vmatprep.subr.mxu0 0.0
      %1424 = vmatpush2.msra.mxu0 0.0
      %1425 = vmatprep.subr.mxu0 0.0
      %1426 = vmatpush2.msra.mxu0 0.0
      %1427 = vmatprep.subr.mxu0 0.0
      %1428 = vmatpush2.msra.mxu0 0.0
      %1429 = vmatprep.subr.mxu0 0.0
      %1430 = vmatpush2.msra.mxu0 0.0
      %1431 = vmatprep.subr.mxu0 0.0
      %1432 = vmatpush2.msra.mxu0 0.0
      %1433 = vmatprep.subr.mxu0 0.0
      %1434 = vmatpush2.msra.mxu0 0.0
      %1435 = vmatprep.subr.mxu0 0.0
      %1436 = vmatpush2.msra.mxu0 0.0
      %1437 = vmatprep.subr.mxu0 0.0
      %1438 = vmatpush2.msra.mxu0 0.0
      %1439 = vmatprep.subr.mxu0 0.0
      %1440 = vmatpush2.msra.mxu0 0.0
      %1441 = vmatprep.subr.mxu0 0.0
      %1442 = vmatpush2.msra.mxu0 0.0
      %1443 = vmatprep.subr.mxu0 0.0
      %1444 = vmatpush2.msra.mxu0 0.0
      %1445 = vmatprep.subr.mxu0 0.0
      %1446 = vmatpush2.msra.mxu0 0.0
      %1447 = vmatprep.subr.mxu0 0.0
      %1448 = vmatpush2.msra.mxu0 0.0
      %1449 = vmatprep.subr.mxu0 0.0
      %1450 = vmatpush2.msra.mxu0 0.0
      %1451 = vmatprep.subr.mxu0 0.0
      %1452 = vmatpush2.msra.mxu0 0.0
      %1453 = vmatprep.subr.mxu0 0.0
      %1454 = vmatpush2.msra.mxu0 0.0
      %1455 = vmatprep.mubr.f32.mxu0 0.0
      %1456 = vmatmul.mubr.f32.gmra.mxu0 %v1386
      %v1457 = vpop.f32.mrf.mxu0
      %v1458 = vadd.f32 0.0, %v1457
      %v1459 = vpop.f32.mrf.mxu0
      %1460 = vdwg.mxu0
      %v1461 = vsel %vm177, %v528, 0
      %v1464 = vsel %vm184, %v631, 0
      %1466 = vmatprep.subr.mxu0 0.0
      %1467 = vmatpush1.msra.mxu0 0.0
      %1468 = vmatprep.subr.mxu0 0.0
      %1469 = vmatpush1.msra.mxu0 0.0
      %1470 = vmatprep.subr.mxu0 0.0
      %1471 = vmatpush1.msra.mxu0 0.0
      %1472 = vmatprep.subr.mxu0 0.0
      %1473 = vmatpush1.msra.mxu0 0.0
      %1474 = vmatprep.subr.mxu0 0.0
      %1475 = vmatpush1.msra.mxu0 0.0
      %1476 = vmatprep.subr.mxu0 0.0
      %1477 = vmatpush1.msra.mxu0 0.0
      %1478 = vmatprep.subr.mxu0 0.0
      %1479 = vmatpush1.msra.mxu0 0.0
      %1480 = vmatprep.subr.mxu0 0.0
      %1481 = vmatpush1.msra.mxu0 0.0
      %1482 = vmatprep.subr.mxu0 0.0
      %1483 = vmatpush1.msra.mxu0 0.0
      %1484 = vmatprep.subr.mxu0 0.0
      %1485 = vmatpush1.msra.mxu0 0.0
      %1486 = vmatprep.subr.mxu0 0.0
      %1487 = vmatpush1.msra.mxu0 0.0
      %1488 = vmatprep.subr.mxu0 0.0
      %1489 = vmatpush1.msra.mxu0 0.0
      %1490 = vmatprep.subr.mxu0 0.0
      %1491 = vmatpush1.msra.mxu0 0.0
      %1492 = vmatprep.subr.mxu0 0.0
      %1493 = vmatpush1.msra.mxu0 0.0
      %1494 = vmatprep.subr.mxu0 0.0
      %1495 = vmatpush1.msra.mxu0 0.0
      %1496 = vmatprep.subr.mxu0 0.0
      %1497 = vmatpush1.msra.mxu0 %v1464
      %1498 = vmatprep.subr.mxu0 0.0
      %1499 = vmatpush2.msra.mxu0 0.0
      %1500 = vmatprep.subr.mxu0 0.0
      %1501 = vmatpush2.msra.mxu0 0.0
      %1502 = vmatprep.subr.mxu0 0.0
      %1503 = vmatpush2.msra.mxu0 0.0
      %1504 = vmatprep.subr.mxu0 0.0
      %1505 = vmatpush2.msra.mxu0 0.0
      %1506 = vmatprep.subr.mxu0 0.0
      %1507 = vmatpush2.msra.mxu0 0.0
      %1508 = vmatprep.subr.mxu0 0.0
      %1509 = vmatpush2.msra.mxu0 0.0
      %1510 = vmatprep.subr.mxu0 0.0
      %1511 = vmatpush2.msra.mxu0 0.0
      %1512 = vmatprep.subr.mxu0 0.0
      %1513 = vmatpush2.msra.mxu0 0.0
      %1514 = vmatprep.subr.mxu0 0.0
      %1515 = vmatpush2.msra.mxu0 0.0
      %1516 = vmatprep.subr.mxu0 0.0
      %1517 = vmatpush2.msra.mxu0 0.0
      %1518 = vmatprep.subr.mxu0 0.0
      %1519 = vmatpush2.msra.mxu0 0.0
      %1520 = vmatprep.subr.mxu0 0.0
      %1521 = vmatpush2.msra.mxu0 0.0
      %1522 = vmatprep.subr.mxu0 0.0
      %1523 = vmatpush2.msra.mxu0 0.0
      %1524 = vmatprep.subr.mxu0 0.0
      %1525 = vmatpush2.msra.mxu0 0.0
      %1526 = vmatprep.subr.mxu0 0.0
      %1527 = vmatpush2.msra.mxu0 0.0
      %1528 = vmatprep.subr.mxu0 0.0
      %1529 = vmatpush2.msra.mxu0 0.0
      %1530 = vmatprep.mubr.f32.mxu0 0.0
      %1531 = vmatmul.mubr.f32.gmra.mxu0 %v1461
      %v1532 = vpop.f32.mrf.mxu0
      %v1533 = vadd.f32 0.0, %v1532
      %v1534 = vpop.f32.mrf.mxu0
      %1535 = vdwg.mxu0
      %v1536 = vsel %vm177, %v536, 0
      %v1539 = vsel %vm184, %v632, 0
      %1541 = vmatprep.subr.mxu0 0.0
      %1542 = vmatpush1.msra.mxu0 0.0
      %1543 = vmatprep.subr.mxu0 0.0
      %1544 = vmatpush1.msra.mxu0 0.0
      %1545 = vmatprep.subr.mxu0 0.0
      %1546 = vmatpush1.msra.mxu0 0.0
      %1547 = vmatprep.subr.mxu0 0.0
      %1548 = vmatpush1.msra.mxu0 0.0
      %1549 = vmatprep.subr.mxu0 0.0
      %1550 = vmatpush1.msra.mxu0 0.0
      %1551 = vmatprep.subr.mxu0 0.0
      %1552 = vmatpush1.msra.mxu0 0.0
      %1553 = vmatprep.subr.mxu0 0.0
      %1554 = vmatpush1.msra.mxu0 0.0
      %1555 = vmatprep.subr.mxu0 0.0
      %1556 = vmatpush1.msra.mxu0 0.0
      %1557 = vmatprep.subr.mxu0 0.0
      %1558 = vmatpush1.msra.mxu0 0.0
      %1559 = vmatprep.subr.mxu0 0.0
      %1560 = vmatpush1.msra.mxu0 0.0
      %1561 = vmatprep.subr.mxu0 0.0
      %1562 = vmatpush1.msra.mxu0 0.0
      %1563 = vmatprep.subr.mxu0 0.0
      %1564 = vmatpush1.msra.mxu0 0.0
      %1565 = vmatprep.subr.mxu0 0.0
      %1566 = vmatpush1.msra.mxu0 0.0
      %1567 = vmatprep.subr.mxu0 0.0
      %1568 = vmatpush1.msra.mxu0 0.0
      %1569 = vmatprep.subr.mxu0 0.0
      %1570 = vmatpush1.msra.mxu0 0.0
      %1571 = vmatprep.subr.mxu0 0.0
      %1572 = vmatpush1.msra.mxu0 %v1539
      %1573 = vmatprep.subr.mxu0 0.0
      %1574 = vmatpush2.msra.mxu0 0.0
      %1575 = vmatprep.subr.mxu0 0.0
      %1576 = vmatpush2.msra.mxu0 0.0
      %1577 = vmatprep.subr.mxu0 0.0
      %1578 = vmatpush2.msra.mxu0 0.0
      %1579 = vmatprep.subr.mxu0 0.0
      %1580 = vmatpush2.msra.mxu0 0.0
      %1581 = vmatprep.subr.mxu0 0.0
      %1582 = vmatpush2.msra.mxu0 0.0
      %1583 = vmatprep.subr.mxu0 0.0
      %1584 = vmatpush2.msra.mxu0 0.0
      %1585 = vmatprep.subr.mxu0 0.0
      %1586 = vmatpush2.msra.mxu0 0.0
      %1587 = vmatprep.subr.mxu0 0.0
      %1588 = vmatpush2.msra.mxu0 0.0
      %1589 = vmatprep.subr.mxu0 0.0
      %1590 = vmatpush2.msra.mxu0 0.0
      %1591 = vmatprep.subr.mxu0 0.0
      %1592 = vmatpush2.msra.mxu0 0.0
      %1593 = vmatprep.subr.mxu0 0.0
      %1594 = vmatpush2.msra.mxu0 0.0
      %1595 = vmatprep.subr.mxu0 0.0
      %1596 = vmatpush2.msra.mxu0 0.0
      %1597 = vmatprep.subr.mxu0 0.0
      %1598 = vmatpush2.msra.mxu0 0.0
      %1599 = vmatprep.subr.mxu0 0.0
      %1600 = vmatpush2.msra.mxu0 0.0
      %1601 = vmatprep.subr.mxu0 0.0
      %1602 = vmatpush2.msra.mxu0 0.0
      %1603 = vmatprep.subr.mxu0 0.0
      %1604 = vmatpush2.msra.mxu0 0.0
      %1605 = vmatprep.mubr.f32.mxu0 0.0
      %1606 = vmatmul.mubr.f32.gmra.mxu0 %v1536
      %v1607 = vpop.f32.mrf.mxu0
      %v1608 = vadd.f32 0.0, %v1607
      %v1609 = vpop.f32.mrf.mxu0
      %1610 = vdwg.mxu0
      %v1611 = vsel %vm177, %v544, 0
      %v1614 = vsel %vm184, %v633, 0
      %1616 = vmatprep.subr.mxu0 0.0
      %1617 = vmatpush1.msra.mxu0 0.0
      %1618 = vmatprep.subr.mxu0 0.0
      %1619 = vmatpush1.msra.mxu0 0.0
      %1620 = vmatprep.subr.mxu0 0.0
      %1621 = vmatpush1.msra.mxu0 0.0
      %1622 = vmatprep.subr.mxu0 0.0
      %1623 = vmatpush1.msra.mxu0 0.0
      %1624 = vmatprep.subr.mxu0 0.0
      %1625 = vmatpush1.msra.mxu0 0.0
      %1626 = vmatprep.subr.mxu0 0.0
      %1627 = vmatpush1.msra.mxu0 0.0
      %1628 = vmatprep.subr.mxu0 0.0
      %1629 = vmatpush1.msra.mxu0 0.0
      %1630 = vmatprep.subr.mxu0 0.0
      %1631 = vmatpush1.msra.mxu0 0.0
      %1632 = vmatprep.subr.mxu0 0.0
      %1633 = vmatpush1.msra.mxu0 0.0
      %1634 = vmatprep.subr.mxu0 0.0
      %1635 = vmatpush1.msra.mxu0 0.0
      %1636 = vmatprep.subr.mxu0 0.0
      %1637 = vmatpush1.msra.mxu0 0.0
      %1638 = vmatprep.subr.mxu0 0.0
      %1639 = vmatpush1.msra.mxu0 0.0
      %1640 = vmatprep.subr.mxu0 0.0
      %1641 = vmatpush1.msra.mxu0 0.0
      %1642 = vmatprep.subr.mxu0 0.0
      %1643 = vmatpush1.msra.mxu0 0.0
      %1644 = vmatprep.subr.mxu0 0.0
      %1645 = vmatpush1.msra.mxu0 0.0
      %1646 = vmatprep.subr.mxu0 0.0
      %1647 = vmatpush1.msra.mxu0 %v1614
      %1648 = vmatprep.subr.mxu0 0.0
      %1649 = vmatpush2.msra.mxu0 0.0
      %1650 = vmatprep.subr.mxu0 0.0
      %1651 = vmatpush2.msra.mxu0 0.0
      %1652 = vmatprep.subr.mxu0 0.0
      %1653 = vmatpush2.msra.mxu0 0.0
      %1654 = vmatprep.subr.mxu0 0.0
      %1655 = vmatpush2.msra.mxu0 0.0
      %1656 = vmatprep.subr.mxu0 0.0
      %1657 = vmatpush2.msra.mxu0 0.0
      %1658 = vmatprep.subr.mxu0 0.0
      %1659 = vmatpush2.msra.mxu0 0.0
      %1660 = vmatprep.subr.mxu0 0.0
      %1661 = vmatpush2.msra.mxu0 0.0
      %1662 = vmatprep.subr.mxu0 0.0
      %1663 = vmatpush2.msra.mxu0 0.0
      %1664 = vmatprep.subr.mxu0 0.0
      %1665 = vmatpush2.msra.mxu0 0.0
      %1666 = vmatprep.subr.mxu0 0.0
      %1667 = vmatpush2.msra.mxu0 0.0
      %1668 = vmatprep.subr.mxu0 0.0
      %1669 = vmatpush2.msra.mxu0 0.0
      %1670 = vmatprep.subr.mxu0 0.0
      %1671 = vmatpush2.msra.mxu0 0.0
      %1672 = vmatprep.subr.mxu0 0.0
      %1673 = vmatpush2.msra.mxu0 0.0
      %1674 = vmatprep.subr.mxu0 0.0
      %1675 = vmatpush2.msra.mxu0 0.0
      %1676 = vmatprep.subr.mxu0 0.0
      %1677 = vmatpush2.msra.mxu0 0.0
      %1678 = vmatprep.subr.mxu0 0.0
      %1679 = vmatpush2.msra.mxu0 0.0
      %1680 = vmatprep.mubr.f32.mxu0 0.0
      %1681 = vmatmul.mubr.f32.gmra.mxu0 %v1611
      %v1682 = vpop.f32.mrf.mxu0
      %v1683 = vadd.f32 0.0, %v1682
      %v1684 = vpop.f32.mrf.mxu0
      %1685 = vdwg.mxu0
      %v1686 = vsel %vm177, %v543, 0
      %v1689 = vsel %vm184, %v634, 0
      %1691 = vmatprep.subr.mxu0 0.0
      %1692 = vmatpush1.msra.mxu0 0.0
      %1693 = vmatprep.subr.mxu0 0.0
      %1694 = vmatpush1.msra.mxu0 0.0
      %1695 = vmatprep.subr.mxu0 0.0
      %1696 = vmatpush1.msra.mxu0 0.0
      %1697 = vmatprep.subr.mxu0 0.0
      %1698 = vmatpush1.msra.mxu0 0.0
      %1699 = vmatprep.subr.mxu0 0.0
      %1700 = vmatpush1.msra.mxu0 0.0
      %1701 = vmatprep.subr.mxu0 0.0
      %1702 = vmatpush1.msra.mxu0 0.0
      %1703 = vmatprep.subr.mxu0 0.0
      %1704 = vmatpush1.msra.mxu0 0.0
      %1705 = vmatprep.subr.mxu0 0.0
      %1706 = vmatpush1.msra.mxu0 0.0
      %1707 = vmatprep.subr.mxu0 0.0
      %1708 = vmatpush1.msra.mxu0 0.0
      %1709 = vmatprep.subr.mxu0 0.0
      %1710 = vmatpush1.msra.mxu0 0.0
      %1711 = vmatprep.subr.mxu0 0.0
      %1712 = vmatpush1.msra.mxu0 0.0
      %1713 = vmatprep.subr.mxu0 0.0
      %1714 = vmatpush1.msra.mxu0 0.0
      %1715 = vmatprep.subr.mxu0 0.0
      %1716 = vmatpush1.msra.mxu0 0.0
      %1717 = vmatprep.subr.mxu0 0.0
      %1718 = vmatpush1.msra.mxu0 0.0
      %1719 = vmatprep.subr.mxu0 0.0
      %1720 = vmatpush1.msra.mxu0 0.0
      %1721 = vmatprep.subr.mxu0 0.0
      %1722 = vmatpush1.msra.mxu0 %v1689
      %1723 = vmatprep.subr.mxu0 0.0
      %1724 = vmatpush2.msra.mxu0 0.0
      %1725 = vmatprep.subr.mxu0 0.0
      %1726 = vmatpush2.msra.mxu0 0.0
      %1727 = vmatprep.subr.mxu0 0.0
      %1728 = vmatpush2.msra.mxu0 0.0
      %1729 = vmatprep.subr.mxu0 0.0
      %1730 = vmatpush2.msra.mxu0 0.0
      %1731 = vmatprep.subr.mxu0 0.0
      %1732 = vmatpush2.msra.mxu0 0.0
      %1733 = vmatprep.subr.mxu0 0.0
      %1734 = vmatpush2.msra.mxu0 0.0
      %1735 = vmatprep.subr.mxu0 0.0
      %1736 = vmatpush2.msra.mxu0 0.0
      %1737 = vmatprep.subr.mxu0 0.0
      %1738 = vmatpush2.msra.mxu0 0.0
      %1739 = vmatprep.subr.mxu0 0.0
      %1740 = vmatpush2.msra.mxu0 0.0
      %1741 = vmatprep.subr.mxu0 0.0
      %1742 = vmatpush2.msra.mxu0 0.0
      %1743 = vmatprep.subr.mxu0 0.0
      %1744 = vmatpush2.msra.mxu0 0.0
      %1745 = vmatprep.subr.mxu0 0.0
      %1746 = vmatpush2.msra.mxu0 0.0
      %1747 = vmatprep.subr.mxu0 0.0
      %1748 = vmatpush2.msra.mxu0 0.0
      %1749 = vmatprep.subr.mxu0 0.0
      %1750 = vmatpush2.msra.mxu0 0.0
      %1751 = vmatprep.subr.mxu0 0.0
      %1752 = vmatpush2.msra.mxu0 0.0
      %1753 = vmatprep.subr.mxu0 0.0
      %1754 = vmatpush2.msra.mxu0 0.0
      %1755 = vmatprep.mubr.f32.mxu0 0.0
      %1756 = vmatmul.mubr.f32.gmra.mxu0 %v1686
      %v1757 = vpop.f32.mrf.mxu0
      %v1758 = vadd.f32 0.0, %v1757
      %v1759 = vpop.f32.mrf.mxu0
      %1760 = vdwg.mxu0
      %v1761 = vsel %vm177, %v545, 0
      %v1764 = vsel %vm184, %v635, 0
      %1766 = vmatprep.subr.mxu0 0.0
      %1767 = vmatpush1.msra.mxu0 0.0
      %1768 = vmatprep.subr.mxu0 0.0
      %1769 = vmatpush1.msra.mxu0 0.0
      %1770 = vmatprep.subr.mxu0 0.0
      %1771 = vmatpush1.msra.mxu0 0.0
      %1772 = vmatprep.subr.mxu0 0.0
      %1773 = vmatpush1.msra.mxu0 0.0
      %1774 = vmatprep.subr.mxu0 0.0
      %1775 = vmatpush1.msra.mxu0 0.0
      %1776 = vmatprep.subr.mxu0 0.0
      %1777 = vmatpush1.msra.mxu0 0.0
      %1778 = vmatprep.subr.mxu0 0.0
      %1779 = vmatpush1.msra.mxu0 0.0
      %1780 = vmatprep.subr.mxu0 0.0
      %1781 = vmatpush1.msra.mxu0 0.0
      %1782 = vmatprep.subr.mxu0 0.0
      %1783 = vmatpush1.msra.mxu0 0.0
      %1784 = vmatprep.subr.mxu0 0.0
      %1785 = vmatpush1.msra.mxu0 0.0
      %1786 = vmatprep.subr.mxu0 0.0
      %1787 = vmatpush1.msra.mxu0 0.0
      %1788 = vmatprep.subr.mxu0 0.0
      %1789 = vmatpush1.msra.mxu0 0.0
      %1790 = vmatprep.subr.mxu0 0.0
      %1791 = vmatpush1.msra.mxu0 0.0
      %1792 = vmatprep.subr.mxu0 0.0
      %1793 = vmatpush1.msra.mxu0 0.0
      %1794 = vmatprep.subr.mxu0 0.0
      %1795 = vmatpush1.msra.mxu0 0.0
      %1796 = vmatprep.subr.mxu0 0.0
      %1797 = vmatpush1.msra.mxu0 %v1764
      %1798 = vmatprep.subr.mxu0 0.0
      %1799 = vmatpush2.msra.mxu0 0.0
      %1800 = vmatprep.subr.mxu0 0.0
      %1801 = vmatpush2.msra.mxu0 0.0
      %1802 = vmatprep.subr.mxu0 0.0
      %1803 = vmatpush2.msra.mxu0 0.0
      %1804 = vmatprep.subr.mxu0 0.0
      %1805 = vmatpush2.msra.mxu0 0.0
      %1806 = vmatprep.subr.mxu0 0.0
      %1807 = vmatpush2.msra.mxu0 0.0
      %1808 = vmatprep.subr.mxu0 0.0
      %1809 = vmatpush2.msra.mxu0 0.0
      %1810 = vmatprep.subr.mxu0 0.0
      %1811 = vmatpush2.msra.mxu0 0.0
      %1812 = vmatprep.subr.mxu0 0.0
      %1813 = vmatpush2.msra.mxu0 0.0
      %1814 = vmatprep.subr.mxu0 0.0
      %1815 = vmatpush2.msra.mxu0 0.0
      %1816 = vmatprep.subr.mxu0 0.0
      %1817 = vmatpush2.msra.mxu0 0.0
      %1818 = vmatprep.subr.mxu0 0.0
      %1819 = vmatpush2.msra.mxu0 0.0
      %1820 = vmatprep.subr.mxu0 0.0
      %1821 = vmatpush2.msra.mxu0 0.0
      %1822 = vmatprep.subr.mxu0 0.0
      %1823 = vmatpush2.msra.mxu0 0.0
      %1824 = vmatprep.subr.mxu0 0.0
      %1825 = vmatpush2.msra.mxu0 0.0
      %1826 = vmatprep.subr.mxu0 0.0
      %1827 = vmatpush2.msra.mxu0 0.0
      %1828 = vmatprep.subr.mxu0 0.0
      %1829 = vmatpush2.msra.mxu0 0.0
      %1830 = vmatprep.mubr.f32.mxu0 0.0
      %1831 = vmatmul.mubr.f32.gmra.mxu0 %v1761
      %v1832 = vpop.f32.mrf.mxu0
      %v1833 = vadd.f32 0.0, %v1832
      %v1834 = vpop.f32.mrf.mxu0
      %1835 = vdwg.mxu0
      %vm1836 = vcmask 254976
      %v1837 = vsel %vm1836, %v708, 0.0
      %v1838 = vsel %vm1836, %v1308, 0.0
      %v1839 = vadd.f32 %v1837, %v1838
      %v1840 = vsel %vm1836, %v783, 0.0
      %v1841 = vsel %vm1836, %v1383, 0.0
      %v1842 = vadd.f32 %v1840, %v1841
      %v1843 = vsel %vm1836, %v858, 0.0
      %v1844 = vsel %vm1836, %v1458, 0.0
      %v1845 = vadd.f32 %v1843, %v1844
      %v1846 = vsel %vm1836, %v933, 0.0
      %v1847 = vsel %vm1836, %v1533, 0.0
      %v1848 = vadd.f32 %v1846, %v1847
      %v1849 = vsel %vm1836, %v1008, 0.0
      %v1850 = vsel %vm1836, %v1608, 0.0
      %v1851 = vadd.f32 %v1849, %v1850
      %v1852 = vsel %vm1836, %v1083, 0.0
      %v1853 = vsel %vm1836, %v1683, 0.0
      %v1854 = vadd.f32 %v1852, %v1853
      %v1855 = vsel %vm1836, %v1158, 0.0
      %v1856 = vsel %vm1836, %v1758, 0.0
      %v1857 = vadd.f32 %v1855, %v1856
      %v1858 = vsel %vm1836, %v1233, 0.0
      %v1859 = vsel %vm1836, %v1833, 0.0
      %v1860 = vadd.f32 %v1858, %v1859
      %v1869 = vcombine.low %v1839, %v1842
      %v1870 = vcombine.low %v1845, %v1848
      %v1872 = vunpack.c.l.s4 1983009808
      %v1873 = vunpack.c.0.s8 %v1872
      %v1874 = vlaneseq
      %v1875 = vshrl.u32 %v1874, 7
      %v1876 = vsub.s32 %v1873, %v1875
      %v1877 = vrot.slane %v1869, %v1876
      %v1879 = vunpack.c.l.s4 1983009808
      %v1880 = vunpack.c.0.s8 %v1879
      %v1881 = vlaneseq
      %v1882 = vshrl.u32 %v1881, 7
      %v1883 = vsub.s32 %v1880, %v1882
      %v1884 = vrot.slane %v1870, %v1883
      %v1885 = vcombine.low %v1877, %v1884
      %v1886 = vcombine.low %v1851, %v1854
      %v1887 = vcombine.low %v1857, %v1860
      %v1889 = vunpack.c.l.s4 1983009808
      %v1890 = vunpack.c.0.s8 %v1889
      %v1891 = vlaneseq
      %v1892 = vshrl.u32 %v1891, 7
      %v1893 = vsub.s32 %v1890, %v1892
      %v1894 = vrot.slane %v1886, %v1893
      %v1896 = vunpack.c.l.s4 1983009808
      %v1897 = vunpack.c.0.s8 %v1896
      %v1898 = vlaneseq
      %v1899 = vshrl.u32 %v1898, 7
      %v1900 = vsub.s32 %v1897, %v1899
      %v1901 = vrot.slane %v1887, %v1900
      %v1902 = vcombine.low %v1894, %v1901
      %v1905 = vadd.f32 %v618, %v1885
      %v1906 = vadd.f32 %v619, %v1902
      %v1907 = vld [vmem:[%s4] sm:$0xff]
      %v1908 = vld [vmem:[%s4 + $0x8] sm:$0xff]
      %v1909 = vld [vmem:[%s4 + $0x10] sm:$0xff]
      %v1910 = vld [vmem:[%s4 + $0x18] sm:$0xff]
      %v1911 = vld [vmem:[%s4 + $0x20] sm:$0xff]
      %v1912 = vld [vmem:[%s4 + $0x28] sm:$0xff]
      %v1913 = vld [vmem:[%s4 + $0x30] sm:$0xff]
      %v1914 = vld [vmem:[%s4 + $0x38] sm:$0xff]
      %v1915 = vld [vmem:[%s4 + $0x40] sm:$0xff]
      %v1916 = vld [vmem:[%s4 + $0x48] sm:$0xff]
      %v1917 = vld [vmem:[%s4 + $0x50] sm:$0xff]
      %v1918 = vld [vmem:[%s4 + $0x58] sm:$0xff]
      %v1919 = vld [vmem:[%s4 + $0x60] sm:$0xff]
      %v1920 = vld [vmem:[%s4 + $0x68] sm:$0xff]
      %v1921 = vld [vmem:[%s4 + $0x70] sm:$0xff]
      %v1922 = vld [vmem:[%s4 + $0x78] sm:$0xff]
      %v1923 = vld [vmem:[%s4 + $0x80] sm:$0xff]
      %v1924 = vld [vmem:[%s4 + $0x88] sm:$0xff]
      %v1925 = vld [vmem:[%s4 + $0x90] sm:$0xff]
      %v1926 = vld [vmem:[%s4 + $0x98] sm:$0xff]
      %v1927 = vld [vmem:[%s4 + $0xa0] sm:$0xff]
      %v1928 = vld [vmem:[%s4 + $0xa8] sm:$0xff]
      %v1929 = vld [vmem:[%s4 + $0xb0] sm:$0xff]
      %v1930 = vld [vmem:[%s4 + $0xb8] sm:$0xff]
      %v1931 = vld [vmem:[%s4 + $0xc0] sm:$0xff]
      %v1932 = vld [vmem:[%s4 + $0xc8] sm:$0xff]
      %v1933 = vld [vmem:[%s4 + $0xd0] sm:$0xff]
      %v1934 = vld [vmem:[%s4 + $0xd8] sm:$0xff]
      %v1935 = vld [vmem:[%s4 + $0xe0] sm:$0xff]
      %v1936 = vld [vmem:[%s4 + $0xe8] sm:$0xff]
      %v1937 = vld [vmem:[%s4 + $0xf0] sm:$0xff]
      %v1938 = vld [vmem:[%s4 + $0xf8] sm:$0xff]
      %v1939 = vsel %vm74, %v557, 0
      %1941 = vmatprep.subr.mxu0 0.0
      %1942 = vmatpush1.msra.mxu0 0.0
      %1943 = vmatprep.subr.mxu0 0.0
      %1944 = vmatpush1.msra.mxu0 0.0
      %1945 = vmatprep.subr.mxu0 0.0
      %1946 = vmatpush1.msra.mxu0 0.0
      %1947 = vmatprep.subr.mxu0 0.0
      %1948 = vmatpush1.msra.mxu0 0.0
      %1949 = vmatprep.subr.mxu0 0.0
      %1950 = vmatpush1.msra.mxu0 0.0
      %1951 = vmatprep.subr.mxu0 0.0
      %1952 = vmatpush1.msra.mxu0 0.0
      %1953 = vmatprep.subr.mxu0 0.0
      %1954 = vmatpush1.msra.mxu0 0.0
      %1955 = vmatprep.subr.mxu0 0.0
      %1956 = vmatpush1.msra.mxu0 0.0
      %1957 = vmatprep.subr.mxu0 0.0
      %1958 = vmatpush1.msra.mxu0 0.0
      %1959 = vmatprep.subr.mxu0 0.0
      %1960 = vmatpush1.msra.mxu0 0.0
      %1961 = vmatprep.subr.mxu0 0.0
      %1962 = vmatpush1.msra.mxu0 0.0
      %1963 = vmatprep.subr.mxu0 0.0
      %1964 = vmatpush1.msra.mxu0 0.0
      %1965 = vmatprep.subr.mxu0 0.0
      %1966 = vmatpush1.msra.mxu0 0.0
      %1967 = vmatprep.subr.mxu0 0.0
      %1968 = vmatpush1.msra.mxu0 0.0
      %1969 = vmatprep.subr.mxu0 0.0
      %1970 = vmatpush1.msra.mxu0 %v1908
      %1971 = vmatprep.subr.mxu0 0.0
      %1972 = vmatpush1.msra.mxu0 %v1907
      %1973 = vmatprep.subr.mxu0 0.0
      %1974 = vmatpush2.msra.mxu0 0.0
      %1975 = vmatprep.subr.mxu0 0.0
      %1976 = vmatpush2.msra.mxu0 0.0
      %1977 = vmatprep.subr.mxu0 0.0
      %1978 = vmatpush2.msra.mxu0 0.0
      %1979 = vmatprep.subr.mxu0 0.0
      %1980 = vmatpush2.msra.mxu0 0.0
      %1981 = vmatprep.subr.mxu0 0.0
      %1982 = vmatpush2.msra.mxu0 0.0
      %1983 = vmatprep.subr.mxu0 0.0
      %1984 = vmatpush2.msra.mxu0 0.0
      %1985 = vmatprep.subr.mxu0 0.0
      %1986 = vmatpush2.msra.mxu0 0.0
      %1987 = vmatprep.subr.mxu0 0.0
      %1988 = vmatpush2.msra.mxu0 0.0
      %1989 = vmatprep.subr.mxu0 0.0
      %1990 = vmatpush2.msra.mxu0 0.0
      %1991 = vmatprep.subr.mxu0 0.0
      %1992 = vmatpush2.msra.mxu0 0.0
      %1993 = vmatprep.subr.mxu0 0.0
      %1994 = vmatpush2.msra.mxu0 0.0
      %1995 = vmatprep.subr.mxu0 0.0
      %1996 = vmatpush2.msra.mxu0 0.0
      %1997 = vmatprep.subr.mxu0 0.0
      %1998 = vmatpush2.msra.mxu0 0.0
      %1999 = vmatprep.subr.mxu0 0.0
      %2000 = vmatpush2.msra.mxu0 0.0
      %2001 = vmatprep.subr.mxu0 0.0
      %2002 = vmatpush2.msra.mxu0 0.0
      %2003 = vmatprep.subr.mxu0 0.0
      %2004 = vmatpush2.msra.mxu0 0.0
      %2005 = vmatprep.mubr.f32.mxu0 0.0
      %2006 = vmatmul.mubr.f32.gmra.mxu0 %v1939
      %v2007 = vpop.f32.mrf.mxu0
      %v2008 = vadd.f32 0.0, %v2007
      %v2009 = vpop.f32.mrf.mxu0
      %2010 = vdwg.mxu0
      %v2011 = vsel %vm74, %v565, 0
      %2013 = vmatprep.subr.mxu0 0.0
      %2014 = vmatpush1.msra.mxu0 0.0
      %2015 = vmatprep.subr.mxu0 0.0
      %2016 = vmatpush1.msra.mxu0 0.0
      %2017 = vmatprep.subr.mxu0 0.0
      %2018 = vmatpush1.msra.mxu0 0.0
      %2019 = vmatprep.subr.mxu0 0.0
      %2020 = vmatpush1.msra.mxu0 0.0
      %2021 = vmatprep.subr.mxu0 0.0
      %2022 = vmatpush1.msra.mxu0 0.0
      %2023 = vmatprep.subr.mxu0 0.0
      %2024 = vmatpush1.msra.mxu0 0.0
      %2025 = vmatprep.subr.mxu0 0.0
      %2026 = vmatpush1.msra.mxu0 0.0
      %2027 = vmatprep.subr.mxu0 0.0
      %2028 = vmatpush1.msra.mxu0 0.0
      %2029 = vmatprep.subr.mxu0 0.0
      %2030 = vmatpush1.msra.mxu0 0.0
      %2031 = vmatprep.subr.mxu0 0.0
      %2032 = vmatpush1.msra.mxu0 0.0
      %2033 = vmatprep.subr.mxu0 0.0
      %2034 = vmatpush1.msra.mxu0 0.0
      %2035 = vmatprep.subr.mxu0 0.0
      %2036 = vmatpush1.msra.mxu0 0.0
      %2037 = vmatprep.subr.mxu0 0.0
      %2038 = vmatpush1.msra.mxu0 0.0
      %2039 = vmatprep.subr.mxu0 0.0
      %2040 = vmatpush1.msra.mxu0 0.0
      %2041 = vmatprep.subr.mxu0 0.0
      %2042 = vmatpush1.msra.mxu0 %v1910
      %2043 = vmatprep.subr.mxu0 0.0
      %2044 = vmatpush1.msra.mxu0 %v1909
      %2045 = vmatprep.subr.mxu0 0.0
      %2046 = vmatpush2.msra.mxu0 0.0
      %2047 = vmatprep.subr.mxu0 0.0
      %2048 = vmatpush2.msra.mxu0 0.0
      %2049 = vmatprep.subr.mxu0 0.0
      %2050 = vmatpush2.msra.mxu0 0.0
      %2051 = vmatprep.subr.mxu0 0.0
      %2052 = vmatpush2.msra.mxu0 0.0
      %2053 = vmatprep.subr.mxu0 0.0
      %2054 = vmatpush2.msra.mxu0 0.0
      %2055 = vmatprep.subr.mxu0 0.0
      %2056 = vmatpush2.msra.mxu0 0.0
      %2057 = vmatprep.subr.mxu0 0.0
      %2058 = vmatpush2.msra.mxu0 0.0
      %2059 = vmatprep.subr.mxu0 0.0
      %2060 = vmatpush2.msra.mxu0 0.0
      %2061 = vmatprep.subr.mxu0 0.0
      %2062 = vmatpush2.msra.mxu0 0.0
      %2063 = vmatprep.subr.mxu0 0.0
      %2064 = vmatpush2.msra.mxu0 0.0
      %2065 = vmatprep.subr.mxu0 0.0
      %2066 = vmatpush2.msra.mxu0 0.0
      %2067 = vmatprep.subr.mxu0 0.0
      %2068 = vmatpush2.msra.mxu0 0.0
      %2069 = vmatprep.subr.mxu0 0.0
      %2070 = vmatpush2.msra.mxu0 0.0
      %2071 = vmatprep.subr.mxu0 0.0
      %2072 = vmatpush2.msra.mxu0 0.0
      %2073 = vmatprep.subr.mxu0 0.0
      %2074 = vmatpush2.msra.mxu0 0.0
      %2075 = vmatprep.subr.mxu0 0.0
      %2076 = vmatpush2.msra.mxu0 0.0
      %2077 = vmatprep.mubr.f32.mxu0 0.0
      %2078 = vmatmul.mubr.f32.gmra.mxu0 %v2011
      %v2079 = vpop.f32.mrf.mxu0
      %v2080 = vadd.f32 0.0, %v2079
      %v2081 = vpop.f32.mrf.mxu0
      %2082 = vdwg.mxu0
      %v2083 = vsel %vm74, %v564, 0
      %2085 = vmatprep.subr.mxu0 0.0
      %2086 = vmatpush1.msra.mxu0 0.0
      %2087 = vmatprep.subr.mxu0 0.0
      %2088 = vmatpush1.msra.mxu0 0.0
      %2089 = vmatprep.subr.mxu0 0.0
      %2090 = vmatpush1.msra.mxu0 0.0
      %2091 = vmatprep.subr.mxu0 0.0
      %2092 = vmatpush1.msra.mxu0 0.0
      %2093 = vmatprep.subr.mxu0 0.0
      %2094 = vmatpush1.msra.mxu0 0.0
      %2095 = vmatprep.subr.mxu0 0.0
      %2096 = vmatpush1.msra.mxu0 0.0
      %2097 = vmatprep.subr.mxu0 0.0
      %2098 = vmatpush1.msra.mxu0 0.0
      %2099 = vmatprep.subr.mxu0 0.0
      %2100 = vmatpush1.msra.mxu0 0.0
      %2101 = vmatprep.subr.mxu0 0.0
      %2102 = vmatpush1.msra.mxu0 0.0
      %2103 = vmatprep.subr.mxu0 0.0
      %2104 = vmatpush1.msra.mxu0 0.0
      %2105 = vmatprep.subr.mxu0 0.0
      %2106 = vmatpush1.msra.mxu0 0.0
      %2107 = vmatprep.subr.mxu0 0.0
      %2108 = vmatpush1.msra.mxu0 0.0
      %2109 = vmatprep.subr.mxu0 0.0
      %2110 = vmatpush1.msra.mxu0 0.0
      %2111 = vmatprep.subr.mxu0 0.0
      %2112 = vmatpush1.msra.mxu0 0.0
      %2113 = vmatprep.subr.mxu0 0.0
      %2114 = vmatpush1.msra.mxu0 %v1912
      %2115 = vmatprep.subr.mxu0 0.0
      %2116 = vmatpush1.msra.mxu0 %v1911
      %2117 = vmatprep.subr.mxu0 0.0
      %2118 = vmatpush2.msra.mxu0 0.0
      %2119 = vmatprep.subr.mxu0 0.0
      %2120 = vmatpush2.msra.mxu0 0.0
      %2121 = vmatprep.subr.mxu0 0.0
      %2122 = vmatpush2.msra.mxu0 0.0
      %2123 = vmatprep.subr.mxu0 0.0
      %2124 = vmatpush2.msra.mxu0 0.0
      %2125 = vmatprep.subr.mxu0 0.0
      %2126 = vmatpush2.msra.mxu0 0.0
      %2127 = vmatprep.subr.mxu0 0.0
      %2128 = vmatpush2.msra.mxu0 0.0
      %2129 = vmatprep.subr.mxu0 0.0
      %2130 = vmatpush2.msra.mxu0 0.0
      %2131 = vmatprep.subr.mxu0 0.0
      %2132 = vmatpush2.msra.mxu0 0.0
      %2133 = vmatprep.subr.mxu0 0.0
      %2134 = vmatpush2.msra.mxu0 0.0
      %2135 = vmatprep.subr.mxu0 0.0
      %2136 = vmatpush2.msra.mxu0 0.0
      %2137 = vmatprep.subr.mxu0 0.0
      %2138 = vmatpush2.msra.mxu0 0.0
      %2139 = vmatprep.subr.mxu0 0.0
      %2140 = vmatpush2.msra.mxu0 0.0
      %2141 = vmatprep.subr.mxu0 0.0
      %2142 = vmatpush2.msra.mxu0 0.0
      %2143 = vmatprep.subr.mxu0 0.0
      %2144 = vmatpush2.msra.mxu0 0.0
      %2145 = vmatprep.subr.mxu0 0.0
      %2146 = vmatpush2.msra.mxu0 0.0
      %2147 = vmatprep.subr.mxu0 0.0
      %2148 = vmatpush2.msra.mxu0 0.0
      %2149 = vmatprep.mubr.f32.mxu0 0.0
      %2150 = vmatmul.mubr.f32.gmra.mxu0 %v2083
      %v2151 = vpop.f32.mrf.mxu0
      %v2152 = vadd.f32 0.0, %v2151
      %v2153 = vpop.f32.mrf.mxu0
      %2154 = vdwg.mxu0
      %v2155 = vsel %vm74, %v566, 0
      %2157 = vmatprep.subr.mxu0 0.0
      %2158 = vmatpush1.msra.mxu0 0.0
      %2159 = vmatprep.subr.mxu0 0.0
      %2160 = vmatpush1.msra.mxu0 0.0
      %2161 = vmatprep.subr.mxu0 0.0
      %2162 = vmatpush1.msra.mxu0 0.0
      %2163 = vmatprep.subr.mxu0 0.0
      %2164 = vmatpush1.msra.mxu0 0.0
      %2165 = vmatprep.subr.mxu0 0.0
      %2166 = vmatpush1.msra.mxu0 0.0
      %2167 = vmatprep.subr.mxu0 0.0
      %2168 = vmatpush1.msra.mxu0 0.0
      %2169 = vmatprep.subr.mxu0 0.0
      %2170 = vmatpush1.msra.mxu0 0.0
      %2171 = vmatprep.subr.mxu0 0.0
      %2172 = vmatpush1.msra.mxu0 0.0
      %2173 = vmatprep.subr.mxu0 0.0
      %2174 = vmatpush1.msra.mxu0 0.0
      %2175 = vmatprep.subr.mxu0 0.0
      %2176 = vmatpush1.msra.mxu0 0.0
      %2177 = vmatprep.subr.mxu0 0.0
      %2178 = vmatpush1.msra.mxu0 0.0
      %2179 = vmatprep.subr.mxu0 0.0
      %2180 = vmatpush1.msra.mxu0 0.0
      %2181 = vmatprep.subr.mxu0 0.0
      %2182 = vmatpush1.msra.mxu0 0.0
      %2183 = vmatprep.subr.mxu0 0.0
      %2184 = vmatpush1.msra.mxu0 0.0
      %2185 = vmatprep.subr.mxu0 0.0
      %2186 = vmatpush1.msra.mxu0 %v1914
      %2187 = vmatprep.subr.mxu0 0.0
      %2188 = vmatpush1.msra.mxu0 %v1913
      %2189 = vmatprep.subr.mxu0 0.0
      %2190 = vmatpush2.msra.mxu0 0.0
      %2191 = vmatprep.subr.mxu0 0.0
      %2192 = vmatpush2.msra.mxu0 0.0
      %2193 = vmatprep.subr.mxu0 0.0
      %2194 = vmatpush2.msra.mxu0 0.0
      %2195 = vmatprep.subr.mxu0 0.0
      %2196 = vmatpush2.msra.mxu0 0.0
      %2197 = vmatprep.subr.mxu0 0.0
      %2198 = vmatpush2.msra.mxu0 0.0
      %2199 = vmatprep.subr.mxu0 0.0
      %2200 = vmatpush2.msra.mxu0 0.0
      %2201 = vmatprep.subr.mxu0 0.0
      %2202 = vmatpush2.msra.mxu0 0.0
      %2203 = vmatprep.subr.mxu0 0.0
      %2204 = vmatpush2.msra.mxu0 0.0
      %2205 = vmatprep.subr.mxu0 0.0
      %2206 = vmatpush2.msra.mxu0 0.0
      %2207 = vmatprep.subr.mxu0 0.0
      %2208 = vmatpush2.msra.mxu0 0.0
      %2209 = vmatprep.subr.mxu0 0.0
      %2210 = vmatpush2.msra.mxu0 0.0
      %2211 = vmatprep.subr.mxu0 0.0
      %2212 = vmatpush2.msra.mxu0 0.0
      %2213 = vmatprep.subr.mxu0 0.0
      %2214 = vmatpush2.msra.mxu0 0.0
      %2215 = vmatprep.subr.mxu0 0.0
      %2216 = vmatpush2.msra.mxu0 0.0
      %2217 = vmatprep.subr.mxu0 0.0
      %2218 = vmatpush2.msra.mxu0 0.0
      %2219 = vmatprep.subr.mxu0 0.0
      %2220 = vmatpush2.msra.mxu0 0.0
      %2221 = vmatprep.mubr.f32.mxu0 0.0
      %2222 = vmatmul.mubr.f32.gmra.mxu0 %v2155
      %v2223 = vpop.f32.mrf.mxu0
      %v2224 = vadd.f32 0.0, %v2223
      %v2225 = vpop.f32.mrf.mxu0
      %2226 = vdwg.mxu0
      %v2227 = vsel %vm74, %v574, 0
      %2229 = vmatprep.subr.mxu0 0.0
      %2230 = vmatpush1.msra.mxu0 0.0
      %2231 = vmatprep.subr.mxu0 0.0
      %2232 = vmatpush1.msra.mxu0 0.0
      %2233 = vmatprep.subr.mxu0 0.0
      %2234 = vmatpush1.msra.mxu0 0.0
      %2235 = vmatprep.subr.mxu0 0.0
      %2236 = vmatpush1.msra.mxu0 0.0
      %2237 = vmatprep.subr.mxu0 0.0
      %2238 = vmatpush1.msra.mxu0 0.0
      %2239 = vmatprep.subr.mxu0 0.0
      %2240 = vmatpush1.msra.mxu0 0.0
      %2241 = vmatprep.subr.mxu0 0.0
      %2242 = vmatpush1.msra.mxu0 0.0
      %2243 = vmatprep.subr.mxu0 0.0
      %2244 = vmatpush1.msra.mxu0 0.0
      %2245 = vmatprep.subr.mxu0 0.0
      %2246 = vmatpush1.msra.mxu0 0.0
      %2247 = vmatprep.subr.mxu0 0.0
      %2248 = vmatpush1.msra.mxu0 0.0
      %2249 = vmatprep.subr.mxu0 0.0
      %2250 = vmatpush1.msra.mxu0 0.0
      %2251 = vmatprep.subr.mxu0 0.0
      %2252 = vmatpush1.msra.mxu0 0.0
      %2253 = vmatprep.subr.mxu0 0.0
      %2254 = vmatpush1.msra.mxu0 0.0
      %2255 = vmatprep.subr.mxu0 0.0
      %2256 = vmatpush1.msra.mxu0 0.0
      %2257 = vmatprep.subr.mxu0 0.0
      %2258 = vmatpush1.msra.mxu0 %v1916
      %2259 = vmatprep.subr.mxu0 0.0
      %2260 = vmatpush1.msra.mxu0 %v1915
      %2261 = vmatprep.subr.mxu0 0.0
      %2262 = vmatpush2.msra.mxu0 0.0
      %2263 = vmatprep.subr.mxu0 0.0
      %2264 = vmatpush2.msra.mxu0 0.0
      %2265 = vmatprep.subr.mxu0 0.0
      %2266 = vmatpush2.msra.mxu0 0.0
      %2267 = vmatprep.subr.mxu0 0.0
      %2268 = vmatpush2.msra.mxu0 0.0
      %2269 = vmatprep.subr.mxu0 0.0
      %2270 = vmatpush2.msra.mxu0 0.0
      %2271 = vmatprep.subr.mxu0 0.0
      %2272 = vmatpush2.msra.mxu0 0.0
      %2273 = vmatprep.subr.mxu0 0.0
      %2274 = vmatpush2.msra.mxu0 0.0
      %2275 = vmatprep.subr.mxu0 0.0
      %2276 = vmatpush2.msra.mxu0 0.0
      %2277 = vmatprep.subr.mxu0 0.0
      %2278 = vmatpush2.msra.mxu0 0.0
      %2279 = vmatprep.subr.mxu0 0.0
      %2280 = vmatpush2.msra.mxu0 0.0
      %2281 = vmatprep.subr.mxu0 0.0
      %2282 = vmatpush2.msra.mxu0 0.0
      %2283 = vmatprep.subr.mxu0 0.0
      %2284 = vmatpush2.msra.mxu0 0.0
      %2285 = vmatprep.subr.mxu0 0.0
      %2286 = vmatpush2.msra.mxu0 0.0
      %2287 = vmatprep.subr.mxu0 0.0
      %2288 = vmatpush2.msra.mxu0 0.0
      %2289 = vmatprep.subr.mxu0 0.0
      %2290 = vmatpush2.msra.mxu0 0.0
      %2291 = vmatprep.subr.mxu0 0.0
      %2292 = vmatpush2.msra.mxu0 0.0
      %2293 = vmatprep.mubr.f32.mxu0 0.0
      %2294 = vmatmul.mubr.f32.gmra.mxu0 %v2227
      %v2295 = vpop.f32.mrf.mxu0
      %v2296 = vadd.f32 0.0, %v2295
      %v2297 = vpop.f32.mrf.mxu0
      %2298 = vdwg.mxu0
      %v2299 = vsel %vm74, %v582, 0
      %2301 = vmatprep.subr.mxu0 0.0
      %2302 = vmatpush1.msra.mxu0 0.0
      %2303 = vmatprep.subr.mxu0 0.0
      %2304 = vmatpush1.msra.mxu0 0.0
      %2305 = vmatprep.subr.mxu0 0.0
      %2306 = vmatpush1.msra.mxu0 0.0
      %2307 = vmatprep.subr.mxu0 0.0
      %2308 = vmatpush1.msra.mxu0 0.0
      %2309 = vmatprep.subr.mxu0 0.0
      %2310 = vmatpush1.msra.mxu0 0.0
      %2311 = vmatprep.subr.mxu0 0.0
      %2312 = vmatpush1.msra.mxu0 0.0
      %2313 = vmatprep.subr.mxu0 0.0
      %2314 = vmatpush1.msra.mxu0 0.0
      %2315 = vmatprep.subr.mxu0 0.0
      %2316 = vmatpush1.msra.mxu0 0.0
      %2317 = vmatprep.subr.mxu0 0.0
      %2318 = vmatpush1.msra.mxu0 0.0
      %2319 = vmatprep.subr.mxu0 0.0
      %2320 = vmatpush1.msra.mxu0 0.0
      %2321 = vmatprep.subr.mxu0 0.0
      %2322 = vmatpush1.msra.mxu0 0.0
      %2323 = vmatprep.subr.mxu0 0.0
      %2324 = vmatpush1.msra.mxu0 0.0
      %2325 = vmatprep.subr.mxu0 0.0
      %2326 = vmatpush1.msra.mxu0 0.0
      %2327 = vmatprep.subr.mxu0 0.0
      %2328 = vmatpush1.msra.mxu0 0.0
      %2329 = vmatprep.subr.mxu0 0.0
      %2330 = vmatpush1.msra.mxu0 %v1918
      %2331 = vmatprep.subr.mxu0 0.0
      %2332 = vmatpush1.msra.mxu0 %v1917
      %2333 = vmatprep.subr.mxu0 0.0
      %2334 = vmatpush2.msra.mxu0 0.0
      %2335 = vmatprep.subr.mxu0 0.0
      %2336 = vmatpush2.msra.mxu0 0.0
      %2337 = vmatprep.subr.mxu0 0.0
      %2338 = vmatpush2.msra.mxu0 0.0
      %2339 = vmatprep.subr.mxu0 0.0
      %2340 = vmatpush2.msra.mxu0 0.0
      %2341 = vmatprep.subr.mxu0 0.0
      %2342 = vmatpush2.msra.mxu0 0.0
      %2343 = vmatprep.subr.mxu0 0.0
      %2344 = vmatpush2.msra.mxu0 0.0
      %2345 = vmatprep.subr.mxu0 0.0
      %2346 = vmatpush2.msra.mxu0 0.0
      %2347 = vmatprep.subr.mxu0 0.0
      %2348 = vmatpush2.msra.mxu0 0.0
      %2349 = vmatprep.subr.mxu0 0.0
      %2350 = vmatpush2.msra.mxu0 0.0
      %2351 = vmatprep.subr.mxu0 0.0
      %2352 = vmatpush2.msra.mxu0 0.0
      %2353 = vmatprep.subr.mxu0 0.0
      %2354 = vmatpush2.msra.mxu0 0.0
      %2355 = vmatprep.subr.mxu0 0.0
      %2356 = vmatpush2.msra.mxu0 0.0
      %2357 = vmatprep.subr.mxu0 0.0
      %2358 = vmatpush2.msra.mxu0 0.0
      %2359 = vmatprep.subr.mxu0 0.0
      %2360 = vmatpush2.msra.mxu0 0.0
      %2361 = vmatprep.subr.mxu0 0.0
      %2362 = vmatpush2.msra.mxu0 0.0
      %2363 = vmatprep.subr.mxu0 0.0
      %2364 = vmatpush2.msra.mxu0 0.0
      %2365 = vmatprep.mubr.f32.mxu0 0.0
      %2366 = vmatmul.mubr.f32.gmra.mxu0 %v2299
      %v2367 = vpop.f32.mrf.mxu0
      %v2368 = vadd.f32 0.0, %v2367
      %v2369 = vpop.f32.mrf.mxu0
      %2370 = vdwg.mxu0
      %v2371 = vsel %vm74, %v581, 0
      %2373 = vmatprep.subr.mxu0 0.0
      %2374 = vmatpush1.msra.mxu0 0.0
      %2375 = vmatprep.subr.mxu0 0.0
      %2376 = vmatpush1.msra.mxu0 0.0
      %2377 = vmatprep.subr.mxu0 0.0
      %2378 = vmatpush1.msra.mxu0 0.0
      %2379 = vmatprep.subr.mxu0 0.0
      %2380 = vmatpush1.msra.mxu0 0.0
      %2381 = vmatprep.subr.mxu0 0.0
      %2382 = vmatpush1.msra.mxu0 0.0
      %2383 = vmatprep.subr.mxu0 0.0
      %2384 = vmatpush1.msra.mxu0 0.0
      %2385 = vmatprep.subr.mxu0 0.0
      %2386 = vmatpush1.msra.mxu0 0.0
      %2387 = vmatprep.subr.mxu0 0.0
      %2388 = vmatpush1.msra.mxu0 0.0
      %2389 = vmatprep.subr.mxu0 0.0
      %2390 = vmatpush1.msra.mxu0 0.0
      %2391 = vmatprep.subr.mxu0 0.0
      %2392 = vmatpush1.msra.mxu0 0.0
      %2393 = vmatprep.subr.mxu0 0.0
      %2394 = vmatpush1.msra.mxu0 0.0
      %2395 = vmatprep.subr.mxu0 0.0
      %2396 = vmatpush1.msra.mxu0 0.0
      %2397 = vmatprep.subr.mxu0 0.0
      %2398 = vmatpush1.msra.mxu0 0.0
      %2399 = vmatprep.subr.mxu0 0.0
      %2400 = vmatpush1.msra.mxu0 0.0
      %2401 = vmatprep.subr.mxu0 0.0
      %2402 = vmatpush1.msra.mxu0 %v1920
      %2403 = vmatprep.subr.mxu0 0.0
      %2404 = vmatpush1.msra.mxu0 %v1919
      %2405 = vmatprep.subr.mxu0 0.0
      %2406 = vmatpush2.msra.mxu0 0.0
      %2407 = vmatprep.subr.mxu0 0.0
      %2408 = vmatpush2.msra.mxu0 0.0
      %2409 = vmatprep.subr.mxu0 0.0
      %2410 = vmatpush2.msra.mxu0 0.0
      %2411 = vmatprep.subr.mxu0 0.0
      %2412 = vmatpush2.msra.mxu0 0.0
      %2413 = vmatprep.subr.mxu0 0.0
      %2414 = vmatpush2.msra.mxu0 0.0
      %2415 = vmatprep.subr.mxu0 0.0
      %2416 = vmatpush2.msra.mxu0 0.0
      %2417 = vmatprep.subr.mxu0 0.0
      %2418 = vmatpush2.msra.mxu0 0.0
      %2419 = vmatprep.subr.mxu0 0.0
      %2420 = vmatpush2.msra.mxu0 0.0
      %2421 = vmatprep.subr.mxu0 0.0
      %2422 = vmatpush2.msra.mxu0 0.0
      %2423 = vmatprep.subr.mxu0 0.0
      %2424 = vmatpush2.msra.mxu0 0.0
      %2425 = vmatprep.subr.mxu0 0.0
      %2426 = vmatpush2.msra.mxu0 0.0
      %2427 = vmatprep.subr.mxu0 0.0
      %2428 = vmatpush2.msra.mxu0 0.0
      %2429 = vmatprep.subr.mxu0 0.0
      %2430 = vmatpush2.msra.mxu0 0.0
      %2431 = vmatprep.subr.mxu0 0.0
      %2432 = vmatpush2.msra.mxu0 0.0
      %2433 = vmatprep.subr.mxu0 0.0
      %2434 = vmatpush2.msra.mxu0 0.0
      %2435 = vmatprep.subr.mxu0 0.0
      %2436 = vmatpush2.msra.mxu0 0.0
      %2437 = vmatprep.mubr.f32.mxu0 0.0
      %2438 = vmatmul.mubr.f32.gmra.mxu0 %v2371
      %v2439 = vpop.f32.mrf.mxu0
      %v2440 = vadd.f32 0.0, %v2439
      %v2441 = vpop.f32.mrf.mxu0
      %2442 = vdwg.mxu0
      %v2443 = vsel %vm74, %v583, 0
      %2445 = vmatprep.subr.mxu0 0.0
      %2446 = vmatpush1.msra.mxu0 0.0
      %2447 = vmatprep.subr.mxu0 0.0
      %2448 = vmatpush1.msra.mxu0 0.0
      %2449 = vmatprep.subr.mxu0 0.0
      %2450 = vmatpush1.msra.mxu0 0.0
      %2451 = vmatprep.subr.mxu0 0.0
      %2452 = vmatpush1.msra.mxu0 0.0
      %2453 = vmatprep.subr.mxu0 0.0
      %2454 = vmatpush1.msra.mxu0 0.0
      %2455 = vmatprep.subr.mxu0 0.0
      %2456 = vmatpush1.msra.mxu0 0.0
      %2457 = vmatprep.subr.mxu0 0.0
      %2458 = vmatpush1.msra.mxu0 0.0
      %2459 = vmatprep.subr.mxu0 0.0
      %2460 = vmatpush1.msra.mxu0 0.0
      %2461 = vmatprep.subr.mxu0 0.0
      %2462 = vmatpush1.msra.mxu0 0.0
      %2463 = vmatprep.subr.mxu0 0.0
      %2464 = vmatpush1.msra.mxu0 0.0
      %2465 = vmatprep.subr.mxu0 0.0
      %2466 = vmatpush1.msra.mxu0 0.0
      %2467 = vmatprep.subr.mxu0 0.0
      %2468 = vmatpush1.msra.mxu0 0.0
      %2469 = vmatprep.subr.mxu0 0.0
      %2470 = vmatpush1.msra.mxu0 0.0
      %2471 = vmatprep.subr.mxu0 0.0
      %2472 = vmatpush1.msra.mxu0 0.0
      %2473 = vmatprep.subr.mxu0 0.0
      %2474 = vmatpush1.msra.mxu0 %v1922
      %2475 = vmatprep.subr.mxu0 0.0
      %2476 = vmatpush1.msra.mxu0 %v1921
      %2477 = vmatprep.subr.mxu0 0.0
      %2478 = vmatpush2.msra.mxu0 0.0
      %2479 = vmatprep.subr.mxu0 0.0
      %2480 = vmatpush2.msra.mxu0 0.0
      %2481 = vmatprep.subr.mxu0 0.0
      %2482 = vmatpush2.msra.mxu0 0.0
      %2483 = vmatprep.subr.mxu0 0.0
      %2484 = vmatpush2.msra.mxu0 0.0
      %2485 = vmatprep.subr.mxu0 0.0
      %2486 = vmatpush2.msra.mxu0 0.0
      %2487 = vmatprep.subr.mxu0 0.0
      %2488 = vmatpush2.msra.mxu0 0.0
      %2489 = vmatprep.subr.mxu0 0.0
      %2490 = vmatpush2.msra.mxu0 0.0
      %2491 = vmatprep.subr.mxu0 0.0
      %2492 = vmatpush2.msra.mxu0 0.0
      %2493 = vmatprep.subr.mxu0 0.0
      %2494 = vmatpush2.msra.mxu0 0.0
      %2495 = vmatprep.subr.mxu0 0.0
      %2496 = vmatpush2.msra.mxu0 0.0
      %2497 = vmatprep.subr.mxu0 0.0
      %2498 = vmatpush2.msra.mxu0 0.0
      %2499 = vmatprep.subr.mxu0 0.0
      %2500 = vmatpush2.msra.mxu0 0.0
      %2501 = vmatprep.subr.mxu0 0.0
      %2502 = vmatpush2.msra.mxu0 0.0
      %2503 = vmatprep.subr.mxu0 0.0
      %2504 = vmatpush2.msra.mxu0 0.0
      %2505 = vmatprep.subr.mxu0 0.0
      %2506 = vmatpush2.msra.mxu0 0.0
      %2507 = vmatprep.subr.mxu0 0.0
      %2508 = vmatpush2.msra.mxu0 0.0
      %2509 = vmatprep.mubr.f32.mxu0 0.0
      %2510 = vmatmul.mubr.f32.gmra.mxu0 %v2443
      %v2511 = vpop.f32.mrf.mxu0
      %v2512 = vadd.f32 0.0, %v2511
      %v2513 = vpop.f32.mrf.mxu0
      %2514 = vdwg.mxu0
      %v2515 = vsel %vm74, %v591, 0
      %2517 = vmatprep.subr.mxu0 0.0
      %2518 = vmatpush1.msra.mxu0 0.0
      %2519 = vmatprep.subr.mxu0 0.0
      %2520 = vmatpush1.msra.mxu0 0.0
      %2521 = vmatprep.subr.mxu0 0.0
      %2522 = vmatpush1.msra.mxu0 0.0
      %2523 = vmatprep.subr.mxu0 0.0
      %2524 = vmatpush1.msra.mxu0 0.0
      %2525 = vmatprep.subr.mxu0 0.0
      %2526 = vmatpush1.msra.mxu0 0.0
      %2527 = vmatprep.subr.mxu0 0.0
      %2528 = vmatpush1.msra.mxu0 0.0
      %2529 = vmatprep.subr.mxu0 0.0
      %2530 = vmatpush1.msra.mxu0 0.0
      %2531 = vmatprep.subr.mxu0 0.0
      %2532 = vmatpush1.msra.mxu0 0.0
      %2533 = vmatprep.subr.mxu0 0.0
      %2534 = vmatpush1.msra.mxu0 0.0
      %2535 = vmatprep.subr.mxu0 0.0
      %2536 = vmatpush1.msra.mxu0 0.0
      %2537 = vmatprep.subr.mxu0 0.0
      %2538 = vmatpush1.msra.mxu0 0.0
      %2539 = vmatprep.subr.mxu0 0.0
      %2540 = vmatpush1.msra.mxu0 0.0
      %2541 = vmatprep.subr.mxu0 0.0
      %2542 = vmatpush1.msra.mxu0 0.0
      %2543 = vmatprep.subr.mxu0 0.0
      %2544 = vmatpush1.msra.mxu0 0.0
      %2545 = vmatprep.subr.mxu0 0.0
      %2546 = vmatpush1.msra.mxu0 %v1924
      %2547 = vmatprep.subr.mxu0 0.0
      %2548 = vmatpush1.msra.mxu0 %v1923
      %2549 = vmatprep.subr.mxu0 0.0
      %2550 = vmatpush2.msra.mxu0 0.0
      %2551 = vmatprep.subr.mxu0 0.0
      %2552 = vmatpush2.msra.mxu0 0.0
      %2553 = vmatprep.subr.mxu0 0.0
      %2554 = vmatpush2.msra.mxu0 0.0
      %2555 = vmatprep.subr.mxu0 0.0
      %2556 = vmatpush2.msra.mxu0 0.0
      %2557 = vmatprep.subr.mxu0 0.0
      %2558 = vmatpush2.msra.mxu0 0.0
      %2559 = vmatprep.subr.mxu0 0.0
      %2560 = vmatpush2.msra.mxu0 0.0
      %2561 = vmatprep.subr.mxu0 0.0
      %2562 = vmatpush2.msra.mxu0 0.0
      %2563 = vmatprep.subr.mxu0 0.0
      %2564 = vmatpush2.msra.mxu0 0.0
      %2565 = vmatprep.subr.mxu0 0.0
      %2566 = vmatpush2.msra.mxu0 0.0
      %2567 = vmatprep.subr.mxu0 0.0
      %2568 = vmatpush2.msra.mxu0 0.0
      %2569 = vmatprep.subr.mxu0 0.0
      %2570 = vmatpush2.msra.mxu0 0.0
      %2571 = vmatprep.subr.mxu0 0.0
      %2572 = vmatpush2.msra.mxu0 0.0
      %2573 = vmatprep.subr.mxu0 0.0
      %2574 = vmatpush2.msra.mxu0 0.0
      %2575 = vmatprep.subr.mxu0 0.0
      %2576 = vmatpush2.msra.mxu0 0.0
      %2577 = vmatprep.subr.mxu0 0.0
      %2578 = vmatpush2.msra.mxu0 0.0
      %2579 = vmatprep.subr.mxu0 0.0
      %2580 = vmatpush2.msra.mxu0 0.0
      %2581 = vmatprep.mubr.f32.mxu0 0.0
      %2582 = vmatmul.mubr.f32.gmra.mxu0 %v2515
      %v2583 = vpop.f32.mrf.mxu0
      %v2584 = vadd.f32 0.0, %v2583
      %v2585 = vpop.f32.mrf.mxu0
      %2586 = vdwg.mxu0
      %v2587 = vsel %vm74, %v599, 0
      %2589 = vmatprep.subr.mxu0 0.0
      %2590 = vmatpush1.msra.mxu0 0.0
      %2591 = vmatprep.subr.mxu0 0.0
      %2592 = vmatpush1.msra.mxu0 0.0
      %2593 = vmatprep.subr.mxu0 0.0
      %2594 = vmatpush1.msra.mxu0 0.0
      %2595 = vmatprep.subr.mxu0 0.0
      %2596 = vmatpush1.msra.mxu0 0.0
      %2597 = vmatprep.subr.mxu0 0.0
      %2598 = vmatpush1.msra.mxu0 0.0
      %2599 = vmatprep.subr.mxu0 0.0
      %2600 = vmatpush1.msra.mxu0 0.0
      %2601 = vmatprep.subr.mxu0 0.0
      %2602 = vmatpush1.msra.mxu0 0.0
      %2603 = vmatprep.subr.mxu0 0.0
      %2604 = vmatpush1.msra.mxu0 0.0
      %2605 = vmatprep.subr.mxu0 0.0
      %2606 = vmatpush1.msra.mxu0 0.0
      %2607 = vmatprep.subr.mxu0 0.0
      %2608 = vmatpush1.msra.mxu0 0.0
      %2609 = vmatprep.subr.mxu0 0.0
      %2610 = vmatpush1.msra.mxu0 0.0
      %2611 = vmatprep.subr.mxu0 0.0
      %2612 = vmatpush1.msra.mxu0 0.0
      %2613 = vmatprep.subr.mxu0 0.0
      %2614 = vmatpush1.msra.mxu0 0.0
      %2615 = vmatprep.subr.mxu0 0.0
      %2616 = vmatpush1.msra.mxu0 0.0
      %2617 = vmatprep.subr.mxu0 0.0
      %2618 = vmatpush1.msra.mxu0 %v1926
      %2619 = vmatprep.subr.mxu0 0.0
      %2620 = vmatpush1.msra.mxu0 %v1925
      %2621 = vmatprep.subr.mxu0 0.0
      %2622 = vmatpush2.msra.mxu0 0.0
      %2623 = vmatprep.subr.mxu0 0.0
      %2624 = vmatpush2.msra.mxu0 0.0
      %2625 = vmatprep.subr.mxu0 0.0
      %2626 = vmatpush2.msra.mxu0 0.0
      %2627 = vmatprep.subr.mxu0 0.0
      %2628 = vmatpush2.msra.mxu0 0.0
      %2629 = vmatprep.subr.mxu0 0.0
      %2630 = vmatpush2.msra.mxu0 0.0
      %2631 = vmatprep.subr.mxu0 0.0
      %2632 = vmatpush2.msra.mxu0 0.0
      %2633 = vmatprep.subr.mxu0 0.0
      %2634 = vmatpush2.msra.mxu0 0.0
      %2635 = vmatprep.subr.mxu0 0.0
      %2636 = vmatpush2.msra.mxu0 0.0
      %2637 = vmatprep.subr.mxu0 0.0
      %2638 = vmatpush2.msra.mxu0 0.0
      %2639 = vmatprep.subr.mxu0 0.0
      %2640 = vmatpush2.msra.mxu0 0.0
      %2641 = vmatprep.subr.mxu0 0.0
      %2642 = vmatpush2.msra.mxu0 0.0
      %2643 = vmatprep.subr.mxu0 0.0
      %2644 = vmatpush2.msra.mxu0 0.0
      %2645 = vmatprep.subr.mxu0 0.0
      %2646 = vmatpush2.msra.mxu0 0.0
      %2647 = vmatprep.subr.mxu0 0.0
      %2648 = vmatpush2.msra.mxu0 0.0
      %2649 = vmatprep.subr.mxu0 0.0
      %2650 = vmatpush2.msra.mxu0 0.0
      %2651 = vmatprep.subr.mxu0 0.0
      %2652 = vmatpush2.msra.mxu0 0.0
      %2653 = vmatprep.mubr.f32.mxu0 0.0
      %2654 = vmatmul.mubr.f32.gmra.mxu0 %v2587
      %v2655 = vpop.f32.mrf.mxu0
      %v2656 = vadd.f32 0.0, %v2655
      %v2657 = vpop.f32.mrf.mxu0
      %2658 = vdwg.mxu0
      %v2659 = vsel %vm74, %v598, 0
      %2661 = vmatprep.subr.mxu0 0.0
      %2662 = vmatpush1.msra.mxu0 0.0
      %2663 = vmatprep.subr.mxu0 0.0
      %2664 = vmatpush1.msra.mxu0 0.0
      %2665 = vmatprep.subr.mxu0 0.0
      %2666 = vmatpush1.msra.mxu0 0.0
      %2667 = vmatprep.subr.mxu0 0.0
      %2668 = vmatpush1.msra.mxu0 0.0
      %2669 = vmatprep.subr.mxu0 0.0
      %2670 = vmatpush1.msra.mxu0 0.0
      %2671 = vmatprep.subr.mxu0 0.0
      %2672 = vmatpush1.msra.mxu0 0.0
      %2673 = vmatprep.subr.mxu0 0.0
      %2674 = vmatpush1.msra.mxu0 0.0
      %2675 = vmatprep.subr.mxu0 0.0
      %2676 = vmatpush1.msra.mxu0 0.0
      %2677 = vmatprep.subr.mxu0 0.0
      %2678 = vmatpush1.msra.mxu0 0.0
      %2679 = vmatprep.subr.mxu0 0.0
      %2680 = vmatpush1.msra.mxu0 0.0
      %2681 = vmatprep.subr.mxu0 0.0
      %2682 = vmatpush1.msra.mxu0 0.0
      %2683 = vmatprep.subr.mxu0 0.0
      %2684 = vmatpush1.msra.mxu0 0.0
      %2685 = vmatprep.subr.mxu0 0.0
      %2686 = vmatpush1.msra.mxu0 0.0
      %2687 = vmatprep.subr.mxu0 0.0
      %2688 = vmatpush1.msra.mxu0 0.0
      %2689 = vmatprep.subr.mxu0 0.0
      %2690 = vmatpush1.msra.mxu0 %v1928
      %2691 = vmatprep.subr.mxu0 0.0
      %2692 = vmatpush1.msra.mxu0 %v1927
      %2693 = vmatprep.subr.mxu0 0.0
      %2694 = vmatpush2.msra.mxu0 0.0
      %2695 = vmatprep.subr.mxu0 0.0
      %2696 = vmatpush2.msra.mxu0 0.0
      %2697 = vmatprep.subr.mxu0 0.0
      %2698 = vmatpush2.msra.mxu0 0.0
      %2699 = vmatprep.subr.mxu0 0.0
      %2700 = vmatpush2.msra.mxu0 0.0
      %2701 = vmatprep.subr.mxu0 0.0
      %2702 = vmatpush2.msra.mxu0 0.0
      %2703 = vmatprep.subr.mxu0 0.0
      %2704 = vmatpush2.msra.mxu0 0.0
      %2705 = vmatprep.subr.mxu0 0.0
      %2706 = vmatpush2.msra.mxu0 0.0
      %2707 = vmatprep.subr.mxu0 0.0
      %2708 = vmatpush2.msra.mxu0 0.0
      %2709 = vmatprep.subr.mxu0 0.0
      %2710 = vmatpush2.msra.mxu0 0.0
      %2711 = vmatprep.subr.mxu0 0.0
      %2712 = vmatpush2.msra.mxu0 0.0
      %2713 = vmatprep.subr.mxu0 0.0
      %2714 = vmatpush2.msra.mxu0 0.0
      %2715 = vmatprep.subr.mxu0 0.0
      %2716 = vmatpush2.msra.mxu0 0.0
      %2717 = vmatprep.subr.mxu0 0.0
      %2718 = vmatpush2.msra.mxu0 0.0
      %2719 = vmatprep.subr.mxu0 0.0
      %2720 = vmatpush2.msra.mxu0 0.0
      %2721 = vmatprep.subr.mxu0 0.0
      %2722 = vmatpush2.msra.mxu0 0.0
      %2723 = vmatprep.subr.mxu0 0.0
      %2724 = vmatpush2.msra.mxu0 0.0
      %2725 = vmatprep.mubr.f32.mxu0 0.0
      %2726 = vmatmul.mubr.f32.gmra.mxu0 %v2659
      %v2727 = vpop.f32.mrf.mxu0
      %v2728 = vadd.f32 0.0, %v2727
      %v2729 = vpop.f32.mrf.mxu0
      %2730 = vdwg.mxu0
      %v2731 = vsel %vm74, %v600, 0
      %2733 = vmatprep.subr.mxu0 0.0
      %2734 = vmatpush1.msra.mxu0 0.0
      %2735 = vmatprep.subr.mxu0 0.0
      %2736 = vmatpush1.msra.mxu0 0.0
      %2737 = vmatprep.subr.mxu0 0.0
      %2738 = vmatpush1.msra.mxu0 0.0
      %2739 = vmatprep.subr.mxu0 0.0
      %2740 = vmatpush1.msra.mxu0 0.0
      %2741 = vmatprep.subr.mxu0 0.0
      %2742 = vmatpush1.msra.mxu0 0.0
      %2743 = vmatprep.subr.mxu0 0.0
      %2744 = vmatpush1.msra.mxu0 0.0
      %2745 = vmatprep.subr.mxu0 0.0
      %2746 = vmatpush1.msra.mxu0 0.0
      %2747 = vmatprep.subr.mxu0 0.0
      %2748 = vmatpush1.msra.mxu0 0.0
      %2749 = vmatprep.subr.mxu0 0.0
      %2750 = vmatpush1.msra.mxu0 0.0
      %2751 = vmatprep.subr.mxu0 0.0
      %2752 = vmatpush1.msra.mxu0 0.0
      %2753 = vmatprep.subr.mxu0 0.0
      %2754 = vmatpush1.msra.mxu0 0.0
      %2755 = vmatprep.subr.mxu0 0.0
      %2756 = vmatpush1.msra.mxu0 0.0
      %2757 = vmatprep.subr.mxu0 0.0
      %2758 = vmatpush1.msra.mxu0 0.0
      %2759 = vmatprep.subr.mxu0 0.0
      %2760 = vmatpush1.msra.mxu0 0.0
      %2761 = vmatprep.subr.mxu0 0.0
      %2762 = vmatpush1.msra.mxu0 %v1930
      %2763 = vmatprep.subr.mxu0 0.0
      %2764 = vmatpush1.msra.mxu0 %v1929
      %2765 = vmatprep.subr.mxu0 0.0
      %2766 = vmatpush2.msra.mxu0 0.0
      %2767 = vmatprep.subr.mxu0 0.0
      %2768 = vmatpush2.msra.mxu0 0.0
      %2769 = vmatprep.subr.mxu0 0.0
      %2770 = vmatpush2.msra.mxu0 0.0
      %2771 = vmatprep.subr.mxu0 0.0
      %2772 = vmatpush2.msra.mxu0 0.0
      %2773 = vmatprep.subr.mxu0 0.0
      %2774 = vmatpush2.msra.mxu0 0.0
      %2775 = vmatprep.subr.mxu0 0.0
      %2776 = vmatpush2.msra.mxu0 0.0
      %2777 = vmatprep.subr.mxu0 0.0
      %2778 = vmatpush2.msra.mxu0 0.0
      %2779 = vmatprep.subr.mxu0 0.0
      %2780 = vmatpush2.msra.mxu0 0.0
      %2781 = vmatprep.subr.mxu0 0.0
      %2782 = vmatpush2.msra.mxu0 0.0
      %2783 = vmatprep.subr.mxu0 0.0
      %2784 = vmatpush2.msra.mxu0 0.0
      %2785 = vmatprep.subr.mxu0 0.0
      %2786 = vmatpush2.msra.mxu0 0.0
      %2787 = vmatprep.subr.mxu0 0.0
      %2788 = vmatpush2.msra.mxu0 0.0
      %2789 = vmatprep.subr.mxu0 0.0
      %2790 = vmatpush2.msra.mxu0 0.0
      %2791 = vmatprep.subr.mxu0 0.0
      %2792 = vmatpush2.msra.mxu0 0.0
      %2793 = vmatprep.subr.mxu0 0.0
      %2794 = vmatpush2.msra.mxu0 0.0
      %2795 = vmatprep.subr.mxu0 0.0
      %2796 = vmatpush2.msra.mxu0 0.0
      %2797 = vmatprep.mubr.f32.mxu0 0.0
      %2798 = vmatmul.mubr.f32.gmra.mxu0 %v2731
      %v2799 = vpop.f32.mrf.mxu0
      %v2800 = vadd.f32 0.0, %v2799
      %v2801 = vpop.f32.mrf.mxu0
      %2802 = vdwg.mxu0
      %v2803 = vsel %vm74, %v608, 0
      %2805 = vmatprep.subr.mxu0 0.0
      %2806 = vmatpush1.msra.mxu0 0.0
      %2807 = vmatprep.subr.mxu0 0.0
      %2808 = vmatpush1.msra.mxu0 0.0
      %2809 = vmatprep.subr.mxu0 0.0
      %2810 = vmatpush1.msra.mxu0 0.0
      %2811 = vmatprep.subr.mxu0 0.0
      %2812 = vmatpush1.msra.mxu0 0.0
      %2813 = vmatprep.subr.mxu0 0.0
      %2814 = vmatpush1.msra.mxu0 0.0
      %2815 = vmatprep.subr.mxu0 0.0
      %2816 = vmatpush1.msra.mxu0 0.0
      %2817 = vmatprep.subr.mxu0 0.0
      %2818 = vmatpush1.msra.mxu0 0.0
      %2819 = vmatprep.subr.mxu0 0.0
      %2820 = vmatpush1.msra.mxu0 0.0
      %2821 = vmatprep.subr.mxu0 0.0
      %2822 = vmatpush1.msra.mxu0 0.0
      %2823 = vmatprep.subr.mxu0 0.0
      %2824 = vmatpush1.msra.mxu0 0.0
      %2825 = vmatprep.subr.mxu0 0.0
      %2826 = vmatpush1.msra.mxu0 0.0
      %2827 = vmatprep.subr.mxu0 0.0
      %2828 = vmatpush1.msra.mxu0 0.0
      %2829 = vmatprep.subr.mxu0 0.0
      %2830 = vmatpush1.msra.mxu0 0.0
      %2831 = vmatprep.subr.mxu0 0.0
      %2832 = vmatpush1.msra.mxu0 0.0
      %2833 = vmatprep.subr.mxu0 0.0
      %2834 = vmatpush1.msra.mxu0 %v1932
      %2835 = vmatprep.subr.mxu0 0.0
      %2836 = vmatpush1.msra.mxu0 %v1931
      %2837 = vmatprep.subr.mxu0 0.0
      %2838 = vmatpush2.msra.mxu0 0.0
      %2839 = vmatprep.subr.mxu0 0.0
      %2840 = vmatpush2.msra.mxu0 0.0
      %2841 = vmatprep.subr.mxu0 0.0
      %2842 = vmatpush2.msra.mxu0 0.0
      %2843 = vmatprep.subr.mxu0 0.0
      %2844 = vmatpush2.msra.mxu0 0.0
      %2845 = vmatprep.subr.mxu0 0.0
      %2846 = vmatpush2.msra.mxu0 0.0
      %2847 = vmatprep.subr.mxu0 0.0
      %2848 = vmatpush2.msra.mxu0 0.0
      %2849 = vmatprep.subr.mxu0 0.0
      %2850 = vmatpush2.msra.mxu0 0.0
      %2851 = vmatprep.subr.mxu0 0.0
      %2852 = vmatpush2.msra.mxu0 0.0
      %2853 = vmatprep.subr.mxu0 0.0
      %2854 = vmatpush2.msra.mxu0 0.0
      %2855 = vmatprep.subr.mxu0 0.0
      %2856 = vmatpush2.msra.mxu0 0.0
      %2857 = vmatprep.subr.mxu0 0.0
      %2858 = vmatpush2.msra.mxu0 0.0
      %2859 = vmatprep.subr.mxu0 0.0
      %2860 = vmatpush2.msra.mxu0 0.0
      %2861 = vmatprep.subr.mxu0 0.0
      %2862 = vmatpush2.msra.mxu0 0.0
      %2863 = vmatprep.subr.mxu0 0.0
      %2864 = vmatpush2.msra.mxu0 0.0
      %2865 = vmatprep.subr.mxu0 0.0
      %2866 = vmatpush2.msra.mxu0 0.0
      %2867 = vmatprep.subr.mxu0 0.0
      %2868 = vmatpush2.msra.mxu0 0.0
      %2869 = vmatprep.mubr.f32.mxu0 0.0
      %2870 = vmatmul.mubr.f32.gmra.mxu0 %v2803
      %v2871 = vpop.f32.mrf.mxu0
      %v2872 = vadd.f32 0.0, %v2871
      %v2873 = vpop.f32.mrf.mxu0
      %2874 = vdwg.mxu0
      %v2875 = vsel %vm74, %v616, 0
      %2877 = vmatprep.subr.mxu0 0.0
      %2878 = vmatpush1.msra.mxu0 0.0
      %2879 = vmatprep.subr.mxu0 0.0
      %2880 = vmatpush1.msra.mxu0 0.0
      %2881 = vmatprep.subr.mxu0 0.0
      %2882 = vmatpush1.msra.mxu0 0.0
      %2883 = vmatprep.subr.mxu0 0.0
      %2884 = vmatpush1.msra.mxu0 0.0
      %2885 = vmatprep.subr.mxu0 0.0
      %2886 = vmatpush1.msra.mxu0 0.0
      %2887 = vmatprep.subr.mxu0 0.0
      %2888 = vmatpush1.msra.mxu0 0.0
      %2889 = vmatprep.subr.mxu0 0.0
      %2890 = vmatpush1.msra.mxu0 0.0
      %2891 = vmatprep.subr.mxu0 0.0
      %2892 = vmatpush1.msra.mxu0 0.0
      %2893 = vmatprep.subr.mxu0 0.0
      %2894 = vmatpush1.msra.mxu0 0.0
      %2895 = vmatprep.subr.mxu0 0.0
      %2896 = vmatpush1.msra.mxu0 0.0
      %2897 = vmatprep.subr.mxu0 0.0
      %2898 = vmatpush1.msra.mxu0 0.0
      %2899 = vmatprep.subr.mxu0 0.0
      %2900 = vmatpush1.msra.mxu0 0.0
      %2901 = vmatprep.subr.mxu0 0.0
      %2902 = vmatpush1.msra.mxu0 0.0
      %2903 = vmatprep.subr.mxu0 0.0
      %2904 = vmatpush1.msra.mxu0 0.0
      %2905 = vmatprep.subr.mxu0 0.0
      %2906 = vmatpush1.msra.mxu0 %v1934
      %2907 = vmatprep.subr.mxu0 0.0
      %2908 = vmatpush1.msra.mxu0 %v1933
      %2909 = vmatprep.subr.mxu0 0.0
      %2910 = vmatpush2.msra.mxu0 0.0
      %2911 = vmatprep.subr.mxu0 0.0
      %2912 = vmatpush2.msra.mxu0 0.0
      %2913 = vmatprep.subr.mxu0 0.0
      %2914 = vmatpush2.msra.mxu0 0.0
      %2915 = vmatprep.subr.mxu0 0.0
      %2916 = vmatpush2.msra.mxu0 0.0
      %2917 = vmatprep.subr.mxu0 0.0
      %2918 = vmatpush2.msra.mxu0 0.0
      %2919 = vmatprep.subr.mxu0 0.0
      %2920 = vmatpush2.msra.mxu0 0.0
      %2921 = vmatprep.subr.mxu0 0.0
      %2922 = vmatpush2.msra.mxu0 0.0
      %2923 = vmatprep.subr.mxu0 0.0
      %2924 = vmatpush2.msra.mxu0 0.0
      %2925 = vmatprep.subr.mxu0 0.0
      %2926 = vmatpush2.msra.mxu0 0.0
      %2927 = vmatprep.subr.mxu0 0.0
      %2928 = vmatpush2.msra.mxu0 0.0
      %2929 = vmatprep.subr.mxu0 0.0
      %2930 = vmatpush2.msra.mxu0 0.0
      %2931 = vmatprep.subr.mxu0 0.0
      %2932 = vmatpush2.msra.mxu0 0.0
      %2933 = vmatprep.subr.mxu0 0.0
      %2934 = vmatpush2.msra.mxu0 0.0
      %2935 = vmatprep.subr.mxu0 0.0
      %2936 = vmatpush2.msra.mxu0 0.0
      %2937 = vmatprep.subr.mxu0 0.0
      %2938 = vmatpush2.msra.mxu0 0.0
      %2939 = vmatprep.subr.mxu0 0.0
      %2940 = vmatpush2.msra.mxu0 0.0
      %2941 = vmatprep.mubr.f32.mxu0 0.0
      %2942 = vmatmul.mubr.f32.gmra.mxu0 %v2875
      %v2943 = vpop.f32.mrf.mxu0
      %v2944 = vadd.f32 0.0, %v2943
      %v2945 = vpop.f32.mrf.mxu0
      %2946 = vdwg.mxu0
      %v2947 = vsel %vm74, %v615, 0
      %2949 = vmatprep.subr.mxu0 0.0
      %2950 = vmatpush1.msra.mxu0 0.0
      %2951 = vmatprep.subr.mxu0 0.0
      %2952 = vmatpush1.msra.mxu0 0.0
      %2953 = vmatprep.subr.mxu0 0.0
      %2954 = vmatpush1.msra.mxu0 0.0
      %2955 = vmatprep.subr.mxu0 0.0
      %2956 = vmatpush1.msra.mxu0 0.0
      %2957 = vmatprep.subr.mxu0 0.0
      %2958 = vmatpush1.msra.mxu0 0.0
      %2959 = vmatprep.subr.mxu0 0.0
      %2960 = vmatpush1.msra.mxu0 0.0
      %2961 = vmatprep.subr.mxu0 0.0
      %2962 = vmatpush1.msra.mxu0 0.0
      %2963 = vmatprep.subr.mxu0 0.0
      %2964 = vmatpush1.msra.mxu0 0.0
      %2965 = vmatprep.subr.mxu0 0.0
      %2966 = vmatpush1.msra.mxu0 0.0
      %2967 = vmatprep.subr.mxu0 0.0
      %2968 = vmatpush1.msra.mxu0 0.0
      %2969 = vmatprep.subr.mxu0 0.0
      %2970 = vmatpush1.msra.mxu0 0.0
      %2971 = vmatprep.subr.mxu0 0.0
      %2972 = vmatpush1.msra.mxu0 0.0
      %2973 = vmatprep.subr.mxu0 0.0
      %2974 = vmatpush1.msra.mxu0 0.0
      %2975 = vmatprep.subr.mxu0 0.0
      %2976 = vmatpush1.msra.mxu0 0.0
      %2977 = vmatprep.subr.mxu0 0.0
      %2978 = vmatpush1.msra.mxu0 %v1936
      %2979 = vmatprep.subr.mxu0 0.0
      %2980 = vmatpush1.msra.mxu0 %v1935
      %2981 = vmatprep.subr.mxu0 0.0
      %2982 = vmatpush2.msra.mxu0 0.0
      %2983 = vmatprep.subr.mxu0 0.0
      %2984 = vmatpush2.msra.mxu0 0.0
      %2985 = vmatprep.subr.mxu0 0.0
      %2986 = vmatpush2.msra.mxu0 0.0
      %2987 = vmatprep.subr.mxu0 0.0
      %2988 = vmatpush2.msra.mxu0 0.0
      %2989 = vmatprep.subr.mxu0 0.0
      %2990 = vmatpush2.msra.mxu0 0.0
      %2991 = vmatprep.subr.mxu0 0.0
      %2992 = vmatpush2.msra.mxu0 0.0
      %2993 = vmatprep.subr.mxu0 0.0
      %2994 = vmatpush2.msra.mxu0 0.0
      %2995 = vmatprep.subr.mxu0 0.0
      %2996 = vmatpush2.msra.mxu0 0.0
      %2997 = vmatprep.subr.mxu0 0.0
      %2998 = vmatpush2.msra.mxu0 0.0
      %2999 = vmatprep.subr.mxu0 0.0
      %3000 = vmatpush2.msra.mxu0 0.0
      %3001 = vmatprep.subr.mxu0 0.0
      %3002 = vmatpush2.msra.mxu0 0.0
      %3003 = vmatprep.subr.mxu0 0.0
      %3004 = vmatpush2.msra.mxu0 0.0
      %3005 = vmatprep.subr.mxu0 0.0
      %3006 = vmatpush2.msra.mxu0 0.0
      %3007 = vmatprep.subr.mxu0 0.0
      %3008 = vmatpush2.msra.mxu0 0.0
      %3009 = vmatprep.subr.mxu0 0.0
      %3010 = vmatpush2.msra.mxu0 0.0
      %3011 = vmatprep.subr.mxu0 0.0
      %3012 = vmatpush2.msra.mxu0 0.0
      %3013 = vmatprep.mubr.f32.mxu0 0.0
      %3014 = vmatmul.mubr.f32.gmra.mxu0 %v2947
      %v3015 = vpop.f32.mrf.mxu0
      %v3016 = vadd.f32 0.0, %v3015
      %v3017 = vpop.f32.mrf.mxu0
      %3018 = vdwg.mxu0
      %v3019 = vsel %vm74, %v617, 0
      %3021 = vmatprep.subr.mxu0 0.0
      %3022 = vmatpush1.msra.mxu0 0.0
      %3023 = vmatprep.subr.mxu0 0.0
      %3024 = vmatpush1.msra.mxu0 0.0
      %3025 = vmatprep.subr.mxu0 0.0
      %3026 = vmatpush1.msra.mxu0 0.0
      %3027 = vmatprep.subr.mxu0 0.0
      %3028 = vmatpush1.msra.mxu0 0.0
      %3029 = vmatprep.subr.mxu0 0.0
      %3030 = vmatpush1.msra.mxu0 0.0
      %3031 = vmatprep.subr.mxu0 0.0
      %3032 = vmatpush1.msra.mxu0 0.0
      %3033 = vmatprep.subr.mxu0 0.0
      %3034 = vmatpush1.msra.mxu0 0.0
      %3035 = vmatprep.subr.mxu0 0.0
      %3036 = vmatpush1.msra.mxu0 0.0
      %3037 = vmatprep.subr.mxu0 0.0
      %3038 = vmatpush1.msra.mxu0 0.0
      %3039 = vmatprep.subr.mxu0 0.0
      %3040 = vmatpush1.msra.mxu0 0.0
      %3041 = vmatprep.subr.mxu0 0.0
      %3042 = vmatpush1.msra.mxu0 0.0
      %3043 = vmatprep.subr.mxu0 0.0
      %3044 = vmatpush1.msra.mxu0 0.0
      %3045 = vmatprep.subr.mxu0 0.0
      %3046 = vmatpush1.msra.mxu0 0.0
      %3047 = vmatprep.subr.mxu0 0.0
      %3048 = vmatpush1.msra.mxu0 0.0
      %3049 = vmatprep.subr.mxu0 0.0
      %3050 = vmatpush1.msra.mxu0 %v1938
      %3051 = vmatprep.subr.mxu0 0.0
      %3052 = vmatpush1.msra.mxu0 %v1937
      %3053 = vmatprep.subr.mxu0 0.0
      %3054 = vmatpush2.msra.mxu0 0.0
      %3055 = vmatprep.subr.mxu0 0.0
      %3056 = vmatpush2.msra.mxu0 0.0
      %3057 = vmatprep.subr.mxu0 0.0
      %3058 = vmatpush2.msra.mxu0 0.0
      %3059 = vmatprep.subr.mxu0 0.0
      %3060 = vmatpush2.msra.mxu0 0.0
      %3061 = vmatprep.subr.mxu0 0.0
      %3062 = vmatpush2.msra.mxu0 0.0
      %3063 = vmatprep.subr.mxu0 0.0
      %3064 = vmatpush2.msra.mxu0 0.0
      %3065 = vmatprep.subr.mxu0 0.0
      %3066 = vmatpush2.msra.mxu0 0.0
      %3067 = vmatprep.subr.mxu0 0.0
      %3068 = vmatpush2.msra.mxu0 0.0
      %3069 = vmatprep.subr.mxu0 0.0
      %3070 = vmatpush2.msra.mxu0 0.0
      %3071 = vmatprep.subr.mxu0 0.0
      %3072 = vmatpush2.msra.mxu0 0.0
      %3073 = vmatprep.subr.mxu0 0.0
      %3074 = vmatpush2.msra.mxu0 0.0
      %3075 = vmatprep.subr.mxu0 0.0
      %3076 = vmatpush2.msra.mxu0 0.0
      %3077 = vmatprep.subr.mxu0 0.0
      %3078 = vmatpush2.msra.mxu0 0.0
      %3079 = vmatprep.subr.mxu0 0.0
      %3080 = vmatpush2.msra.mxu0 0.0
      %3081 = vmatprep.subr.mxu0 0.0
      %3082 = vmatpush2.msra.mxu0 0.0
      %3083 = vmatprep.subr.mxu0 0.0
      %3084 = vmatpush2.msra.mxu0 0.0
      %3085 = vmatprep.mubr.f32.mxu0 0.0
      %3086 = vmatmul.mubr.f32.gmra.mxu0 %v3019
      %v3087 = vpop.f32.mrf.mxu0
      %v3088 = vadd.f32 0.0, %v3087
      %v3089 = vpop.f32.mrf.mxu0
      %3090 = vdwg.mxu0
      %v3091 = vsel %vm1836, %v2008, 0.0
      %v3092 = vsel %vm1836, %v2584, 0.0
      %v3093 = vadd.f32 %v3091, %v3092
      %v3094 = vsel %vm1836, %v2080, 0.0
      %v3095 = vsel %vm1836, %v2656, 0.0
      %v3096 = vadd.f32 %v3094, %v3095
      %v3097 = vsel %vm1836, %v2152, 0.0
      %v3098 = vsel %vm1836, %v2728, 0.0
      %v3099 = vadd.f32 %v3097, %v3098
      %v3100 = vsel %vm1836, %v2224, 0.0
      %v3101 = vsel %vm1836, %v2800, 0.0
      %v3102 = vadd.f32 %v3100, %v3101
      %v3103 = vsel %vm1836, %v2296, 0.0
      %v3104 = vsel %vm1836, %v2872, 0.0
      %v3105 = vadd.f32 %v3103, %v3104
      %v3106 = vsel %vm1836, %v2368, 0.0
      %v3107 = vsel %vm1836, %v2944, 0.0
      %v3108 = vadd.f32 %v3106, %v3107
      %v3109 = vsel %vm1836, %v2440, 0.0
      %v3110 = vsel %vm1836, %v3016, 0.0
      %v3111 = vadd.f32 %v3109, %v3110
      %v3112 = vsel %vm1836, %v2512, 0.0
      %v3113 = vsel %vm1836, %v3088, 0.0
      %v3114 = vadd.f32 %v3112, %v3113
      %v3123 = vcombine.low %v3093, %v3096
      %v3124 = vcombine.low %v3099, %v3102
      %v3126 = vunpack.c.l.s4 1983009808
      %v3127 = vunpack.c.0.s8 %v3126
      %v3128 = vlaneseq
      %v3129 = vshrl.u32 %v3128, 7
      %v3130 = vsub.s32 %v3127, %v3129
      %v3131 = vrot.slane %v3123, %v3130
      %v3133 = vunpack.c.l.s4 1983009808
      %v3134 = vunpack.c.0.s8 %v3133
      %v3135 = vlaneseq
      %v3136 = vshrl.u32 %v3135, 7
      %v3137 = vsub.s32 %v3134, %v3136
      %v3138 = vrot.slane %v3124, %v3137
      %v3139 = vcombine.low %v3131, %v3138
      %v3140 = vcombine.low %v3105, %v3108
      %v3141 = vcombine.low %v3111, %v3114
      %v3143 = vunpack.c.l.s4 1983009808
      %v3144 = vunpack.c.0.s8 %v3143
      %v3145 = vlaneseq
      %v3146 = vshrl.u32 %v3145, 7
      %v3147 = vsub.s32 %v3144, %v3146
      %v3148 = vrot.slane %v3140, %v3147
      %v3150 = vunpack.c.l.s4 1983009808
      %v3151 = vunpack.c.0.s8 %v3150
      %v3152 = vlaneseq
      %v3153 = vshrl.u32 %v3152, 7
      %v3154 = vsub.s32 %v3151, %v3153
      %v3155 = vrot.slane %v3141, %v3154
      %v3156 = vcombine.low %v3148, %v3155
      %v3159 = vadd.f32 %v1905, %v3139
      %v3160 = vadd.f32 %v1906, %v3156
      %v3161 = vxor.u32 %v3159, 2147483648
      %v3162 = vxor.u32 %v3160, 2147483648
      %v3163 = vmul.f32 %v3161, 1.442695
      %v3164 = vpow.pop %v3163
      %v3165 = vmul.f32 %v3162, 1.442695
      %v3166 = vpow.pop %v3165
      %v3167 = vadd.f32 %v3164, 1.0
      %v3168 = vadd.f32 %v3166, 1.0
      %v3169 = vrcp.pop %v3167
      %v3170 = vmul.f32 1.0, %v3169
      %v3171 = vrcp.pop %v3168
      %v3172 = vmul.f32 1.0, %v3171
      %v3173 = vmul.f32 %v3170, %v87
      %v3174 = vmul.f32 %v3172, %v88
      %3175 = vmatprep.subr.mxu0 0.0
      %3176 = vmatpush1.msra.mxu0 0.0
      %3177 = vmatprep.subr.mxu0 0.0
      %3178 = vmatpush1.msra.mxu0 0.0
      %3179 = vmatprep.subr.mxu0 0.0
      %3180 = vmatpush1.msra.mxu0 0.0
      %3181 = vmatprep.subr.mxu0 0.0
      %3182 = vmatpush1.msra.mxu0 0.0
      %3183 = vmatprep.subr.mxu0 0.0
      %3184 = vmatpush1.msra.mxu0 0.0
      %3185 = vmatprep.subr.mxu0 0.0
      %3186 = vmatpush1.msra.mxu0 0.0
      %3187 = vmatprep.subr.mxu0 0.0
      %3188 = vmatpush1.msra.mxu0 0.0
      %3189 = vmatprep.subr.mxu0 0.0
      %3190 = vmatpush1.msra.mxu0 0.0
      %3191 = vmatprep.subr.mxu0 0.0
      %3192 = vmatpush1.msra.mxu0 0.0
      %3193 = vmatprep.subr.mxu0 0.0
      %3194 = vmatpush1.msra.mxu0 0.0
      %3195 = vmatprep.subr.mxu0 0.0
      %3196 = vmatpush1.msra.mxu0 0.0
      %3197 = vmatprep.subr.mxu0 0.0
      %3198 = vmatpush1.msra.mxu0 0.0
      %3199 = vmatprep.subr.mxu0 0.0
      %3200 = vmatpush1.msra.mxu0 0.0
      %3201 = vmatprep.subr.mxu0 0.0
      %3202 = vmatpush1.msra.mxu0 0.0
      %3203 = vmatprep.subr.mxu0 0.0
      %3204 = vmatpush1.msra.mxu0 %v3174
      %3205 = vmatprep.subr.mxu0 0.0
      %3206 = vmatpush1.msra.mxu0 %v3173
      %3207 = vmatprep.subr.mxu0 0.0
      %3208 = vmatpush2.msra.mxu0 0.0
      %3209 = vmatprep.subr.mxu0 0.0
      %3210 = vmatpush2.msra.mxu0 0.0
      %3211 = vmatprep.subr.mxu0 0.0
      %3212 = vmatpush2.msra.mxu0 0.0
      %3213 = vmatprep.subr.mxu0 0.0
      %3214 = vmatpush2.msra.mxu0 0.0
      %3215 = vmatprep.subr.mxu0 0.0
      %3216 = vmatpush2.msra.mxu0 0.0
      %3217 = vmatprep.subr.mxu0 0.0
      %3218 = vmatpush2.msra.mxu0 0.0
      %3219 = vmatprep.subr.mxu0 0.0
      %3220 = vmatpush2.msra.mxu0 0.0
      %3221 = vmatprep.subr.mxu0 0.0
      %3222 = vmatpush2.msra.mxu0 0.0
      %3223 = vmatprep.subr.mxu0 0.0
      %3224 = vmatpush2.msra.mxu0 0.0
      %3225 = vmatprep.subr.mxu0 0.0
      %3226 = vmatpush2.msra.mxu0 0.0
      %3227 = vmatprep.subr.mxu0 0.0
      %3228 = vmatpush2.msra.mxu0 0.0
      %3229 = vmatprep.subr.mxu0 0.0
      %3230 = vmatpush2.msra.mxu0 0.0
      %3231 = vmatprep.subr.mxu0 0.0
      %3232 = vmatpush2.msra.mxu0 0.0
      %3233 = vmatprep.subr.mxu0 0.0
      %3234 = vmatpush2.msra.mxu0 0.0
      %3235 = vmatprep.subr.mxu0 0.0
      %3236 = vmatpush2.msra.mxu0 0.0
      %3237 = vmatprep.subr.mxu0 0.0
      %3238 = vmatpush2.msra.mxu0 0.0
      %3239 = vmatprep.mubr.f32.mxu0 0.0
      %3240 = vmatmul.mubr.f32.gmra.mxu0 %v293
      %v3241 = vpop.f32.mrf.mxu0
      %v3242 = vadd.f32 0.0, %v3241
      %v3243 = vpop.f32.mrf.mxu0
      %3244 = vmatprep.mubr.f32.mxu0 0.0
      %3245 = vmatmul.mubr.f32.gmra.mxu0 %v296
      %v3246 = vpop.f32.mrf.mxu0
      %v3247 = vadd.f32 0.0, %v3246
      %v3248 = vpop.f32.mrf.mxu0
      %3249 = vmatprep.mubr.f32.mxu0 0.0
      %3250 = vmatmul.mubr.f32.gmra.mxu0 %v299
      %v3251 = vpop.f32.mrf.mxu0
      %v3252 = vadd.f32 0.0, %v3251
      %v3253 = vpop.f32.mrf.mxu0
      %3254 = vmatprep.mubr.f32.mxu0 0.0
      %3255 = vmatmul.mubr.f32.gmra.mxu0 %v302
      %v3256 = vpop.f32.mrf.mxu0
      %v3257 = vadd.f32 0.0, %v3256
      %v3258 = vpop.f32.mrf.mxu0
      %3259 = vdwg.mxu0
      %v3260 = vld [vmem:[#allocation6] sm:$0xff]
      %v3261 = vld [vmem:[#allocation6 + $0x8] sm:$0xff]
      %v3262 = vld [vmem:[%s5] sm:$0x3]
      %v3263 = vld [vmem:[%s5 + $0x2] sm:$0x3]
      %v3264 = vld [vmem:[%s5 + $0x4] sm:$0x3]
      %v3265 = vld [vmem:[%s5 + $0x6] sm:$0x3]
      %v3266 = vld [vmem:[%s5 + $0x8] sm:$0x3]
      %v3267 = vld [vmem:[%s5 + $0xa] sm:$0x3]
      %v3268 = vld [vmem:[%s5 + $0xc] sm:$0x3]
      %v3269 = vld [vmem:[%s5 + $0xe] sm:$0x3]
      %v3270 = vld [vmem:[%s5 + $0x10] sm:$0x3]
      %v3271 = vld [vmem:[%s5 + $0x12] sm:$0x3]
      %v3272 = vld [vmem:[%s5 + $0x14] sm:$0x3]
      %v3273 = vld [vmem:[%s5 + $0x16] sm:$0x3]
      %v3274 = vld [vmem:[%s5 + $0x18] sm:$0x3]
      %v3275 = vld [vmem:[%s5 + $0x1a] sm:$0x3]
      %v3276 = vld [vmem:[%s5 + $0x1c] sm:$0x3]
      %v3277 = vld [vmem:[%s5 + $0x1e] sm:$0x3]
      %v3279 = vsel %vm184, %v3262, 0
      %3281 = vmatprep.subr.mxu0 0.0
      %3282 = vmatpush1.msra.mxu0 0.0
      %3283 = vmatprep.subr.mxu0 0.0
      %3284 = vmatpush1.msra.mxu0 0.0
      %3285 = vmatprep.subr.mxu0 0.0
      %3286 = vmatpush1.msra.mxu0 0.0
      %3287 = vmatprep.subr.mxu0 0.0
      %3288 = vmatpush1.msra.mxu0 0.0
      %3289 = vmatprep.subr.mxu0 0.0
      %3290 = vmatpush1.msra.mxu0 0.0
      %3291 = vmatprep.subr.mxu0 0.0
      %3292 = vmatpush1.msra.mxu0 0.0
      %3293 = vmatprep.subr.mxu0 0.0
      %3294 = vmatpush1.msra.mxu0 0.0
      %3295 = vmatprep.subr.mxu0 0.0
      %3296 = vmatpush1.msra.mxu0 0.0
      %3297 = vmatprep.subr.mxu0 0.0
      %3298 = vmatpush1.msra.mxu0 0.0
      %3299 = vmatprep.subr.mxu0 0.0
      %3300 = vmatpush1.msra.mxu0 0.0
      %3301 = vmatprep.subr.mxu0 0.0
      %3302 = vmatpush1.msra.mxu0 0.0
      %3303 = vmatprep.subr.mxu0 0.0
      %3304 = vmatpush1.msra.mxu0 0.0
      %3305 = vmatprep.subr.mxu0 0.0
      %3306 = vmatpush1.msra.mxu0 0.0
      %3307 = vmatprep.subr.mxu0 0.0
      %3308 = vmatpush1.msra.mxu0 0.0
      %3309 = vmatprep.subr.mxu0 0.0
      %3310 = vmatpush1.msra.mxu0 0.0
      %3311 = vmatprep.subr.mxu0 0.0
      %3312 = vmatpush1.msra.mxu0 %v3279
      %3313 = vmatprep.subr.mxu0 0.0
      %3314 = vmatpush2.msra.mxu0 0.0
      %3315 = vmatprep.subr.mxu0 0.0
      %3316 = vmatpush2.msra.mxu0 0.0
      %3317 = vmatprep.subr.mxu0 0.0
      %3318 = vmatpush2.msra.mxu0 0.0
      %3319 = vmatprep.subr.mxu0 0.0
      %3320 = vmatpush2.msra.mxu0 0.0
      %3321 = vmatprep.subr.mxu0 0.0
      %3322 = vmatpush2.msra.mxu0 0.0
      %3323 = vmatprep.subr.mxu0 0.0
      %3324 = vmatpush2.msra.mxu0 0.0
      %3325 = vmatprep.subr.mxu0 0.0
      %3326 = vmatpush2.msra.mxu0 0.0
      %3327 = vmatprep.subr.mxu0 0.0
      %3328 = vmatpush2.msra.mxu0 0.0
      %3329 = vmatprep.subr.mxu0 0.0
      %3330 = vmatpush2.msra.mxu0 0.0
      %3331 = vmatprep.subr.mxu0 0.0
      %3332 = vmatpush2.msra.mxu0 0.0
      %3333 = vmatprep.subr.mxu0 0.0
      %3334 = vmatpush2.msra.mxu0 0.0
      %3335 = vmatprep.subr.mxu0 0.0
      %3336 = vmatpush2.msra.mxu0 0.0
      %3337 = vmatprep.subr.mxu0 0.0
      %3338 = vmatpush2.msra.mxu0 0.0
      %3339 = vmatprep.subr.mxu0 0.0
      %3340 = vmatpush2.msra.mxu0 0.0
      %3341 = vmatprep.subr.mxu0 0.0
      %3342 = vmatpush2.msra.mxu0 0.0
      %3343 = vmatprep.subr.mxu0 0.0
      %3344 = vmatpush2.msra.mxu0 0.0
      %3345 = vmatprep.mubr.f32.mxu0 0.0
      %3346 = vmatmul.mubr.f32.gmra.mxu0 %v636
      %v3347 = vpop.f32.mrf.mxu0
      %v3348 = vadd.f32 0.0, %v3347
      %v3349 = vpop.f32.mrf.mxu0
      %3350 = vdwg.mxu0
      %v3352 = vsel %vm184, %v3263, 0
      %3354 = vmatprep.subr.mxu0 0.0
      %3355 = vmatpush1.msra.mxu0 0.0
      %3356 = vmatprep.subr.mxu0 0.0
      %3357 = vmatpush1.msra.mxu0 0.0
      %3358 = vmatprep.subr.mxu0 0.0
      %3359 = vmatpush1.msra.mxu0 0.0
      %3360 = vmatprep.subr.mxu0 0.0
      %3361 = vmatpush1.msra.mxu0 0.0
      %3362 = vmatprep.subr.mxu0 0.0
      %3363 = vmatpush1.msra.mxu0 0.0
      %3364 = vmatprep.subr.mxu0 0.0
      %3365 = vmatpush1.msra.mxu0 0.0
      %3366 = vmatprep.subr.mxu0 0.0
      %3367 = vmatpush1.msra.mxu0 0.0
      %3368 = vmatprep.subr.mxu0 0.0
      %3369 = vmatpush1.msra.mxu0 0.0
      %3370 = vmatprep.subr.mxu0 0.0
      %3371 = vmatpush1.msra.mxu0 0.0
      %3372 = vmatprep.subr.mxu0 0.0
      %3373 = vmatpush1.msra.mxu0 0.0
      %3374 = vmatprep.subr.mxu0 0.0
      %3375 = vmatpush1.msra.mxu0 0.0
      %3376 = vmatprep.subr.mxu0 0.0
      %3377 = vmatpush1.msra.mxu0 0.0
      %3378 = vmatprep.subr.mxu0 0.0
      %3379 = vmatpush1.msra.mxu0 0.0
      %3380 = vmatprep.subr.mxu0 0.0
      %3381 = vmatpush1.msra.mxu0 0.0
      %3382 = vmatprep.subr.mxu0 0.0
      %3383 = vmatpush1.msra.mxu0 0.0
      %3384 = vmatprep.subr.mxu0 0.0
      %3385 = vmatpush1.msra.mxu0 %v3352
      %3386 = vmatprep.subr.mxu0 0.0
      %3387 = vmatpush2.msra.mxu0 0.0
      %3388 = vmatprep.subr.mxu0 0.0
      %3389 = vmatpush2.msra.mxu0 0.0
      %3390 = vmatprep.subr.mxu0 0.0
      %3391 = vmatpush2.msra.mxu0 0.0
      %3392 = vmatprep.subr.mxu0 0.0
      %3393 = vmatpush2.msra.mxu0 0.0
      %3394 = vmatprep.subr.mxu0 0.0
      %3395 = vmatpush2.msra.mxu0 0.0
      %3396 = vmatprep.subr.mxu0 0.0
      %3397 = vmatpush2.msra.mxu0 0.0
      %3398 = vmatprep.subr.mxu0 0.0
      %3399 = vmatpush2.msra.mxu0 0.0
      %3400 = vmatprep.subr.mxu0 0.0
      %3401 = vmatpush2.msra.mxu0 0.0
      %3402 = vmatprep.subr.mxu0 0.0
      %3403 = vmatpush2.msra.mxu0 0.0
      %3404 = vmatprep.subr.mxu0 0.0
      %3405 = vmatpush2.msra.mxu0 0.0
      %3406 = vmatprep.subr.mxu0 0.0
      %3407 = vmatpush2.msra.mxu0 0.0
      %3408 = vmatprep.subr.mxu0 0.0
      %3409 = vmatpush2.msra.mxu0 0.0
      %3410 = vmatprep.subr.mxu0 0.0
      %3411 = vmatpush2.msra.mxu0 0.0
      %3412 = vmatprep.subr.mxu0 0.0
      %3413 = vmatpush2.msra.mxu0 0.0
      %3414 = vmatprep.subr.mxu0 0.0
      %3415 = vmatpush2.msra.mxu0 0.0
      %3416 = vmatprep.subr.mxu0 0.0
      %3417 = vmatpush2.msra.mxu0 0.0
      %3418 = vmatprep.mubr.f32.mxu0 0.0
      %3419 = vmatmul.mubr.f32.gmra.mxu0 %v711
      %v3420 = vpop.f32.mrf.mxu0
      %v3421 = vadd.f32 0.0, %v3420
      %v3422 = vpop.f32.mrf.mxu0
      %3423 = vdwg.mxu0
      %v3425 = vsel %vm184, %v3264, 0
      %3427 = vmatprep.subr.mxu0 0.0
      %3428 = vmatpush1.msra.mxu0 0.0
      %3429 = vmatprep.subr.mxu0 0.0
      %3430 = vmatpush1.msra.mxu0 0.0
      %3431 = vmatprep.subr.mxu0 0.0
      %3432 = vmatpush1.msra.mxu0 0.0
      %3433 = vmatprep.subr.mxu0 0.0
      %3434 = vmatpush1.msra.mxu0 0.0
      %3435 = vmatprep.subr.mxu0 0.0
      %3436 = vmatpush1.msra.mxu0 0.0
      %3437 = vmatprep.subr.mxu0 0.0
      %3438 = vmatpush1.msra.mxu0 0.0
      %3439 = vmatprep.subr.mxu0 0.0
      %3440 = vmatpush1.msra.mxu0 0.0
      %3441 = vmatprep.subr.mxu0 0.0
      %3442 = vmatpush1.msra.mxu0 0.0
      %3443 = vmatprep.subr.mxu0 0.0
      %3444 = vmatpush1.msra.mxu0 0.0
      %3445 = vmatprep.subr.mxu0 0.0
      %3446 = vmatpush1.msra.mxu0 0.0
      %3447 = vmatprep.subr.mxu0 0.0
      %3448 = vmatpush1.msra.mxu0 0.0
      %3449 = vmatprep.subr.mxu0 0.0
      %3450 = vmatpush1.msra.mxu0 0.0
      %3451 = vmatprep.subr.mxu0 0.0
      %3452 = vmatpush1.msra.mxu0 0.0
      %3453 = vmatprep.subr.mxu0 0.0
      %3454 = vmatpush1.msra.mxu0 0.0
      %3455 = vmatprep.subr.mxu0 0.0
      %3456 = vmatpush1.msra.mxu0 0.0
      %3457 = vmatprep.subr.mxu0 0.0
      %3458 = vmatpush1.msra.mxu0 %v3425
      %3459 = vmatprep.subr.mxu0 0.0
      %3460 = vmatpush2.msra.mxu0 0.0
      %3461 = vmatprep.subr.mxu0 0.0
      %3462 = vmatpush2.msra.mxu0 0.0
      %3463 = vmatprep.subr.mxu0 0.0
      %3464 = vmatpush2.msra.mxu0 0.0
      %3465 = vmatprep.subr.mxu0 0.0
      %3466 = vmatpush2.msra.mxu0 0.0
      %3467 = vmatprep.subr.mxu0 0.0
      %3468 = vmatpush2.msra.mxu0 0.0
      %3469 = vmatprep.subr.mxu0 0.0
      %3470 = vmatpush2.msra.mxu0 0.0
      %3471 = vmatprep.subr.mxu0 0.0
      %3472 = vmatpush2.msra.mxu0 0.0
      %3473 = vmatprep.subr.mxu0 0.0
      %3474 = vmatpush2.msra.mxu0 0.0
      %3475 = vmatprep.subr.mxu0 0.0
      %3476 = vmatpush2.msra.mxu0 0.0
      %3477 = vmatprep.subr.mxu0 0.0
      %3478 = vmatpush2.msra.mxu0 0.0
      %3479 = vmatprep.subr.mxu0 0.0
      %3480 = vmatpush2.msra.mxu0 0.0
      %3481 = vmatprep.subr.mxu0 0.0
      %3482 = vmatpush2.msra.mxu0 0.0
      %3483 = vmatprep.subr.mxu0 0.0
      %3484 = vmatpush2.msra.mxu0 0.0
      %3485 = vmatprep.subr.mxu0 0.0
      %3486 = vmatpush2.msra.mxu0 0.0
      %3487 = vmatprep.subr.mxu0 0.0
      %3488 = vmatpush2.msra.mxu0 0.0
      %3489 = vmatprep.subr.mxu0 0.0
      %3490 = vmatpush2.msra.mxu0 0.0
      %3491 = vmatprep.mubr.f32.mxu0 0.0
      %3492 = vmatmul.mubr.f32.gmra.mxu0 %v786
      %v3493 = vpop.f32.mrf.mxu0
      %v3494 = vadd.f32 0.0, %v3493
      %v3495 = vpop.f32.mrf.mxu0
      %3496 = vdwg.mxu0
      %v3498 = vsel %vm184, %v3265, 0
      %3500 = vmatprep.subr.mxu0 0.0
      %3501 = vmatpush1.msra.mxu0 0.0
      %3502 = vmatprep.subr.mxu0 0.0
      %3503 = vmatpush1.msra.mxu0 0.0
      %3504 = vmatprep.subr.mxu0 0.0
      %3505 = vmatpush1.msra.mxu0 0.0
      %3506 = vmatprep.subr.mxu0 0.0
      %3507 = vmatpush1.msra.mxu0 0.0
      %3508 = vmatprep.subr.mxu0 0.0
      %3509 = vmatpush1.msra.mxu0 0.0
      %3510 = vmatprep.subr.mxu0 0.0
      %3511 = vmatpush1.msra.mxu0 0.0
      %3512 = vmatprep.subr.mxu0 0.0
      %3513 = vmatpush1.msra.mxu0 0.0
      %3514 = vmatprep.subr.mxu0 0.0
      %3515 = vmatpush1.msra.mxu0 0.0
      %3516 = vmatprep.subr.mxu0 0.0
      %3517 = vmatpush1.msra.mxu0 0.0
      %3518 = vmatprep.subr.mxu0 0.0
      %3519 = vmatpush1.msra.mxu0 0.0
      %3520 = vmatprep.subr.mxu0 0.0
      %3521 = vmatpush1.msra.mxu0 0.0
      %3522 = vmatprep.subr.mxu0 0.0
      %3523 = vmatpush1.msra.mxu0 0.0
      %3524 = vmatprep.subr.mxu0 0.0
      %3525 = vmatpush1.msra.mxu0 0.0
      %3526 = vmatprep.subr.mxu0 0.0
      %3527 = vmatpush1.msra.mxu0 0.0
      %3528 = vmatprep.subr.mxu0 0.0
      %3529 = vmatpush1.msra.mxu0 0.0
      %3530 = vmatprep.subr.mxu0 0.0
      %3531 = vmatpush1.msra.mxu0 %v3498
      %3532 = vmatprep.subr.mxu0 0.0
      %3533 = vmatpush2.msra.mxu0 0.0
      %3534 = vmatprep.subr.mxu0 0.0
      %3535 = vmatpush2.msra.mxu0 0.0
      %3536 = vmatprep.subr.mxu0 0.0
      %3537 = vmatpush2.msra.mxu0 0.0
      %3538 = vmatprep.subr.mxu0 0.0
      %3539 = vmatpush2.msra.mxu0 0.0
      %3540 = vmatprep.subr.mxu0 0.0
      %3541 = vmatpush2.msra.mxu0 0.0
      %3542 = vmatprep.subr.mxu0 0.0
      %3543 = vmatpush2.msra.mxu0 0.0
      %3544 = vmatprep.subr.mxu0 0.0
      %3545 = vmatpush2.msra.mxu0 0.0
      %3546 = vmatprep.subr.mxu0 0.0
      %3547 = vmatpush2.msra.mxu0 0.0
      %3548 = vmatprep.subr.mxu0 0.0
      %3549 = vmatpush2.msra.mxu0 0.0
      %3550 = vmatprep.subr.mxu0 0.0
      %3551 = vmatpush2.msra.mxu0 0.0
      %3552 = vmatprep.subr.mxu0 0.0
      %3553 = vmatpush2.msra.mxu0 0.0
      %3554 = vmatprep.subr.mxu0 0.0
      %3555 = vmatpush2.msra.mxu0 0.0
      %3556 = vmatprep.subr.mxu0 0.0
      %3557 = vmatpush2.msra.mxu0 0.0
      %3558 = vmatprep.subr.mxu0 0.0
      %3559 = vmatpush2.msra.mxu0 0.0
      %3560 = vmatprep.subr.mxu0 0.0
      %3561 = vmatpush2.msra.mxu0 0.0
      %3562 = vmatprep.subr.mxu0 0.0
      %3563 = vmatpush2.msra.mxu0 0.0
      %3564 = vmatprep.mubr.f32.mxu0 0.0
      %3565 = vmatmul.mubr.f32.gmra.mxu0 %v861
      %v3566 = vpop.f32.mrf.mxu0
      %v3567 = vadd.f32 0.0, %v3566
      %v3568 = vpop.f32.mrf.mxu0
      %3569 = vdwg.mxu0
      %v3571 = vsel %vm184, %v3266, 0
      %3573 = vmatprep.subr.mxu0 0.0
      %3574 = vmatpush1.msra.mxu0 0.0
      %3575 = vmatprep.subr.mxu0 0.0
      %3576 = vmatpush1.msra.mxu0 0.0
      %3577 = vmatprep.subr.mxu0 0.0
      %3578 = vmatpush1.msra.mxu0 0.0
      %3579 = vmatprep.subr.mxu0 0.0
      %3580 = vmatpush1.msra.mxu0 0.0
      %3581 = vmatprep.subr.mxu0 0.0
      %3582 = vmatpush1.msra.mxu0 0.0
      %3583 = vmatprep.subr.mxu0 0.0
      %3584 = vmatpush1.msra.mxu0 0.0
      %3585 = vmatprep.subr.mxu0 0.0
      %3586 = vmatpush1.msra.mxu0 0.0
      %3587 = vmatprep.subr.mxu0 0.0
      %3588 = vmatpush1.msra.mxu0 0.0
      %3589 = vmatprep.subr.mxu0 0.0
      %3590 = vmatpush1.msra.mxu0 0.0
      %3591 = vmatprep.subr.mxu0 0.0
      %3592 = vmatpush1.msra.mxu0 0.0
      %3593 = vmatprep.subr.mxu0 0.0
      %3594 = vmatpush1.msra.mxu0 0.0
      %3595 = vmatprep.subr.mxu0 0.0
      %3596 = vmatpush1.msra.mxu0 0.0
      %3597 = vmatprep.subr.mxu0 0.0
      %3598 = vmatpush1.msra.mxu0 0.0
      %3599 = vmatprep.subr.mxu0 0.0
      %3600 = vmatpush1.msra.mxu0 0.0
      %3601 = vmatprep.subr.mxu0 0.0
      %3602 = vmatpush1.msra.mxu0 0.0
      %3603 = vmatprep.subr.mxu0 0.0
      %3604 = vmatpush1.msra.mxu0 %v3571
      %3605 = vmatprep.subr.mxu0 0.0
      %3606 = vmatpush2.msra.mxu0 0.0
      %3607 = vmatprep.subr.mxu0 0.0
      %3608 = vmatpush2.msra.mxu0 0.0
      %3609 = vmatprep.subr.mxu0 0.0
      %3610 = vmatpush2.msra.mxu0 0.0
      %3611 = vmatprep.subr.mxu0 0.0
      %3612 = vmatpush2.msra.mxu0 0.0
      %3613 = vmatprep.subr.mxu0 0.0
      %3614 = vmatpush2.msra.mxu0 0.0
      %3615 = vmatprep.subr.mxu0 0.0
      %3616 = vmatpush2.msra.mxu0 0.0
      %3617 = vmatprep.subr.mxu0 0.0
      %3618 = vmatpush2.msra.mxu0 0.0
      %3619 = vmatprep.subr.mxu0 0.0
      %3620 = vmatpush2.msra.mxu0 0.0
      %3621 = vmatprep.subr.mxu0 0.0
      %3622 = vmatpush2.msra.mxu0 0.0
      %3623 = vmatprep.subr.mxu0 0.0
      %3624 = vmatpush2.msra.mxu0 0.0
      %3625 = vmatprep.subr.mxu0 0.0
      %3626 = vmatpush2.msra.mxu0 0.0
      %3627 = vmatprep.subr.mxu0 0.0
      %3628 = vmatpush2.msra.mxu0 0.0
      %3629 = vmatprep.subr.mxu0 0.0
      %3630 = vmatpush2.msra.mxu0 0.0
      %3631 = vmatprep.subr.mxu0 0.0
      %3632 = vmatpush2.msra.mxu0 0.0
      %3633 = vmatprep.subr.mxu0 0.0
      %3634 = vmatpush2.msra.mxu0 0.0
      %3635 = vmatprep.subr.mxu0 0.0
      %3636 = vmatpush2.msra.mxu0 0.0
      %3637 = vmatprep.mubr.f32.mxu0 0.0
      %3638 = vmatmul.mubr.f32.gmra.mxu0 %v936
      %v3639 = vpop.f32.mrf.mxu0
      %v3640 = vadd.f32 0.0, %v3639
      %v3641 = vpop.f32.mrf.mxu0
      %3642 = vdwg.mxu0
      %v3644 = vsel %vm184, %v3267, 0
      %3646 = vmatprep.subr.mxu0 0.0
      %3647 = vmatpush1.msra.mxu0 0.0
      %3648 = vmatprep.subr.mxu0 0.0
      %3649 = vmatpush1.msra.mxu0 0.0
      %3650 = vmatprep.subr.mxu0 0.0
      %3651 = vmatpush1.msra.mxu0 0.0
      %3652 = vmatprep.subr.mxu0 0.0
      %3653 = vmatpush1.msra.mxu0 0.0
      %3654 = vmatprep.subr.mxu0 0.0
      %3655 = vmatpush1.msra.mxu0 0.0
      %3656 = vmatprep.subr.mxu0 0.0
      %3657 = vmatpush1.msra.mxu0 0.0
      %3658 = vmatprep.subr.mxu0 0.0
      %3659 = vmatpush1.msra.mxu0 0.0
      %3660 = vmatprep.subr.mxu0 0.0
      %3661 = vmatpush1.msra.mxu0 0.0
      %3662 = vmatprep.subr.mxu0 0.0
      %3663 = vmatpush1.msra.mxu0 0.0
      %3664 = vmatprep.subr.mxu0 0.0
      %3665 = vmatpush1.msra.mxu0 0.0
      %3666 = vmatprep.subr.mxu0 0.0
      %3667 = vmatpush1.msra.mxu0 0.0
      %3668 = vmatprep.subr.mxu0 0.0
      %3669 = vmatpush1.msra.mxu0 0.0
      %3670 = vmatprep.subr.mxu0 0.0
      %3671 = vmatpush1.msra.mxu0 0.0
      %3672 = vmatprep.subr.mxu0 0.0
      %3673 = vmatpush1.msra.mxu0 0.0
      %3674 = vmatprep.subr.mxu0 0.0
      %3675 = vmatpush1.msra.mxu0 0.0
      %3676 = vmatprep.subr.mxu0 0.0
      %3677 = vmatpush1.msra.mxu0 %v3644
      %3678 = vmatprep.subr.mxu0 0.0
      %3679 = vmatpush2.msra.mxu0 0.0
      %3680 = vmatprep.subr.mxu0 0.0
      %3681 = vmatpush2.msra.mxu0 0.0
      %3682 = vmatprep.subr.mxu0 0.0
      %3683 = vmatpush2.msra.mxu0 0.0
      %3684 = vmatprep.subr.mxu0 0.0
      %3685 = vmatpush2.msra.mxu0 0.0
      %3686 = vmatprep.subr.mxu0 0.0
      %3687 = vmatpush2.msra.mxu0 0.0
      %3688 = vmatprep.subr.mxu0 0.0
      %3689 = vmatpush2.msra.mxu0 0.0
      %3690 = vmatprep.subr.mxu0 0.0
      %3691 = vmatpush2.msra.mxu0 0.0
      %3692 = vmatprep.subr.mxu0 0.0
      %3693 = vmatpush2.msra.mxu0 0.0
      %3694 = vmatprep.subr.mxu0 0.0
      %3695 = vmatpush2.msra.mxu0 0.0
      %3696 = vmatprep.subr.mxu0 0.0
      %3697 = vmatpush2.msra.mxu0 0.0
      %3698 = vmatprep.subr.mxu0 0.0
      %3699 = vmatpush2.msra.mxu0 0.0
      %3700 = vmatprep.subr.mxu0 0.0
      %3701 = vmatpush2.msra.mxu0 0.0
      %3702 = vmatprep.subr.mxu0 0.0
      %3703 = vmatpush2.msra.mxu0 0.0
      %3704 = vmatprep.subr.mxu0 0.0
      %3705 = vmatpush2.msra.mxu0 0.0
      %3706 = vmatprep.subr.mxu0 0.0
      %3707 = vmatpush2.msra.mxu0 0.0
      %3708 = vmatprep.subr.mxu0 0.0
      %3709 = vmatpush2.msra.mxu0 0.0
      %3710 = vmatprep.mubr.f32.mxu0 0.0
      %3711 = vmatmul.mubr.f32.gmra.mxu0 %v1011
      %v3712 = vpop.f32.mrf.mxu0
      %v3713 = vadd.f32 0.0, %v3712
      %v3714 = vpop.f32.mrf.mxu0
      %3715 = vdwg.mxu0
      %v3717 = vsel %vm184, %v3268, 0
      %3719 = vmatprep.subr.mxu0 0.0
      %3720 = vmatpush1.msra.mxu0 0.0
      %3721 = vmatprep.subr.mxu0 0.0
      %3722 = vmatpush1.msra.mxu0 0.0
      %3723 = vmatprep.subr.mxu0 0.0
      %3724 = vmatpush1.msra.mxu0 0.0
      %3725 = vmatprep.subr.mxu0 0.0
      %3726 = vmatpush1.msra.mxu0 0.0
      %3727 = vmatprep.subr.mxu0 0.0
      %3728 = vmatpush1.msra.mxu0 0.0
      %3729 = vmatprep.subr.mxu0 0.0
      %3730 = vmatpush1.msra.mxu0 0.0
      %3731 = vmatprep.subr.mxu0 0.0
      %3732 = vmatpush1.msra.mxu0 0.0
      %3733 = vmatprep.subr.mxu0 0.0
      %3734 = vmatpush1.msra.mxu0 0.0
      %3735 = vmatprep.subr.mxu0 0.0
      %3736 = vmatpush1.msra.mxu0 0.0
      %3737 = vmatprep.subr.mxu0 0.0
      %3738 = vmatpush1.msra.mxu0 0.0
      %3739 = vmatprep.subr.mxu0 0.0
      %3740 = vmatpush1.msra.mxu0 0.0
      %3741 = vmatprep.subr.mxu0 0.0
      %3742 = vmatpush1.msra.mxu0 0.0
      %3743 = vmatprep.subr.mxu0 0.0
      %3744 = vmatpush1.msra.mxu0 0.0
      %3745 = vmatprep.subr.mxu0 0.0
      %3746 = vmatpush1.msra.mxu0 0.0
      %3747 = vmatprep.subr.mxu0 0.0
      %3748 = vmatpush1.msra.mxu0 0.0
      %3749 = vmatprep.subr.mxu0 0.0
      %3750 = vmatpush1.msra.mxu0 %v3717
      %3751 = vmatprep.subr.mxu0 0.0
      %3752 = vmatpush2.msra.mxu0 0.0
      %3753 = vmatprep.subr.mxu0 0.0
      %3754 = vmatpush2.msra.mxu0 0.0
      %3755 = vmatprep.subr.mxu0 0.0
      %3756 = vmatpush2.msra.mxu0 0.0
      %3757 = vmatprep.subr.mxu0 0.0
      %3758 = vmatpush2.msra.mxu0 0.0
      %3759 = vmatprep.subr.mxu0 0.0
      %3760 = vmatpush2.msra.mxu0 0.0
      %3761 = vmatprep.subr.mxu0 0.0
      %3762 = vmatpush2.msra.mxu0 0.0
      %3763 = vmatprep.subr.mxu0 0.0
      %3764 = vmatpush2.msra.mxu0 0.0
      %3765 = vmatprep.subr.mxu0 0.0
      %3766 = vmatpush2.msra.mxu0 0.0
      %3767 = vmatprep.subr.mxu0 0.0
      %3768 = vmatpush2.msra.mxu0 0.0
      %3769 = vmatprep.subr.mxu0 0.0
      %3770 = vmatpush2.msra.mxu0 0.0
      %3771 = vmatprep.subr.mxu0 0.0
      %3772 = vmatpush2.msra.mxu0 0.0
      %3773 = vmatprep.subr.mxu0 0.0
      %3774 = vmatpush2.msra.mxu0 0.0
      %3775 = vmatprep.subr.mxu0 0.0
      %3776 = vmatpush2.msra.mxu0 0.0
      %3777 = vmatprep.subr.mxu0 0.0
      %3778 = vmatpush2.msra.mxu0 0.0
      %3779 = vmatprep.subr.mxu0 0.0
      %3780 = vmatpush2.msra.mxu0 0.0
      %3781 = vmatprep.subr.mxu0 0.0
      %3782 = vmatpush2.msra.mxu0 0.0
      %3783 = vmatprep.mubr.f32.mxu0 0.0
      %3784 = vmatmul.mubr.f32.gmra.mxu0 %v1086
      %v3785 = vpop.f32.mrf.mxu0
      %v3786 = vadd.f32 0.0, %v3785
      %v3787 = vpop.f32.mrf.mxu0
      %3788 = vdwg.mxu0
      %v3790 = vsel %vm184, %v3269, 0
      %3792 = vmatprep.subr.mxu0 0.0
      %3793 = vmatpush1.msra.mxu0 0.0
      %3794 = vmatprep.subr.mxu0 0.0
      %3795 = vmatpush1.msra.mxu0 0.0
      %3796 = vmatprep.subr.mxu0 0.0
      %3797 = vmatpush1.msra.mxu0 0.0
      %3798 = vmatprep.subr.mxu0 0.0
      %3799 = vmatpush1.msra.mxu0 0.0
      %3800 = vmatprep.subr.mxu0 0.0
      %3801 = vmatpush1.msra.mxu0 0.0
      %3802 = vmatprep.subr.mxu0 0.0
      %3803 = vmatpush1.msra.mxu0 0.0
      %3804 = vmatprep.subr.mxu0 0.0
      %3805 = vmatpush1.msra.mxu0 0.0
      %3806 = vmatprep.subr.mxu0 0.0
      %3807 = vmatpush1.msra.mxu0 0.0
      %3808 = vmatprep.subr.mxu0 0.0
      %3809 = vmatpush1.msra.mxu0 0.0
      %3810 = vmatprep.subr.mxu0 0.0
      %3811 = vmatpush1.msra.mxu0 0.0
      %3812 = vmatprep.subr.mxu0 0.0
      %3813 = vmatpush1.msra.mxu0 0.0
      %3814 = vmatprep.subr.mxu0 0.0
      %3815 = vmatpush1.msra.mxu0 0.0
      %3816 = vmatprep.subr.mxu0 0.0
      %3817 = vmatpush1.msra.mxu0 0.0
      %3818 = vmatprep.subr.mxu0 0.0
      %3819 = vmatpush1.msra.mxu0 0.0
      %3820 = vmatprep.subr.mxu0 0.0
      %3821 = vmatpush1.msra.mxu0 0.0
      %3822 = vmatprep.subr.mxu0 0.0
      %3823 = vmatpush1.msra.mxu0 %v3790
      %3824 = vmatprep.subr.mxu0 0.0
      %3825 = vmatpush2.msra.mxu0 0.0
      %3826 = vmatprep.subr.mxu0 0.0
      %3827 = vmatpush2.msra.mxu0 0.0
      %3828 = vmatprep.subr.mxu0 0.0
      %3829 = vmatpush2.msra.mxu0 0.0
      %3830 = vmatprep.subr.mxu0 0.0
      %3831 = vmatpush2.msra.mxu0 0.0
      %3832 = vmatprep.subr.mxu0 0.0
      %3833 = vmatpush2.msra.mxu0 0.0
      %3834 = vmatprep.subr.mxu0 0.0
      %3835 = vmatpush2.msra.mxu0 0.0
      %3836 = vmatprep.subr.mxu0 0.0
      %3837 = vmatpush2.msra.mxu0 0.0
      %3838 = vmatprep.subr.mxu0 0.0
      %3839 = vmatpush2.msra.mxu0 0.0
      %3840 = vmatprep.subr.mxu0 0.0
      %3841 = vmatpush2.msra.mxu0 0.0
      %3842 = vmatprep.subr.mxu0 0.0
      %3843 = vmatpush2.msra.mxu0 0.0
      %3844 = vmatprep.subr.mxu0 0.0
      %3845 = vmatpush2.msra.mxu0 0.0
      %3846 = vmatprep.subr.mxu0 0.0
      %3847 = vmatpush2.msra.mxu0 0.0
      %3848 = vmatprep.subr.mxu0 0.0
      %3849 = vmatpush2.msra.mxu0 0.0
      %3850 = vmatprep.subr.mxu0 0.0
      %3851 = vmatpush2.msra.mxu0 0.0
      %3852 = vmatprep.subr.mxu0 0.0
      %3853 = vmatpush2.msra.mxu0 0.0
      %3854 = vmatprep.subr.mxu0 0.0
      %3855 = vmatpush2.msra.mxu0 0.0
      %3856 = vmatprep.mubr.f32.mxu0 0.0
      %3857 = vmatmul.mubr.f32.gmra.mxu0 %v1161
      %v3858 = vpop.f32.mrf.mxu0
      %v3859 = vadd.f32 0.0, %v3858
      %v3860 = vpop.f32.mrf.mxu0
      %3861 = vdwg.mxu0
      %v3863 = vsel %vm184, %v3270, 0
      %3865 = vmatprep.subr.mxu0 0.0
      %3866 = vmatpush1.msra.mxu0 0.0
      %3867 = vmatprep.subr.mxu0 0.0
      %3868 = vmatpush1.msra.mxu0 0.0
      %3869 = vmatprep.subr.mxu0 0.0
      %3870 = vmatpush1.msra.mxu0 0.0
      %3871 = vmatprep.subr.mxu0 0.0
      %3872 = vmatpush1.msra.mxu0 0.0
      %3873 = vmatprep.subr.mxu0 0.0
      %3874 = vmatpush1.msra.mxu0 0.0
      %3875 = vmatprep.subr.mxu0 0.0
      %3876 = vmatpush1.msra.mxu0 0.0
      %3877 = vmatprep.subr.mxu0 0.0
      %3878 = vmatpush1.msra.mxu0 0.0
      %3879 = vmatprep.subr.mxu0 0.0
      %3880 = vmatpush1.msra.mxu0 0.0
      %3881 = vmatprep.subr.mxu0 0.0
      %3882 = vmatpush1.msra.mxu0 0.0
      %3883 = vmatprep.subr.mxu0 0.0
      %3884 = vmatpush1.msra.mxu0 0.0
      %3885 = vmatprep.subr.mxu0 0.0
      %3886 = vmatpush1.msra.mxu0 0.0
      %3887 = vmatprep.subr.mxu0 0.0
      %3888 = vmatpush1.msra.mxu0 0.0
      %3889 = vmatprep.subr.mxu0 0.0
      %3890 = vmatpush1.msra.mxu0 0.0
      %3891 = vmatprep.subr.mxu0 0.0
      %3892 = vmatpush1.msra.mxu0 0.0
      %3893 = vmatprep.subr.mxu0 0.0
      %3894 = vmatpush1.msra.mxu0 0.0
      %3895 = vmatprep.subr.mxu0 0.0
      %3896 = vmatpush1.msra.mxu0 %v3863
      %3897 = vmatprep.subr.mxu0 0.0
      %3898 = vmatpush2.msra.mxu0 0.0
      %3899 = vmatprep.subr.mxu0 0.0
      %3900 = vmatpush2.msra.mxu0 0.0
      %3901 = vmatprep.subr.mxu0 0.0
      %3902 = vmatpush2.msra.mxu0 0.0
      %3903 = vmatprep.subr.mxu0 0.0
      %3904 = vmatpush2.msra.mxu0 0.0
      %3905 = vmatprep.subr.mxu0 0.0
      %3906 = vmatpush2.msra.mxu0 0.0
      %3907 = vmatprep.subr.mxu0 0.0
      %3908 = vmatpush2.msra.mxu0 0.0
      %3909 = vmatprep.subr.mxu0 0.0
      %3910 = vmatpush2.msra.mxu0 0.0
      %3911 = vmatprep.subr.mxu0 0.0
      %3912 = vmatpush2.msra.mxu0 0.0
      %3913 = vmatprep.subr.mxu0 0.0
      %3914 = vmatpush2.msra.mxu0 0.0
      %3915 = vmatprep.subr.mxu0 0.0
      %3916 = vmatpush2.msra.mxu0 0.0
      %3917 = vmatprep.subr.mxu0 0.0
      %3918 = vmatpush2.msra.mxu0 0.0
      %3919 = vmatprep.subr.mxu0 0.0
      %3920 = vmatpush2.msra.mxu0 0.0
      %3921 = vmatprep.subr.mxu0 0.0
      %3922 = vmatpush2.msra.mxu0 0.0
      %3923 = vmatprep.subr.mxu0 0.0
      %3924 = vmatpush2.msra.mxu0 0.0
      %3925 = vmatprep.subr.mxu0 0.0
      %3926 = vmatpush2.msra.mxu0 0.0
      %3927 = vmatprep.subr.mxu0 0.0
      %3928 = vmatpush2.msra.mxu0 0.0
      %3929 = vmatprep.mubr.f32.mxu0 0.0
      %3930 = vmatmul.mubr.f32.gmra.mxu0 %v1236
      %v3931 = vpop.f32.mrf.mxu0
      %v3932 = vadd.f32 0.0, %v3931
      %v3933 = vpop.f32.mrf.mxu0
      %3934 = vdwg.mxu0
      %v3936 = vsel %vm184, %v3271, 0
      %3938 = vmatprep.subr.mxu0 0.0
      %3939 = vmatpush1.msra.mxu0 0.0
      %3940 = vmatprep.subr.mxu0 0.0
      %3941 = vmatpush1.msra.mxu0 0.0
      %3942 = vmatprep.subr.mxu0 0.0
      %3943 = vmatpush1.msra.mxu0 0.0
      %3944 = vmatprep.subr.mxu0 0.0
      %3945 = vmatpush1.msra.mxu0 0.0
      %3946 = vmatprep.subr.mxu0 0.0
      %3947 = vmatpush1.msra.mxu0 0.0
      %3948 = vmatprep.subr.mxu0 0.0
      %3949 = vmatpush1.msra.mxu0 0.0
      %3950 = vmatprep.subr.mxu0 0.0
      %3951 = vmatpush1.msra.mxu0 0.0
      %3952 = vmatprep.subr.mxu0 0.0
      %3953 = vmatpush1.msra.mxu0 0.0
      %3954 = vmatprep.subr.mxu0 0.0
      %3955 = vmatpush1.msra.mxu0 0.0
      %3956 = vmatprep.subr.mxu0 0.0
      %3957 = vmatpush1.msra.mxu0 0.0
      %3958 = vmatprep.subr.mxu0 0.0
      %3959 = vmatpush1.msra.mxu0 0.0
      %3960 = vmatprep.subr.mxu0 0.0
      %3961 = vmatpush1.msra.mxu0 0.0
      %3962 = vmatprep.subr.mxu0 0.0
      %3963 = vmatpush1.msra.mxu0 0.0
      %3964 = vmatprep.subr.mxu0 0.0
      %3965 = vmatpush1.msra.mxu0 0.0
      %3966 = vmatprep.subr.mxu0 0.0
      %3967 = vmatpush1.msra.mxu0 0.0
      %3968 = vmatprep.subr.mxu0 0.0
      %3969 = vmatpush1.msra.mxu0 %v3936
      %3970 = vmatprep.subr.mxu0 0.0
      %3971 = vmatpush2.msra.mxu0 0.0
      %3972 = vmatprep.subr.mxu0 0.0
      %3973 = vmatpush2.msra.mxu0 0.0
      %3974 = vmatprep.subr.mxu0 0.0
      %3975 = vmatpush2.msra.mxu0 0.0
      %3976 = vmatprep.subr.mxu0 0.0
      %3977 = vmatpush2.msra.mxu0 0.0
      %3978 = vmatprep.subr.mxu0 0.0
      %3979 = vmatpush2.msra.mxu0 0.0
      %3980 = vmatprep.subr.mxu0 0.0
      %3981 = vmatpush2.msra.mxu0 0.0
      %3982 = vmatprep.subr.mxu0 0.0
      %3983 = vmatpush2.msra.mxu0 0.0
      %3984 = vmatprep.subr.mxu0 0.0
      %3985 = vmatpush2.msra.mxu0 0.0
      %3986 = vmatprep.subr.mxu0 0.0
      %3987 = vmatpush2.msra.mxu0 0.0
      %3988 = vmatprep.subr.mxu0 0.0
      %3989 = vmatpush2.msra.mxu0 0.0
      %3990 = vmatprep.subr.mxu0 0.0
      %3991 = vmatpush2.msra.mxu0 0.0
      %3992 = vmatprep.subr.mxu0 0.0
      %3993 = vmatpush2.msra.mxu0 0.0
      %3994 = vmatprep.subr.mxu0 0.0
      %3995 = vmatpush2.msra.mxu0 0.0
      %3996 = vmatprep.subr.mxu0 0.0
      %3997 = vmatpush2.msra.mxu0 0.0
      %3998 = vmatprep.subr.mxu0 0.0
      %3999 = vmatpush2.msra.mxu0 0.0
      %4000 = vmatprep.subr.mxu0 0.0
      %4001 = vmatpush2.msra.mxu0 0.0
      %4002 = vmatprep.mubr.f32.mxu0 0.0
      %4003 = vmatmul.mubr.f32.gmra.mxu0 %v1311
      %v4004 = vpop.f32.mrf.mxu0
      %v4005 = vadd.f32 0.0, %v4004
      %v4006 = vpop.f32.mrf.mxu0
      %4007 = vdwg.mxu0
      %v4009 = vsel %vm184, %v3272, 0
      %4011 = vmatprep.subr.mxu0 0.0
      %4012 = vmatpush1.msra.mxu0 0.0
      %4013 = vmatprep.subr.mxu0 0.0
      %4014 = vmatpush1.msra.mxu0 0.0
      %4015 = vmatprep.subr.mxu0 0.0
      %4016 = vmatpush1.msra.mxu0 0.0
      %4017 = vmatprep.subr.mxu0 0.0
      %4018 = vmatpush1.msra.mxu0 0.0
      %4019 = vmatprep.subr.mxu0 0.0
      %4020 = vmatpush1.msra.mxu0 0.0
      %4021 = vmatprep.subr.mxu0 0.0
      %4022 = vmatpush1.msra.mxu0 0.0
      %4023 = vmatprep.subr.mxu0 0.0
      %4024 = vmatpush1.msra.mxu0 0.0
      %4025 = vmatprep.subr.mxu0 0.0
      %4026 = vmatpush1.msra.mxu0 0.0
      %4027 = vmatprep.subr.mxu0 0.0
      %4028 = vmatpush1.msra.mxu0 0.0
      %4029 = vmatprep.subr.mxu0 0.0
      %4030 = vmatpush1.msra.mxu0 0.0
      %4031 = vmatprep.subr.mxu0 0.0
      %4032 = vmatpush1.msra.mxu0 0.0
      %4033 = vmatprep.subr.mxu0 0.0
      %4034 = vmatpush1.msra.mxu0 0.0
      %4035 = vmatprep.subr.mxu0 0.0
      %4036 = vmatpush1.msra.mxu0 0.0
      %4037 = vmatprep.subr.mxu0 0.0
      %4038 = vmatpush1.msra.mxu0 0.0
      %4039 = vmatprep.subr.mxu0 0.0
      %4040 = vmatpush1.msra.mxu0 0.0
      %4041 = vmatprep.subr.mxu0 0.0
      %4042 = vmatpush1.msra.mxu0 %v4009
      %4043 = vmatprep.subr.mxu0 0.0
      %4044 = vmatpush2.msra.mxu0 0.0
      %4045 = vmatprep.subr.mxu0 0.0
      %4046 = vmatpush2.msra.mxu0 0.0
      %4047 = vmatprep.subr.mxu0 0.0
      %4048 = vmatpush2.msra.mxu0 0.0
      %4049 = vmatprep.subr.mxu0 0.0
      %4050 = vmatpush2.msra.mxu0 0.0
      %4051 = vmatprep.subr.mxu0 0.0
      %4052 = vmatpush2.msra.mxu0 0.0
      %4053 = vmatprep.subr.mxu0 0.0
      %4054 = vmatpush2.msra.mxu0 0.0
      %4055 = vmatprep.subr.mxu0 0.0
      %4056 = vmatpush2.msra.mxu0 0.0
      %4057 = vmatprep.subr.mxu0 0.0
      %4058 = vmatpush2.msra.mxu0 0.0
      %4059 = vmatprep.subr.mxu0 0.0
      %4060 = vmatpush2.msra.mxu0 0.0
      %4061 = vmatprep.subr.mxu0 0.0
      %4062 = vmatpush2.msra.mxu0 0.0
      %4063 = vmatprep.subr.mxu0 0.0
      %4064 = vmatpush2.msra.mxu0 0.0
      %4065 = vmatprep.subr.mxu0 0.0
      %4066 = vmatpush2.msra.mxu0 0.0
      %4067 = vmatprep.subr.mxu0 0.0
      %4068 = vmatpush2.msra.mxu0 0.0
      %4069 = vmatprep.subr.mxu0 0.0
      %4070 = vmatpush2.msra.mxu0 0.0
      %4071 = vmatprep.subr.mxu0 0.0
      %4072 = vmatpush2.msra.mxu0 0.0
      %4073 = vmatprep.subr.mxu0 0.0
      %4074 = vmatpush2.msra.mxu0 0.0
      %4075 = vmatprep.mubr.f32.mxu0 0.0
      %4076 = vmatmul.mubr.f32.gmra.mxu0 %v1386
      %v4077 = vpop.f32.mrf.mxu0
      %v4078 = vadd.f32 0.0, %v4077
      %v4079 = vpop.f32.mrf.mxu0
      %4080 = vdwg.mxu0
      %v4082 = vsel %vm184, %v3273, 0
      %4084 = vmatprep.subr.mxu0 0.0
      %4085 = vmatpush1.msra.mxu0 0.0
      %4086 = vmatprep.subr.mxu0 0.0
      %4087 = vmatpush1.msra.mxu0 0.0
      %4088 = vmatprep.subr.mxu0 0.0
      %4089 = vmatpush1.msra.mxu0 0.0
      %4090 = vmatprep.subr.mxu0 0.0
      %4091 = vmatpush1.msra.mxu0 0.0
      %4092 = vmatprep.subr.mxu0 0.0
      %4093 = vmatpush1.msra.mxu0 0.0
      %4094 = vmatprep.subr.mxu0 0.0
      %4095 = vmatpush1.msra.mxu0 0.0
      %4096 = vmatprep.subr.mxu0 0.0
      %4097 = vmatpush1.msra.mxu0 0.0
      %4098 = vmatprep.subr.mxu0 0.0
      %4099 = vmatpush1.msra.mxu0 0.0
      %4100 = vmatprep.subr.mxu0 0.0
      %4101 = vmatpush1.msra.mxu0 0.0
      %4102 = vmatprep.subr.mxu0 0.0
      %4103 = vmatpush1.msra.mxu0 0.0
      %4104 = vmatprep.subr.mxu0 0.0
      %4105 = vmatpush1.msra.mxu0 0.0
      %4106 = vmatprep.subr.mxu0 0.0
      %4107 = vmatpush1.msra.mxu0 0.0
      %4108 = vmatprep.subr.mxu0 0.0
      %4109 = vmatpush1.msra.mxu0 0.0
      %4110 = vmatprep.subr.mxu0 0.0
      %4111 = vmatpush1.msra.mxu0 0.0
      %4112 = vmatprep.subr.mxu0 0.0
      %4113 = vmatpush1.msra.mxu0 0.0
      %4114 = vmatprep.subr.mxu0 0.0
      %4115 = vmatpush1.msra.mxu0 %v4082
      %4116 = vmatprep.subr.mxu0 0.0
      %4117 = vmatpush2.msra.mxu0 0.0
      %4118 = vmatprep.subr.mxu0 0.0
      %4119 = vmatpush2.msra.mxu0 0.0
      %4120 = vmatprep.subr.mxu0 0.0
      %4121 = vmatpush2.msra.mxu0 0.0
      %4122 = vmatprep.subr.mxu0 0.0
      %4123 = vmatpush2.msra.mxu0 0.0
      %4124 = vmatprep.subr.mxu0 0.0
      %4125 = vmatpush2.msra.mxu0 0.0
      %4126 = vmatprep.subr.mxu0 0.0
      %4127 = vmatpush2.msra.mxu0 0.0
      %4128 = vmatprep.subr.mxu0 0.0
      %4129 = vmatpush2.msra.mxu0 0.0
      %4130 = vmatprep.subr.mxu0 0.0
      %4131 = vmatpush2.msra.mxu0 0.0
      %4132 = vmatprep.subr.mxu0 0.0
      %4133 = vmatpush2.msra.mxu0 0.0
      %4134 = vmatprep.subr.mxu0 0.0
      %4135 = vmatpush2.msra.mxu0 0.0
      %4136 = vmatprep.subr.mxu0 0.0
      %4137 = vmatpush2.msra.mxu0 0.0
      %4138 = vmatprep.subr.mxu0 0.0
      %4139 = vmatpush2.msra.mxu0 0.0
      %4140 = vmatprep.subr.mxu0 0.0
      %4141 = vmatpush2.msra.mxu0 0.0
      %4142 = vmatprep.subr.mxu0 0.0
      %4143 = vmatpush2.msra.mxu0 0.0
      %4144 = vmatprep.subr.mxu0 0.0
      %4145 = vmatpush2.msra.mxu0 0.0
      %4146 = vmatprep.subr.mxu0 0.0
      %4147 = vmatpush2.msra.mxu0 0.0
      %4148 = vmatprep.mubr.f32.mxu0 0.0
      %4149 = vmatmul.mubr.f32.gmra.mxu0 %v1461
      %v4150 = vpop.f32.mrf.mxu0
      %v4151 = vadd.f32 0.0, %v4150
      %v4152 = vpop.f32.mrf.mxu0
      %4153 = vdwg.mxu0
      %v4155 = vsel %vm184, %v3274, 0
      %4157 = vmatprep.subr.mxu0 0.0
      %4158 = vmatpush1.msra.mxu0 0.0
      %4159 = vmatprep.subr.mxu0 0.0
      %4160 = vmatpush1.msra.mxu0 0.0
      %4161 = vmatprep.subr.mxu0 0.0
      %4162 = vmatpush1.msra.mxu0 0.0
      %4163 = vmatprep.subr.mxu0 0.0
      %4164 = vmatpush1.msra.mxu0 0.0
      %4165 = vmatprep.subr.mxu0 0.0
      %4166 = vmatpush1.msra.mxu0 0.0
      %4167 = vmatprep.subr.mxu0 0.0
      %4168 = vmatpush1.msra.mxu0 0.0
      %4169 = vmatprep.subr.mxu0 0.0
      %4170 = vmatpush1.msra.mxu0 0.0
      %4171 = vmatprep.subr.mxu0 0.0
      %4172 = vmatpush1.msra.mxu0 0.0
      %4173 = vmatprep.subr.mxu0 0.0
      %4174 = vmatpush1.msra.mxu0 0.0
      %4175 = vmatprep.subr.mxu0 0.0
      %4176 = vmatpush1.msra.mxu0 0.0
      %4177 = vmatprep.subr.mxu0 0.0
      %4178 = vmatpush1.msra.mxu0 0.0
      %4179 = vmatprep.subr.mxu0 0.0
      %4180 = vmatpush1.msra.mxu0 0.0
      %4181 = vmatprep.subr.mxu0 0.0
      %4182 = vmatpush1.msra.mxu0 0.0
      %4183 = vmatprep.subr.mxu0 0.0
      %4184 = vmatpush1.msra.mxu0 0.0
      %4185 = vmatprep.subr.mxu0 0.0
      %4186 = vmatpush1.msra.mxu0 0.0
      %4187 = vmatprep.subr.mxu0 0.0
      %4188 = vmatpush1.msra.mxu0 %v4155
      %4189 = vmatprep.subr.mxu0 0.0
      %4190 = vmatpush2.msra.mxu0 0.0
      %4191 = vmatprep.subr.mxu0 0.0
      %4192 = vmatpush2.msra.mxu0 0.0
      %4193 = vmatprep.subr.mxu0 0.0
      %4194 = vmatpush2.msra.mxu0 0.0
      %4195 = vmatprep.subr.mxu0 0.0
      %4196 = vmatpush2.msra.mxu0 0.0
      %4197 = vmatprep.subr.mxu0 0.0
      %4198 = vmatpush2.msra.mxu0 0.0
      %4199 = vmatprep.subr.mxu0 0.0
      %4200 = vmatpush2.msra.mxu0 0.0
      %4201 = vmatprep.subr.mxu0 0.0
      %4202 = vmatpush2.msra.mxu0 0.0
      %4203 = vmatprep.subr.mxu0 0.0
      %4204 = vmatpush2.msra.mxu0 0.0
      %4205 = vmatprep.subr.mxu0 0.0
      %4206 = vmatpush2.msra.mxu0 0.0
      %4207 = vmatprep.subr.mxu0 0.0
      %4208 = vmatpush2.msra.mxu0 0.0
      %4209 = vmatprep.subr.mxu0 0.0
      %4210 = vmatpush2.msra.mxu0 0.0
      %4211 = vmatprep.subr.mxu0 0.0
      %4212 = vmatpush2.msra.mxu0 0.0
      %4213 = vmatprep.subr.mxu0 0.0
      %4214 = vmatpush2.msra.mxu0 0.0
      %4215 = vmatprep.subr.mxu0 0.0
      %4216 = vmatpush2.msra.mxu0 0.0
      %4217 = vmatprep.subr.mxu0 0.0
      %4218 = vmatpush2.msra.mxu0 0.0
      %4219 = vmatprep.subr.mxu0 0.0
      %4220 = vmatpush2.msra.mxu0 0.0
      %4221 = vmatprep.mubr.f32.mxu0 0.0
      %4222 = vmatmul.mubr.f32.gmra.mxu0 %v1536
      %v4223 = vpop.f32.mrf.mxu0
      %v4224 = vadd.f32 0.0, %v4223
      %v4225 = vpop.f32.mrf.mxu0
      %4226 = vdwg.mxu0
      %v4228 = vsel %vm184, %v3275, 0
      %4230 = vmatprep.subr.mxu0 0.0
      %4231 = vmatpush1.msra.mxu0 0.0
      %4232 = vmatprep.subr.mxu0 0.0
      %4233 = vmatpush1.msra.mxu0 0.0
      %4234 = vmatprep.subr.mxu0 0.0
      %4235 = vmatpush1.msra.mxu0 0.0
      %4236 = vmatprep.subr.mxu0 0.0
      %4237 = vmatpush1.msra.mxu0 0.0
      %4238 = vmatprep.subr.mxu0 0.0
      %4239 = vmatpush1.msra.mxu0 0.0
      %4240 = vmatprep.subr.mxu0 0.0
      %4241 = vmatpush1.msra.mxu0 0.0
      %4242 = vmatprep.subr.mxu0 0.0
      %4243 = vmatpush1.msra.mxu0 0.0
      %4244 = vmatprep.subr.mxu0 0.0
      %4245 = vmatpush1.msra.mxu0 0.0
      %4246 = vmatprep.subr.mxu0 0.0
      %4247 = vmatpush1.msra.mxu0 0.0
      %4248 = vmatprep.subr.mxu0 0.0
      %4249 = vmatpush1.msra.mxu0 0.0
      %4250 = vmatprep.subr.mxu0 0.0
      %4251 = vmatpush1.msra.mxu0 0.0
      %4252 = vmatprep.subr.mxu0 0.0
      %4253 = vmatpush1.msra.mxu0 0.0
      %4254 = vmatprep.subr.mxu0 0.0
      %4255 = vmatpush1.msra.mxu0 0.0
      %4256 = vmatprep.subr.mxu0 0.0
      %4257 = vmatpush1.msra.mxu0 0.0
      %4258 = vmatprep.subr.mxu0 0.0
      %4259 = vmatpush1.msra.mxu0 0.0
      %4260 = vmatprep.subr.mxu0 0.0
      %4261 = vmatpush1.msra.mxu0 %v4228
      %4262 = vmatprep.subr.mxu0 0.0
      %4263 = vmatpush2.msra.mxu0 0.0
      %4264 = vmatprep.subr.mxu0 0.0
      %4265 = vmatpush2.msra.mxu0 0.0
      %4266 = vmatprep.subr.mxu0 0.0
      %4267 = vmatpush2.msra.mxu0 0.0
      %4268 = vmatprep.subr.mxu0 0.0
      %4269 = vmatpush2.msra.mxu0 0.0
      %4270 = vmatprep.subr.mxu0 0.0
      %4271 = vmatpush2.msra.mxu0 0.0
      %4272 = vmatprep.subr.mxu0 0.0
      %4273 = vmatpush2.msra.mxu0 0.0
      %4274 = vmatprep.subr.mxu0 0.0
      %4275 = vmatpush2.msra.mxu0 0.0
      %4276 = vmatprep.subr.mxu0 0.0
      %4277 = vmatpush2.msra.mxu0 0.0
      %4278 = vmatprep.subr.mxu0 0.0
      %4279 = vmatpush2.msra.mxu0 0.0
      %4280 = vmatprep.subr.mxu0 0.0
      %4281 = vmatpush2.msra.mxu0 0.0
      %4282 = vmatprep.subr.mxu0 0.0
      %4283 = vmatpush2.msra.mxu0 0.0
      %4284 = vmatprep.subr.mxu0 0.0
      %4285 = vmatpush2.msra.mxu0 0.0
      %4286 = vmatprep.subr.mxu0 0.0
      %4287 = vmatpush2.msra.mxu0 0.0
      %4288 = vmatprep.subr.mxu0 0.0
      %4289 = vmatpush2.msra.mxu0 0.0
      %4290 = vmatprep.subr.mxu0 0.0
      %4291 = vmatpush2.msra.mxu0 0.0
      %4292 = vmatprep.subr.mxu0 0.0
      %4293 = vmatpush2.msra.mxu0 0.0
      %4294 = vmatprep.mubr.f32.mxu0 0.0
      %4295 = vmatmul.mubr.f32.gmra.mxu0 %v1611
      %v4296 = vpop.f32.mrf.mxu0
      %v4297 = vadd.f32 0.0, %v4296
      %v4298 = vpop.f32.mrf.mxu0
      %4299 = vdwg.mxu0
      %v4301 = vsel %vm184, %v3276, 0
      %4303 = vmatprep.subr.mxu0 0.0
      %4304 = vmatpush1.msra.mxu0 0.0
      %4305 = vmatprep.subr.mxu0 0.0
      %4306 = vmatpush1.msra.mxu0 0.0
      %4307 = vmatprep.subr.mxu0 0.0
      %4308 = vmatpush1.msra.mxu0 0.0
      %4309 = vmatprep.subr.mxu0 0.0
      %4310 = vmatpush1.msra.mxu0 0.0
      %4311 = vmatprep.subr.mxu0 0.0
      %4312 = vmatpush1.msra.mxu0 0.0
      %4313 = vmatprep.subr.mxu0 0.0
      %4314 = vmatpush1.msra.mxu0 0.0
      %4315 = vmatprep.subr.mxu0 0.0
      %4316 = vmatpush1.msra.mxu0 0.0
      %4317 = vmatprep.subr.mxu0 0.0
      %4318 = vmatpush1.msra.mxu0 0.0
      %4319 = vmatprep.subr.mxu0 0.0
      %4320 = vmatpush1.msra.mxu0 0.0
      %4321 = vmatprep.subr.mxu0 0.0
      %4322 = vmatpush1.msra.mxu0 0.0
      %4323 = vmatprep.subr.mxu0 0.0
      %4324 = vmatpush1.msra.mxu0 0.0
      %4325 = vmatprep.subr.mxu0 0.0
      %4326 = vmatpush1.msra.mxu0 0.0
      %4327 = vmatprep.subr.mxu0 0.0
      %4328 = vmatpush1.msra.mxu0 0.0
      %4329 = vmatprep.subr.mxu0 0.0
      %4330 = vmatpush1.msra.mxu0 0.0
      %4331 = vmatprep.subr.mxu0 0.0
      %4332 = vmatpush1.msra.mxu0 0.0
      %4333 = vmatprep.subr.mxu0 0.0
      %4334 = vmatpush1.msra.mxu0 %v4301
      %4335 = vmatprep.subr.mxu0 0.0
      %4336 = vmatpush2.msra.mxu0 0.0
      %4337 = vmatprep.subr.mxu0 0.0
      %4338 = vmatpush2.msra.mxu0 0.0
      %4339 = vmatprep.subr.mxu0 0.0
      %4340 = vmatpush2.msra.mxu0 0.0
      %4341 = vmatprep.subr.mxu0 0.0
      %4342 = vmatpush2.msra.mxu0 0.0
      %4343 = vmatprep.subr.mxu0 0.0
      %4344 = vmatpush2.msra.mxu0 0.0
      %4345 = vmatprep.subr.mxu0 0.0
      %4346 = vmatpush2.msra.mxu0 0.0
      %4347 = vmatprep.subr.mxu0 0.0
      %4348 = vmatpush2.msra.mxu0 0.0
      %4349 = vmatprep.subr.mxu0 0.0
      %4350 = vmatpush2.msra.mxu0 0.0
      %4351 = vmatprep.subr.mxu0 0.0
      %4352 = vmatpush2.msra.mxu0 0.0
      %4353 = vmatprep.subr.mxu0 0.0
      %4354 = vmatpush2.msra.mxu0 0.0
      %4355 = vmatprep.subr.mxu0 0.0
      %4356 = vmatpush2.msra.mxu0 0.0
      %4357 = vmatprep.subr.mxu0 0.0
      %4358 = vmatpush2.msra.mxu0 0.0
      %4359 = vmatprep.subr.mxu0 0.0
      %4360 = vmatpush2.msra.mxu0 0.0
      %4361 = vmatprep.subr.mxu0 0.0
      %4362 = vmatpush2.msra.mxu0 0.0
      %4363 = vmatprep.subr.mxu0 0.0
      %4364 = vmatpush2.msra.mxu0 0.0
      %4365 = vmatprep.subr.mxu0 0.0
      %4366 = vmatpush2.msra.mxu0 0.0
      %4367 = vmatprep.mubr.f32.mxu0 0.0
      %4368 = vmatmul.mubr.f32.gmra.mxu0 %v1686
      %v4369 = vpop.f32.mrf.mxu0
      %v4370 = vadd.f32 0.0, %v4369
      %v4371 = vpop.f32.mrf.mxu0
      %4372 = vdwg.mxu0
      %v4374 = vsel %vm184, %v3277, 0
      %4376 = vmatprep.subr.mxu0 0.0
      %4377 = vmatpush1.msra.mxu0 0.0
      %4378 = vmatprep.subr.mxu0 0.0
      %4379 = vmatpush1.msra.mxu0 0.0
      %4380 = vmatprep.subr.mxu0 0.0
      %4381 = vmatpush1.msra.mxu0 0.0
      %4382 = vmatprep.subr.mxu0 0.0
      %4383 = vmatpush1.msra.mxu0 0.0
      %4384 = vmatprep.subr.mxu0 0.0
      %4385 = vmatpush1.msra.mxu0 0.0
      %4386 = vmatprep.subr.mxu0 0.0
      %4387 = vmatpush1.msra.mxu0 0.0
      %4388 = vmatprep.subr.mxu0 0.0
      %4389 = vmatpush1.msra.mxu0 0.0
      %4390 = vmatprep.subr.mxu0 0.0
      %4391 = vmatpush1.msra.mxu0 0.0
      %4392 = vmatprep.subr.mxu0 0.0
      %4393 = vmatpush1.msra.mxu0 0.0
      %4394 = vmatprep.subr.mxu0 0.0
      %4395 = vmatpush1.msra.mxu0 0.0
      %4396 = vmatprep.subr.mxu0 0.0
      %4397 = vmatpush1.msra.mxu0 0.0
      %4398 = vmatprep.subr.mxu0 0.0
      %4399 = vmatpush1.msra.mxu0 0.0
      %4400 = vmatprep.subr.mxu0 0.0
      %4401 = vmatpush1.msra.mxu0 0.0
      %4402 = vmatprep.subr.mxu0 0.0
      %4403 = vmatpush1.msra.mxu0 0.0
      %4404 = vmatprep.subr.mxu0 0.0
      %4405 = vmatpush1.msra.mxu0 0.0
      %4406 = vmatprep.subr.mxu0 0.0
      %4407 = vmatpush1.msra.mxu0 %v4374
      %4408 = vmatprep.subr.mxu0 0.0
      %4409 = vmatpush2.msra.mxu0 0.0
      %4410 = vmatprep.subr.mxu0 0.0
      %4411 = vmatpush2.msra.mxu0 0.0
      %4412 = vmatprep.subr.mxu0 0.0
      %4413 = vmatpush2.msra.mxu0 0.0
      %4414 = vmatprep.subr.mxu0 0.0
      %4415 = vmatpush2.msra.mxu0 0.0
      %4416 = vmatprep.subr.mxu0 0.0
      %4417 = vmatpush2.msra.mxu0 0.0
      %4418 = vmatprep.subr.mxu0 0.0
      %4419 = vmatpush2.msra.mxu0 0.0
      %4420 = vmatprep.subr.mxu0 0.0
      %4421 = vmatpush2.msra.mxu0 0.0
      %4422 = vmatprep.subr.mxu0 0.0
      %4423 = vmatpush2.msra.mxu0 0.0
      %4424 = vmatprep.subr.mxu0 0.0
      %4425 = vmatpush2.msra.mxu0 0.0
      %4426 = vmatprep.subr.mxu0 0.0
      %4427 = vmatpush2.msra.mxu0 0.0
      %4428 = vmatprep.subr.mxu0 0.0
      %4429 = vmatpush2.msra.mxu0 0.0
      %4430 = vmatprep.subr.mxu0 0.0
      %4431 = vmatpush2.msra.mxu0 0.0
      %4432 = vmatprep.subr.mxu0 0.0
      %4433 = vmatpush2.msra.mxu0 0.0
      %4434 = vmatprep.subr.mxu0 0.0
      %4435 = vmatpush2.msra.mxu0 0.0
      %4436 = vmatprep.subr.mxu0 0.0
      %4437 = vmatpush2.msra.mxu0 0.0
      %4438 = vmatprep.subr.mxu0 0.0
      %4439 = vmatpush2.msra.mxu0 0.0
      %4440 = vmatprep.mubr.f32.mxu0 0.0
      %4441 = vmatmul.mubr.f32.gmra.mxu0 %v1761
      %v4442 = vpop.f32.mrf.mxu0
      %v4443 = vadd.f32 0.0, %v4442
      %v4444 = vpop.f32.mrf.mxu0
      %4445 = vdwg.mxu0
      %vm4446 = vcmask 123904
      %v4447 = vsel %vm4446, %v3348, 0.0
      %v4448 = vsel %vm4446, %v3932, 0.0
      %v4449 = vadd.f32 %v4447, %v4448
      %v4450 = vsel %vm4446, %v3421, 0.0
      %v4451 = vsel %vm4446, %v4005, 0.0
      %v4452 = vadd.f32 %v4450, %v4451
      %v4453 = vsel %vm4446, %v3494, 0.0
      %v4454 = vsel %vm4446, %v4078, 0.0
      %v4455 = vadd.f32 %v4453, %v4454
      %v4456 = vsel %vm4446, %v3567, 0.0
      %v4457 = vsel %vm4446, %v4151, 0.0
      %v4458 = vadd.f32 %v4456, %v4457
      %v4459 = vsel %vm4446, %v3640, 0.0
      %v4460 = vsel %vm4446, %v4224, 0.0
      %v4461 = vadd.f32 %v4459, %v4460
      %v4462 = vsel %vm4446, %v3713, 0.0
      %v4463 = vsel %vm4446, %v4297, 0.0
      %v4464 = vadd.f32 %v4462, %v4463
      %v4465 = vsel %vm4446, %v3786, 0.0
      %v4466 = vsel %vm4446, %v4370, 0.0
      %v4467 = vadd.f32 %v4465, %v4466
      %v4468 = vsel %vm4446, %v3859, 0.0
      %v4469 = vsel %vm4446, %v4443, 0.0
      %v4470 = vadd.f32 %v4468, %v4469
      %v4479 = vcombine.low %v4449, %v4452
      %v4480 = vcombine.low %v4455, %v4458
      %v4482 = vunpack.c.l.s4 1983009808
      %v4483 = vunpack.c.0.s8 %v4482
      %v4484 = vlaneseq
      %v4485 = vshrl.u32 %v4484, 7
      %v4486 = vsub.s32 %v4483, %v4485
      %v4487 = vrot.slane %v4479, %v4486
      %v4489 = vunpack.c.l.s4 1983009808
      %v4490 = vunpack.c.0.s8 %v4489
      %v4491 = vlaneseq
      %v4492 = vshrl.u32 %v4491, 7
      %v4493 = vsub.s32 %v4490, %v4492
      %v4494 = vrot.slane %v4480, %v4493
      %v4495 = vcombine.low %v4487, %v4494
      %v4496 = vcombine.low %v4461, %v4464
      %v4497 = vcombine.low %v4467, %v4470
      %v4499 = vunpack.c.l.s4 1983009808
      %v4500 = vunpack.c.0.s8 %v4499
      %v4501 = vlaneseq
      %v4502 = vshrl.u32 %v4501, 7
      %v4503 = vsub.s32 %v4500, %v4502
      %v4504 = vrot.slane %v4496, %v4503
      %v4506 = vunpack.c.l.s4 1983009808
      %v4507 = vunpack.c.0.s8 %v4506
      %v4508 = vlaneseq
      %v4509 = vshrl.u32 %v4508, 7
      %v4510 = vsub.s32 %v4507, %v4509
      %v4511 = vrot.slane %v4497, %v4510
      %v4512 = vcombine.low %v4504, %v4511
      %v4515 = vadd.f32 %v3260, %v4495
      %v4516 = vadd.f32 %v3261, %v4512
      %v4521 = vcombine.high %v3242, %v3242
      %v4523 = vunpack.c.l.s4 1983009808
      %v4524 = vunpack.c.0.s8 %v4523
      %v4525 = vlaneseq
      %v4526 = vshrl.u32 %v4525, 7
      %v4527 = vsub.s32 %v4524, %v4526
      %v4528 = vrot.slane %v3242, %v4527
      %v4530 = vunpack.c.l.s4 1983009808
      %v4531 = vunpack.c.0.s8 %v4530
      %v4532 = vlaneseq
      %v4533 = vshrl.u32 %v4532, 7
      %v4534 = vsub.s32 %v4531, %v4533
      %v4535 = vrot.slane %v4521, %v4534
      %v4536 = vcombine.high %v4528, %v4528
      %v4537 = vcombine.high %v4535, %v4535
      %v4538 = vcombine.high %v3247, %v3247
      %v4540 = vunpack.c.l.s4 1983009808
      %v4541 = vunpack.c.0.s8 %v4540
      %v4542 = vlaneseq
      %v4543 = vshrl.u32 %v4542, 7
      %v4544 = vsub.s32 %v4541, %v4543
      %v4545 = vrot.slane %v3247, %v4544
      %v4547 = vunpack.c.l.s4 1983009808
      %v4548 = vunpack.c.0.s8 %v4547
      %v4549 = vlaneseq
      %v4550 = vshrl.u32 %v4549, 7
      %v4551 = vsub.s32 %v4548, %v4550
      %v4552 = vrot.slane %v4538, %v4551
      %v4553 = vcombine.high %v4545, %v4545
      %v4554 = vcombine.high %v4552, %v4552
      %v4555 = vcombine.high %v3252, %v3252
      %v4557 = vunpack.c.l.s4 1983009808
      %v4558 = vunpack.c.0.s8 %v4557
      %v4559 = vlaneseq
      %v4560 = vshrl.u32 %v4559, 7
      %v4561 = vsub.s32 %v4558, %v4560
      %v4562 = vrot.slane %v3252, %v4561
      %v4564 = vunpack.c.l.s4 1983009808
      %v4565 = vunpack.c.0.s8 %v4564
      %v4566 = vlaneseq
      %v4567 = vshrl.u32 %v4566, 7
      %v4568 = vsub.s32 %v4565, %v4567
      %v4569 = vrot.slane %v4555, %v4568
      %v4570 = vcombine.high %v4562, %v4562
      %v4571 = vcombine.high %v4569, %v4569
      %v4572 = vcombine.high %v3257, %v3257
      %v4574 = vunpack.c.l.s4 1983009808
      %v4575 = vunpack.c.0.s8 %v4574
      %v4576 = vlaneseq
      %v4577 = vshrl.u32 %v4576, 7
      %v4578 = vsub.s32 %v4575, %v4577
      %v4579 = vrot.slane %v3257, %v4578
      %v4581 = vunpack.c.l.s4 1983009808
      %v4582 = vunpack.c.0.s8 %v4581
      %v4583 = vlaneseq
      %v4584 = vshrl.u32 %v4583, 7
      %v4585 = vsub.s32 %v4582, %v4584
      %v4586 = vrot.slane %v4572, %v4585
      %v4587 = vcombine.high %v4579, %v4579
      %v4588 = vcombine.high %v4586, %v4586
      %v4589 = vld [vmem:[#allocation3] sm:$0xff]
      %v4590 = vld [vmem:[#allocation3 + $0x8] sm:$0xff]
      %v4591 = vld [vmem:[#allocation3 + $0x10] sm:$0xff]
      %v4592 = vld [vmem:[#allocation3 + $0x18] sm:$0xff]
      %v4593 = vld [vmem:[#allocation3 + $0x20] sm:$0xff]
      %v4594 = vld [vmem:[#allocation3 + $0x28] sm:$0xff]
      %v4595 = vld [vmem:[#allocation3 + $0x30] sm:$0xff]
      %v4596 = vld [vmem:[#allocation3 + $0x38] sm:$0xff]
      %v4597 = vld [vmem:[#allocation3 + $0x40] sm:$0xff]
      %v4598 = vld [vmem:[#allocation3 + $0x48] sm:$0xff]
      %v4599 = vld [vmem:[#allocation3 + $0x50] sm:$0xff]
      %v4600 = vld [vmem:[#allocation3 + $0x58] sm:$0xff]
      %v4601 = vld [vmem:[#allocation3 + $0x60] sm:$0xff]
      %v4602 = vld [vmem:[#allocation3 + $0x68] sm:$0xff]
      %v4603 = vld [vmem:[#allocation3 + $0x70] sm:$0xff]
      %v4604 = vld [vmem:[#allocation3 + $0x78] sm:$0xff]
      %v4605 = vld [vmem:[#allocation3 + $0x80] sm:$0xff]
      %v4606 = vld [vmem:[#allocation3 + $0x88] sm:$0xff]
      %v4607 = vld [vmem:[#allocation3 + $0x90] sm:$0xff]
      %v4608 = vld [vmem:[#allocation3 + $0x98] sm:$0xff]
      %v4609 = vld [vmem:[#allocation3 + $0xa0] sm:$0xff]
      %v4610 = vld [vmem:[#allocation3 + $0xa8] sm:$0xff]
      %v4611 = vld [vmem:[#allocation3 + $0xb0] sm:$0xff]
      %v4612 = vld [vmem:[#allocation3 + $0xb8] sm:$0xff]
      %v4613 = vld [vmem:[#allocation3 + $0xc0] sm:$0xff]
      %v4614 = vld [vmem:[#allocation3 + $0xc8] sm:$0xff]
      %v4615 = vld [vmem:[#allocation3 + $0xd0] sm:$0xff]
      %v4616 = vld [vmem:[#allocation3 + $0xd8] sm:$0xff]
      %v4617 = vld [vmem:[#allocation3 + $0xe0] sm:$0xff]
      %v4618 = vld [vmem:[#allocation3 + $0xe8] sm:$0xff]
      %v4619 = vld [vmem:[#allocation3 + $0xf0] sm:$0xff]
      %v4620 = vld [vmem:[#allocation3 + $0xf8] sm:$0xff]
      %v4621 = vsel %vm74, %v4528, 0
      %4623 = vmatprep.subr.mxu0 0.0
      %4624 = vmatpush1.msra.mxu0 0.0
      %4625 = vmatprep.subr.mxu0 0.0
      %4626 = vmatpush1.msra.mxu0 0.0
      %4627 = vmatprep.subr.mxu0 0.0
      %4628 = vmatpush1.msra.mxu0 0.0
      %4629 = vmatprep.subr.mxu0 0.0
      %4630 = vmatpush1.msra.mxu0 0.0
      %4631 = vmatprep.subr.mxu0 0.0
      %4632 = vmatpush1.msra.mxu0 0.0
      %4633 = vmatprep.subr.mxu0 0.0
      %4634 = vmatpush1.msra.mxu0 0.0
      %4635 = vmatprep.subr.mxu0 0.0
      %4636 = vmatpush1.msra.mxu0 0.0
      %4637 = vmatprep.subr.mxu0 0.0
      %4638 = vmatpush1.msra.mxu0 0.0
      %4639 = vmatprep.subr.mxu0 0.0
      %4640 = vmatpush1.msra.mxu0 0.0
      %4641 = vmatprep.subr.mxu0 0.0
      %4642 = vmatpush1.msra.mxu0 0.0
      %4643 = vmatprep.subr.mxu0 0.0
      %4644 = vmatpush1.msra.mxu0 0.0
      %4645 = vmatprep.subr.mxu0 0.0
      %4646 = vmatpush1.msra.mxu0 0.0
      %4647 = vmatprep.subr.mxu0 0.0
      %4648 = vmatpush1.msra.mxu0 0.0
      %4649 = vmatprep.subr.mxu0 0.0
      %4650 = vmatpush1.msra.mxu0 0.0
      %4651 = vmatprep.subr.mxu0 0.0
      %4652 = vmatpush1.msra.mxu0 %v4590
      %4653 = vmatprep.subr.mxu0 0.0
      %4654 = vmatpush1.msra.mxu0 %v4589
      %4655 = vmatprep.subr.mxu0 0.0
      %4656 = vmatpush2.msra.mxu0 0.0
      %4657 = vmatprep.subr.mxu0 0.0
      %4658 = vmatpush2.msra.mxu0 0.0
      %4659 = vmatprep.subr.mxu0 0.0
      %4660 = vmatpush2.msra.mxu0 0.0
      %4661 = vmatprep.subr.mxu0 0.0
      %4662 = vmatpush2.msra.mxu0 0.0
      %4663 = vmatprep.subr.mxu0 0.0
      %4664 = vmatpush2.msra.mxu0 0.0
      %4665 = vmatprep.subr.mxu0 0.0
      %4666 = vmatpush2.msra.mxu0 0.0
      %4667 = vmatprep.subr.mxu0 0.0
      %4668 = vmatpush2.msra.mxu0 0.0
      %4669 = vmatprep.subr.mxu0 0.0
      %4670 = vmatpush2.msra.mxu0 0.0
      %4671 = vmatprep.subr.mxu0 0.0
      %4672 = vmatpush2.msra.mxu0 0.0
      %4673 = vmatprep.subr.mxu0 0.0
      %4674 = vmatpush2.msra.mxu0 0.0
      %4675 = vmatprep.subr.mxu0 0.0
      %4676 = vmatpush2.msra.mxu0 0.0
      %4677 = vmatprep.subr.mxu0 0.0
      %4678 = vmatpush2.msra.mxu0 0.0
      %4679 = vmatprep.subr.mxu0 0.0
      %4680 = vmatpush2.msra.mxu0 0.0
      %4681 = vmatprep.subr.mxu0 0.0
      %4682 = vmatpush2.msra.mxu0 0.0
      %4683 = vmatprep.subr.mxu0 0.0
      %4684 = vmatpush2.msra.mxu0 0.0
      %4685 = vmatprep.subr.mxu0 0.0
      %4686 = vmatpush2.msra.mxu0 0.0
      %4687 = vmatprep.mubr.f32.mxu0 0.0
      %4688 = vmatmul.mubr.f32.gmra.mxu0 %v4621
      %v4689 = vpop.f32.mrf.mxu0
      %v4690 = vadd.f32 0.0, %v4689
      %v4691 = vpop.f32.mrf.mxu0
      %4692 = vdwg.mxu0
      %v4693 = vsel %vm74, %v4536, 0
      %4695 = vmatprep.subr.mxu0 0.0
      %4696 = vmatpush1.msra.mxu0 0.0
      %4697 = vmatprep.subr.mxu0 0.0
      %4698 = vmatpush1.msra.mxu0 0.0
      %4699 = vmatprep.subr.mxu0 0.0
      %4700 = vmatpush1.msra.mxu0 0.0
      %4701 = vmatprep.subr.mxu0 0.0
      %4702 = vmatpush1.msra.mxu0 0.0
      %4703 = vmatprep.subr.mxu0 0.0
      %4704 = vmatpush1.msra.mxu0 0.0
      %4705 = vmatprep.subr.mxu0 0.0
      %4706 = vmatpush1.msra.mxu0 0.0
      %4707 = vmatprep.subr.mxu0 0.0
      %4708 = vmatpush1.msra.mxu0 0.0
      %4709 = vmatprep.subr.mxu0 0.0
      %4710 = vmatpush1.msra.mxu0 0.0
      %4711 = vmatprep.subr.mxu0 0.0
      %4712 = vmatpush1.msra.mxu0 0.0
      %4713 = vmatprep.subr.mxu0 0.0
      %4714 = vmatpush1.msra.mxu0 0.0
      %4715 = vmatprep.subr.mxu0 0.0
      %4716 = vmatpush1.msra.mxu0 0.0
      %4717 = vmatprep.subr.mxu0 0.0
      %4718 = vmatpush1.msra.mxu0 0.0
      %4719 = vmatprep.subr.mxu0 0.0
      %4720 = vmatpush1.msra.mxu0 0.0
      %4721 = vmatprep.subr.mxu0 0.0
      %4722 = vmatpush1.msra.mxu0 0.0
      %4723 = vmatprep.subr.mxu0 0.0
      %4724 = vmatpush1.msra.mxu0 %v4592
      %4725 = vmatprep.subr.mxu0 0.0
      %4726 = vmatpush1.msra.mxu0 %v4591
      %4727 = vmatprep.subr.mxu0 0.0
      %4728 = vmatpush2.msra.mxu0 0.0
      %4729 = vmatprep.subr.mxu0 0.0
      %4730 = vmatpush2.msra.mxu0 0.0
      %4731 = vmatprep.subr.mxu0 0.0
      %4732 = vmatpush2.msra.mxu0 0.0
      %4733 = vmatprep.subr.mxu0 0.0
      %4734 = vmatpush2.msra.mxu0 0.0
      %4735 = vmatprep.subr.mxu0 0.0
      %4736 = vmatpush2.msra.mxu0 0.0
      %4737 = vmatprep.subr.mxu0 0.0
      %4738 = vmatpush2.msra.mxu0 0.0
      %4739 = vmatprep.subr.mxu0 0.0
      %4740 = vmatpush2.msra.mxu0 0.0
      %4741 = vmatprep.subr.mxu0 0.0
      %4742 = vmatpush2.msra.mxu0 0.0
      %4743 = vmatprep.subr.mxu0 0.0
      %4744 = vmatpush2.msra.mxu0 0.0
      %4745 = vmatprep.subr.mxu0 0.0
      %4746 = vmatpush2.msra.mxu0 0.0
      %4747 = vmatprep.subr.mxu0 0.0
      %4748 = vmatpush2.msra.mxu0 0.0
      %4749 = vmatprep.subr.mxu0 0.0
      %4750 = vmatpush2.msra.mxu0 0.0
      %4751 = vmatprep.subr.mxu0 0.0
      %4752 = vmatpush2.msra.mxu0 0.0
      %4753 = vmatprep.subr.mxu0 0.0
      %4754 = vmatpush2.msra.mxu0 0.0
      %4755 = vmatprep.subr.mxu0 0.0
      %4756 = vmatpush2.msra.mxu0 0.0
      %4757 = vmatprep.subr.mxu0 0.0
      %4758 = vmatpush2.msra.mxu0 0.0
      %4759 = vmatprep.mubr.f32.mxu0 0.0
      %4760 = vmatmul.mubr.f32.gmra.mxu0 %v4693
      %v4761 = vpop.f32.mrf.mxu0
      %v4762 = vadd.f32 0.0, %v4761
      %v4763 = vpop.f32.mrf.mxu0
      %4764 = vdwg.mxu0
      %v4765 = vsel %vm74, %v4535, 0
      %4767 = vmatprep.subr.mxu0 0.0
      %4768 = vmatpush1.msra.mxu0 0.0
      %4769 = vmatprep.subr.mxu0 0.0
      %4770 = vmatpush1.msra.mxu0 0.0
      %4771 = vmatprep.subr.mxu0 0.0
      %4772 = vmatpush1.msra.mxu0 0.0
      %4773 = vmatprep.subr.mxu0 0.0
      %4774 = vmatpush1.msra.mxu0 0.0
      %4775 = vmatprep.subr.mxu0 0.0
      %4776 = vmatpush1.msra.mxu0 0.0
      %4777 = vmatprep.subr.mxu0 0.0
      %4778 = vmatpush1.msra.mxu0 0.0
      %4779 = vmatprep.subr.mxu0 0.0
      %4780 = vmatpush1.msra.mxu0 0.0
      %4781 = vmatprep.subr.mxu0 0.0
      %4782 = vmatpush1.msra.mxu0 0.0
      %4783 = vmatprep.subr.mxu0 0.0
      %4784 = vmatpush1.msra.mxu0 0.0
      %4785 = vmatprep.subr.mxu0 0.0
      %4786 = vmatpush1.msra.mxu0 0.0
      %4787 = vmatprep.subr.mxu0 0.0
      %4788 = vmatpush1.msra.mxu0 0.0
      %4789 = vmatprep.subr.mxu0 0.0
      %4790 = vmatpush1.msra.mxu0 0.0
      %4791 = vmatprep.subr.mxu0 0.0
      %4792 = vmatpush1.msra.mxu0 0.0
      %4793 = vmatprep.subr.mxu0 0.0
      %4794 = vmatpush1.msra.mxu0 0.0
      %4795 = vmatprep.subr.mxu0 0.0
      %4796 = vmatpush1.msra.mxu0 %v4594
      %4797 = vmatprep.subr.mxu0 0.0
      %4798 = vmatpush1.msra.mxu0 %v4593
      %4799 = vmatprep.subr.mxu0 0.0
      %4800 = vmatpush2.msra.mxu0 0.0
      %4801 = vmatprep.subr.mxu0 0.0
      %4802 = vmatpush2.msra.mxu0 0.0
      %4803 = vmatprep.subr.mxu0 0.0
      %4804 = vmatpush2.msra.mxu0 0.0
      %4805 = vmatprep.subr.mxu0 0.0
      %4806 = vmatpush2.msra.mxu0 0.0
      %4807 = vmatprep.subr.mxu0 0.0
      %4808 = vmatpush2.msra.mxu0 0.0
      %4809 = vmatprep.subr.mxu0 0.0
      %4810 = vmatpush2.msra.mxu0 0.0
      %4811 = vmatprep.subr.mxu0 0.0
      %4812 = vmatpush2.msra.mxu0 0.0
      %4813 = vmatprep.subr.mxu0 0.0
      %4814 = vmatpush2.msra.mxu0 0.0
      %4815 = vmatprep.subr.mxu0 0.0
      %4816 = vmatpush2.msra.mxu0 0.0
      %4817 = vmatprep.subr.mxu0 0.0
      %4818 = vmatpush2.msra.mxu0 0.0
      %4819 = vmatprep.subr.mxu0 0.0
      %4820 = vmatpush2.msra.mxu0 0.0
      %4821 = vmatprep.subr.mxu0 0.0
      %4822 = vmatpush2.msra.mxu0 0.0
      %4823 = vmatprep.subr.mxu0 0.0
      %4824 = vmatpush2.msra.mxu0 0.0
      %4825 = vmatprep.subr.mxu0 0.0
      %4826 = vmatpush2.msra.mxu0 0.0
      %4827 = vmatprep.subr.mxu0 0.0
      %4828 = vmatpush2.msra.mxu0 0.0
      %4829 = vmatprep.subr.mxu0 0.0
      %4830 = vmatpush2.msra.mxu0 0.0
      %4831 = vmatprep.mubr.f32.mxu0 0.0
      %4832 = vmatmul.mubr.f32.gmra.mxu0 %v4765
      %v4833 = vpop.f32.mrf.mxu0
      %v4834 = vadd.f32 0.0, %v4833
      %v4835 = vpop.f32.mrf.mxu0
      %4836 = vdwg.mxu0
      %v4837 = vsel %vm74, %v4537, 0
      %4839 = vmatprep.subr.mxu0 0.0
      %4840 = vmatpush1.msra.mxu0 0.0
      %4841 = vmatprep.subr.mxu0 0.0
      %4842 = vmatpush1.msra.mxu0 0.0
      %4843 = vmatprep.subr.mxu0 0.0
      %4844 = vmatpush1.msra.mxu0 0.0
      %4845 = vmatprep.subr.mxu0 0.0
      %4846 = vmatpush1.msra.mxu0 0.0
      %4847 = vmatprep.subr.mxu0 0.0
      %4848 = vmatpush1.msra.mxu0 0.0
      %4849 = vmatprep.subr.mxu0 0.0
      %4850 = vmatpush1.msra.mxu0 0.0
      %4851 = vmatprep.subr.mxu0 0.0
      %4852 = vmatpush1.msra.mxu0 0.0
      %4853 = vmatprep.subr.mxu0 0.0
      %4854 = vmatpush1.msra.mxu0 0.0
      %4855 = vmatprep.subr.mxu0 0.0
      %4856 = vmatpush1.msra.mxu0 0.0
      %4857 = vmatprep.subr.mxu0 0.0
      %4858 = vmatpush1.msra.mxu0 0.0
      %4859 = vmatprep.subr.mxu0 0.0
      %4860 = vmatpush1.msra.mxu0 0.0
      %4861 = vmatprep.subr.mxu0 0.0
      %4862 = vmatpush1.msra.mxu0 0.0
      %4863 = vmatprep.subr.mxu0 0.0
      %4864 = vmatpush1.msra.mxu0 0.0
      %4865 = vmatprep.subr.mxu0 0.0
      %4866 = vmatpush1.msra.mxu0 0.0
      %4867 = vmatprep.subr.mxu0 0.0
      %4868 = vmatpush1.msra.mxu0 %v4596
      %4869 = vmatprep.subr.mxu0 0.0
      %4870 = vmatpush1.msra.mxu0 %v4595
      %4871 = vmatprep.subr.mxu0 0.0
      %4872 = vmatpush2.msra.mxu0 0.0
      %4873 = vmatprep.subr.mxu0 0.0
      %4874 = vmatpush2.msra.mxu0 0.0
      %4875 = vmatprep.subr.mxu0 0.0
      %4876 = vmatpush2.msra.mxu0 0.0
      %4877 = vmatprep.subr.mxu0 0.0
      %4878 = vmatpush2.msra.mxu0 0.0
      %4879 = vmatprep.subr.mxu0 0.0
      %4880 = vmatpush2.msra.mxu0 0.0
      %4881 = vmatprep.subr.mxu0 0.0
      %4882 = vmatpush2.msra.mxu0 0.0
      %4883 = vmatprep.subr.mxu0 0.0
      %4884 = vmatpush2.msra.mxu0 0.0
      %4885 = vmatprep.subr.mxu0 0.0
      %4886 = vmatpush2.msra.mxu0 0.0
      %4887 = vmatprep.subr.mxu0 0.0
      %4888 = vmatpush2.msra.mxu0 0.0
      %4889 = vmatprep.subr.mxu0 0.0
      %4890 = vmatpush2.msra.mxu0 0.0
      %4891 = vmatprep.subr.mxu0 0.0
      %4892 = vmatpush2.msra.mxu0 0.0
      %4893 = vmatprep.subr.mxu0 0.0
      %4894 = vmatpush2.msra.mxu0 0.0
      %4895 = vmatprep.subr.mxu0 0.0
      %4896 = vmatpush2.msra.mxu0 0.0
      %4897 = vmatprep.subr.mxu0 0.0
      %4898 = vmatpush2.msra.mxu0 0.0
      %4899 = vmatprep.subr.mxu0 0.0
      %4900 = vmatpush2.msra.mxu0 0.0
      %4901 = vmatprep.subr.mxu0 0.0
      %4902 = vmatpush2.msra.mxu0 0.0
      %4903 = vmatprep.mubr.f32.mxu0 0.0
      %4904 = vmatmul.mubr.f32.gmra.mxu0 %v4837
      %v4905 = vpop.f32.mrf.mxu0
      %v4906 = vadd.f32 0.0, %v4905
      %v4907 = vpop.f32.mrf.mxu0
      %4908 = vdwg.mxu0
      %v4909 = vsel %vm74, %v4545, 0
      %4911 = vmatprep.subr.mxu0 0.0
      %4912 = vmatpush1.msra.mxu0 0.0
      %4913 = vmatprep.subr.mxu0 0.0
      %4914 = vmatpush1.msra.mxu0 0.0
      %4915 = vmatprep.subr.mxu0 0.0
      %4916 = vmatpush1.msra.mxu0 0.0
      %4917 = vmatprep.subr.mxu0 0.0
      %4918 = vmatpush1.msra.mxu0 0.0
      %4919 = vmatprep.subr.mxu0 0.0
      %4920 = vmatpush1.msra.mxu0 0.0
      %4921 = vmatprep.subr.mxu0 0.0
      %4922 = vmatpush1.msra.mxu0 0.0
      %4923 = vmatprep.subr.mxu0 0.0
      %4924 = vmatpush1.msra.mxu0 0.0
      %4925 = vmatprep.subr.mxu0 0.0
      %4926 = vmatpush1.msra.mxu0 0.0
      %4927 = vmatprep.subr.mxu0 0.0
      %4928 = vmatpush1.msra.mxu0 0.0
      %4929 = vmatprep.subr.mxu0 0.0
      %4930 = vmatpush1.msra.mxu0 0.0
      %4931 = vmatprep.subr.mxu0 0.0
      %4932 = vmatpush1.msra.mxu0 0.0
      %4933 = vmatprep.subr.mxu0 0.0
      %4934 = vmatpush1.msra.mxu0 0.0
      %4935 = vmatprep.subr.mxu0 0.0
      %4936 = vmatpush1.msra.mxu0 0.0
      %4937 = vmatprep.subr.mxu0 0.0
      %4938 = vmatpush1.msra.mxu0 0.0
      %4939 = vmatprep.subr.mxu0 0.0
      %4940 = vmatpush1.msra.mxu0 %v4598
      %4941 = vmatprep.subr.mxu0 0.0
      %4942 = vmatpush1.msra.mxu0 %v4597
      %4943 = vmatprep.subr.mxu0 0.0
      %4944 = vmatpush2.msra.mxu0 0.0
      %4945 = vmatprep.subr.mxu0 0.0
      %4946 = vmatpush2.msra.mxu0 0.0
      %4947 = vmatprep.subr.mxu0 0.0
      %4948 = vmatpush2.msra.mxu0 0.0
      %4949 = vmatprep.subr.mxu0 0.0
      %4950 = vmatpush2.msra.mxu0 0.0
      %4951 = vmatprep.subr.mxu0 0.0
      %4952 = vmatpush2.msra.mxu0 0.0
      %4953 = vmatprep.subr.mxu0 0.0
      %4954 = vmatpush2.msra.mxu0 0.0
      %4955 = vmatprep.subr.mxu0 0.0
      %4956 = vmatpush2.msra.mxu0 0.0
      %4957 = vmatprep.subr.mxu0 0.0
      %4958 = vmatpush2.msra.mxu0 0.0
      %4959 = vmatprep.subr.mxu0 0.0
      %4960 = vmatpush2.msra.mxu0 0.0
      %4961 = vmatprep.subr.mxu0 0.0
      %4962 = vmatpush2.msra.mxu0 0.0
      %4963 = vmatprep.subr.mxu0 0.0
      %4964 = vmatpush2.msra.mxu0 0.0
      %4965 = vmatprep.subr.mxu0 0.0
      %4966 = vmatpush2.msra.mxu0 0.0
      %4967 = vmatprep.subr.mxu0 0.0
      %4968 = vmatpush2.msra.mxu0 0.0
      %4969 = vmatprep.subr.mxu0 0.0
      %4970 = vmatpush2.msra.mxu0 0.0
      %4971 = vmatprep.subr.mxu0 0.0
      %4972 = vmatpush2.msra.mxu0 0.0
      %4973 = vmatprep.subr.mxu0 0.0
      %4974 = vmatpush2.msra.mxu0 0.0
      %4975 = vmatprep.mubr.f32.mxu0 0.0
      %4976 = vmatmul.mubr.f32.gmra.mxu0 %v4909
      %v4977 = vpop.f32.mrf.mxu0
      %v4978 = vadd.f32 0.0, %v4977
      %v4979 = vpop.f32.mrf.mxu0
      %4980 = vdwg.mxu0
      %v4981 = vsel %vm74, %v4553, 0
      %4983 = vmatprep.subr.mxu0 0.0
      %4984 = vmatpush1.msra.mxu0 0.0
      %4985 = vmatprep.subr.mxu0 0.0
      %4986 = vmatpush1.msra.mxu0 0.0
      %4987 = vmatprep.subr.mxu0 0.0
      %4988 = vmatpush1.msra.mxu0 0.0
      %4989 = vmatprep.subr.mxu0 0.0
      %4990 = vmatpush1.msra.mxu0 0.0
      %4991 = vmatprep.subr.mxu0 0.0
      %4992 = vmatpush1.msra.mxu0 0.0
      %4993 = vmatprep.subr.mxu0 0.0
      %4994 = vmatpush1.msra.mxu0 0.0
      %4995 = vmatprep.subr.mxu0 0.0
      %4996 = vmatpush1.msra.mxu0 0.0
      %4997 = vmatprep.subr.mxu0 0.0
      %4998 = vmatpush1.msra.mxu0 0.0
      %4999 = vmatprep.subr.mxu0 0.0
      %5000 = vmatpush1.msra.mxu0 0.0
      %5001 = vmatprep.subr.mxu0 0.0
      %5002 = vmatpush1.msra.mxu0 0.0
      %5003 = vmatprep.subr.mxu0 0.0
      %5004 = vmatpush1.msra.mxu0 0.0
      %5005 = vmatprep.subr.mxu0 0.0
      %5006 = vmatpush1.msra.mxu0 0.0
      %5007 = vmatprep.subr.mxu0 0.0
      %5008 = vmatpush1.msra.mxu0 0.0
      %5009 = vmatprep.subr.mxu0 0.0
      %5010 = vmatpush1.msra.mxu0 0.0
      %5011 = vmatprep.subr.mxu0 0.0
      %5012 = vmatpush1.msra.mxu0 %v4600
      %5013 = vmatprep.subr.mxu0 0.0
      %5014 = vmatpush1.msra.mxu0 %v4599
      %5015 = vmatprep.subr.mxu0 0.0
      %5016 = vmatpush2.msra.mxu0 0.0
      %5017 = vmatprep.subr.mxu0 0.0
      %5018 = vmatpush2.msra.mxu0 0.0
      %5019 = vmatprep.subr.mxu0 0.0
      %5020 = vmatpush2.msra.mxu0 0.0
      %5021 = vmatprep.subr.mxu0 0.0
      %5022 = vmatpush2.msra.mxu0 0.0
      %5023 = vmatprep.subr.mxu0 0.0
      %5024 = vmatpush2.msra.mxu0 0.0
      %5025 = vmatprep.subr.mxu0 0.0
      %5026 = vmatpush2.msra.mxu0 0.0
      %5027 = vmatprep.subr.mxu0 0.0
      %5028 = vmatpush2.msra.mxu0 0.0
      %5029 = vmatprep.subr.mxu0 0.0
      %5030 = vmatpush2.msra.mxu0 0.0
      %5031 = vmatprep.subr.mxu0 0.0
      %5032 = vmatpush2.msra.mxu0 0.0
      %5033 = vmatprep.subr.mxu0 0.0
      %5034 = vmatpush2.msra.mxu0 0.0
      %5035 = vmatprep.subr.mxu0 0.0
      %5036 = vmatpush2.msra.mxu0 0.0
      %5037 = vmatprep.subr.mxu0 0.0
      %5038 = vmatpush2.msra.mxu0 0.0
      %5039 = vmatprep.subr.mxu0 0.0
      %5040 = vmatpush2.msra.mxu0 0.0
      %5041 = vmatprep.subr.mxu0 0.0
      %5042 = vmatpush2.msra.mxu0 0.0
      %5043 = vmatprep.subr.mxu0 0.0
      %5044 = vmatpush2.msra.mxu0 0.0
      %5045 = vmatprep.subr.mxu0 0.0
      %5046 = vmatpush2.msra.mxu0 0.0
      %5047 = vmatprep.mubr.f32.mxu0 0.0
      %5048 = vmatmul.mubr.f32.gmra.mxu0 %v4981
      %v5049 = vpop.f32.mrf.mxu0
      %v5050 = vadd.f32 0.0, %v5049
      %v5051 = vpop.f32.mrf.mxu0
      %5052 = vdwg.mxu0
      %v5053 = vsel %vm74, %v4552, 0
      %5055 = vmatprep.subr.mxu0 0.0
      %5056 = vmatpush1.msra.mxu0 0.0
      %5057 = vmatprep.subr.mxu0 0.0
      %5058 = vmatpush1.msra.mxu0 0.0
      %5059 = vmatprep.subr.mxu0 0.0
      %5060 = vmatpush1.msra.mxu0 0.0
      %5061 = vmatprep.subr.mxu0 0.0
      %5062 = vmatpush1.msra.mxu0 0.0
      %5063 = vmatprep.subr.mxu0 0.0
      %5064 = vmatpush1.msra.mxu0 0.0
      %5065 = vmatprep.subr.mxu0 0.0
      %5066 = vmatpush1.msra.mxu0 0.0
      %5067 = vmatprep.subr.mxu0 0.0
      %5068 = vmatpush1.msra.mxu0 0.0
      %5069 = vmatprep.subr.mxu0 0.0
      %5070 = vmatpush1.msra.mxu0 0.0
      %5071 = vmatprep.subr.mxu0 0.0
      %5072 = vmatpush1.msra.mxu0 0.0
      %5073 = vmatprep.subr.mxu0 0.0
      %5074 = vmatpush1.msra.mxu0 0.0
      %5075 = vmatprep.subr.mxu0 0.0
      %5076 = vmatpush1.msra.mxu0 0.0
      %5077 = vmatprep.subr.mxu0 0.0
      %5078 = vmatpush1.msra.mxu0 0.0
      %5079 = vmatprep.subr.mxu0 0.0
      %5080 = vmatpush1.msra.mxu0 0.0
      %5081 = vmatprep.subr.mxu0 0.0
      %5082 = vmatpush1.msra.mxu0 0.0
      %5083 = vmatprep.subr.mxu0 0.0
      %5084 = vmatpush1.msra.mxu0 %v4602
      %5085 = vmatprep.subr.mxu0 0.0
      %5086 = vmatpush1.msra.mxu0 %v4601
      %5087 = vmatprep.subr.mxu0 0.0
      %5088 = vmatpush2.msra.mxu0 0.0
      %5089 = vmatprep.subr.mxu0 0.0
      %5090 = vmatpush2.msra.mxu0 0.0
      %5091 = vmatprep.subr.mxu0 0.0
      %5092 = vmatpush2.msra.mxu0 0.0
      %5093 = vmatprep.subr.mxu0 0.0
      %5094 = vmatpush2.msra.mxu0 0.0
      %5095 = vmatprep.subr.mxu0 0.0
      %5096 = vmatpush2.msra.mxu0 0.0
      %5097 = vmatprep.subr.mxu0 0.0
      %5098 = vmatpush2.msra.mxu0 0.0
      %5099 = vmatprep.subr.mxu0 0.0
      %5100 = vmatpush2.msra.mxu0 0.0
      %5101 = vmatprep.subr.mxu0 0.0
      %5102 = vmatpush2.msra.mxu0 0.0
      %5103 = vmatprep.subr.mxu0 0.0
      %5104 = vmatpush2.msra.mxu0 0.0
      %5105 = vmatprep.subr.mxu0 0.0
      %5106 = vmatpush2.msra.mxu0 0.0
      %5107 = vmatprep.subr.mxu0 0.0
      %5108 = vmatpush2.msra.mxu0 0.0
      %5109 = vmatprep.subr.mxu0 0.0
      %5110 = vmatpush2.msra.mxu0 0.0
      %5111 = vmatprep.subr.mxu0 0.0
      %5112 = vmatpush2.msra.mxu0 0.0
      %5113 = vmatprep.subr.mxu0 0.0
      %5114 = vmatpush2.msra.mxu0 0.0
      %5115 = vmatprep.subr.mxu0 0.0
      %5116 = vmatpush2.msra.mxu0 0.0
      %5117 = vmatprep.subr.mxu0 0.0
      %5118 = vmatpush2.msra.mxu0 0.0
      %5119 = vmatprep.mubr.f32.mxu0 0.0
      %5120 = vmatmul.mubr.f32.gmra.mxu0 %v5053
      %v5121 = vpop.f32.mrf.mxu0
      %v5122 = vadd.f32 0.0, %v5121
      %v5123 = vpop.f32.mrf.mxu0
      %5124 = vdwg.mxu0
      %v5125 = vsel %vm74, %v4554, 0
      %5127 = vmatprep.subr.mxu0 0.0
      %5128 = vmatpush1.msra.mxu0 0.0
      %5129 = vmatprep.subr.mxu0 0.0
      %5130 = vmatpush1.msra.mxu0 0.0
      %5131 = vmatprep.subr.mxu0 0.0
      %5132 = vmatpush1.msra.mxu0 0.0
      %5133 = vmatprep.subr.mxu0 0.0
      %5134 = vmatpush1.msra.mxu0 0.0
      %5135 = vmatprep.subr.mxu0 0.0
      %5136 = vmatpush1.msra.mxu0 0.0
      %5137 = vmatprep.subr.mxu0 0.0
      %5138 = vmatpush1.msra.mxu0 0.0
      %5139 = vmatprep.subr.mxu0 0.0
      %5140 = vmatpush1.msra.mxu0 0.0
      %5141 = vmatprep.subr.mxu0 0.0
      %5142 = vmatpush1.msra.mxu0 0.0
      %5143 = vmatprep.subr.mxu0 0.0
      %5144 = vmatpush1.msra.mxu0 0.0
      %5145 = vmatprep.subr.mxu0 0.0
      %5146 = vmatpush1.msra.mxu0 0.0
      %5147 = vmatprep.subr.mxu0 0.0
      %5148 = vmatpush1.msra.mxu0 0.0
      %5149 = vmatprep.subr.mxu0 0.0
      %5150 = vmatpush1.msra.mxu0 0.0
      %5151 = vmatprep.subr.mxu0 0.0
      %5152 = vmatpush1.msra.mxu0 0.0
      %5153 = vmatprep.subr.mxu0 0.0
      %5154 = vmatpush1.msra.mxu0 0.0
      %5155 = vmatprep.subr.mxu0 0.0
      %5156 = vmatpush1.msra.mxu0 %v4604
      %5157 = vmatprep.subr.mxu0 0.0
      %5158 = vmatpush1.msra.mxu0 %v4603
      %5159 = vmatprep.subr.mxu0 0.0
      %5160 = vmatpush2.msra.mxu0 0.0
      %5161 = vmatprep.subr.mxu0 0.0
      %5162 = vmatpush2.msra.mxu0 0.0
      %5163 = vmatprep.subr.mxu0 0.0
      %5164 = vmatpush2.msra.mxu0 0.0
      %5165 = vmatprep.subr.mxu0 0.0
      %5166 = vmatpush2.msra.mxu0 0.0
      %5167 = vmatprep.subr.mxu0 0.0
      %5168 = vmatpush2.msra.mxu0 0.0
      %5169 = vmatprep.subr.mxu0 0.0
      %5170 = vmatpush2.msra.mxu0 0.0
      %5171 = vmatprep.subr.mxu0 0.0
      %5172 = vmatpush2.msra.mxu0 0.0
      %5173 = vmatprep.subr.mxu0 0.0
      %5174 = vmatpush2.msra.mxu0 0.0
      %5175 = vmatprep.subr.mxu0 0.0
      %5176 = vmatpush2.msra.mxu0 0.0
      %5177 = vmatprep.subr.mxu0 0.0
      %5178 = vmatpush2.msra.mxu0 0.0
      %5179 = vmatprep.subr.mxu0 0.0
      %5180 = vmatpush2.msra.mxu0 0.0
      %5181 = vmatprep.subr.mxu0 0.0
      %5182 = vmatpush2.msra.mxu0 0.0
      %5183 = vmatprep.subr.mxu0 0.0
      %5184 = vmatpush2.msra.mxu0 0.0
      %5185 = vmatprep.subr.mxu0 0.0
      %5186 = vmatpush2.msra.mxu0 0.0
      %5187 = vmatprep.subr.mxu0 0.0
      %5188 = vmatpush2.msra.mxu0 0.0
      %5189 = vmatprep.subr.mxu0 0.0
      %5190 = vmatpush2.msra.mxu0 0.0
      %5191 = vmatprep.mubr.f32.mxu0 0.0
      %5192 = vmatmul.mubr.f32.gmra.mxu0 %v5125
      %v5193 = vpop.f32.mrf.mxu0
      %v5194 = vadd.f32 0.0, %v5193
      %v5195 = vpop.f32.mrf.mxu0
      %5196 = vdwg.mxu0
      %v5197 = vsel %vm74, %v4562, 0
      %5199 = vmatprep.subr.mxu0 0.0
      %5200 = vmatpush1.msra.mxu0 0.0
      %5201 = vmatprep.subr.mxu0 0.0
      %5202 = vmatpush1.msra.mxu0 0.0
      %5203 = vmatprep.subr.mxu0 0.0
      %5204 = vmatpush1.msra.mxu0 0.0
      %5205 = vmatprep.subr.mxu0 0.0
      %5206 = vmatpush1.msra.mxu0 0.0
      %5207 = vmatprep.subr.mxu0 0.0
      %5208 = vmatpush1.msra.mxu0 0.0
      %5209 = vmatprep.subr.mxu0 0.0
      %5210 = vmatpush1.msra.mxu0 0.0
      %5211 = vmatprep.subr.mxu0 0.0
      %5212 = vmatpush1.msra.mxu0 0.0
      %5213 = vmatprep.subr.mxu0 0.0
      %5214 = vmatpush1.msra.mxu0 0.0
      %5215 = vmatprep.subr.mxu0 0.0
      %5216 = vmatpush1.msra.mxu0 0.0
      %5217 = vmatprep.subr.mxu0 0.0
      %5218 = vmatpush1.msra.mxu0 0.0
      %5219 = vmatprep.subr.mxu0 0.0
      %5220 = vmatpush1.msra.mxu0 0.0
      %5221 = vmatprep.subr.mxu0 0.0
      %5222 = vmatpush1.msra.mxu0 0.0
      %5223 = vmatprep.subr.mxu0 0.0
      %5224 = vmatpush1.msra.mxu0 0.0
      %5225 = vmatprep.subr.mxu0 0.0
      %5226 = vmatpush1.msra.mxu0 0.0
      %5227 = vmatprep.subr.mxu0 0.0
      %5228 = vmatpush1.msra.mxu0 %v4606
      %5229 = vmatprep.subr.mxu0 0.0
      %5230 = vmatpush1.msra.mxu0 %v4605
      %5231 = vmatprep.subr.mxu0 0.0
      %5232 = vmatpush2.msra.mxu0 0.0
      %5233 = vmatprep.subr.mxu0 0.0
      %5234 = vmatpush2.msra.mxu0 0.0
      %5235 = vmatprep.subr.mxu0 0.0
      %5236 = vmatpush2.msra.mxu0 0.0
      %5237 = vmatprep.subr.mxu0 0.0
      %5238 = vmatpush2.msra.mxu0 0.0
      %5239 = vmatprep.subr.mxu0 0.0
      %5240 = vmatpush2.msra.mxu0 0.0
      %5241 = vmatprep.subr.mxu0 0.0
      %5242 = vmatpush2.msra.mxu0 0.0
      %5243 = vmatprep.subr.mxu0 0.0
      %5244 = vmatpush2.msra.mxu0 0.0
      %5245 = vmatprep.subr.mxu0 0.0
      %5246 = vmatpush2.msra.mxu0 0.0
      %5247 = vmatprep.subr.mxu0 0.0
      %5248 = vmatpush2.msra.mxu0 0.0
      %5249 = vmatprep.subr.mxu0 0.0
      %5250 = vmatpush2.msra.mxu0 0.0
      %5251 = vmatprep.subr.mxu0 0.0
      %5252 = vmatpush2.msra.mxu0 0.0
      %5253 = vmatprep.subr.mxu0 0.0
      %5254 = vmatpush2.msra.mxu0 0.0
      %5255 = vmatprep.subr.mxu0 0.0
      %5256 = vmatpush2.msra.mxu0 0.0
      %5257 = vmatprep.subr.mxu0 0.0
      %5258 = vmatpush2.msra.mxu0 0.0
      %5259 = vmatprep.subr.mxu0 0.0
      %5260 = vmatpush2.msra.mxu0 0.0
      %5261 = vmatprep.subr.mxu0 0.0
      %5262 = vmatpush2.msra.mxu0 0.0
      %5263 = vmatprep.mubr.f32.mxu0 0.0
      %5264 = vmatmul.mubr.f32.gmra.mxu0 %v5197
      %v5265 = vpop.f32.mrf.mxu0
      %v5266 = vadd.f32 0.0, %v5265
      %v5267 = vpop.f32.mrf.mxu0
      %5268 = vdwg.mxu0
      %v5269 = vsel %vm74, %v4570, 0
      %5271 = vmatprep.subr.mxu0 0.0
      %5272 = vmatpush1.msra.mxu0 0.0
      %5273 = vmatprep.subr.mxu0 0.0
      %5274 = vmatpush1.msra.mxu0 0.0
      %5275 = vmatprep.subr.mxu0 0.0
      %5276 = vmatpush1.msra.mxu0 0.0
      %5277 = vmatprep.subr.mxu0 0.0
      %5278 = vmatpush1.msra.mxu0 0.0
      %5279 = vmatprep.subr.mxu0 0.0
      %5280 = vmatpush1.msra.mxu0 0.0
      %5281 = vmatprep.subr.mxu0 0.0
      %5282 = vmatpush1.msra.mxu0 0.0
      %5283 = vmatprep.subr.mxu0 0.0
      %5284 = vmatpush1.msra.mxu0 0.0
      %5285 = vmatprep.subr.mxu0 0.0
      %5286 = vmatpush1.msra.mxu0 0.0
      %5287 = vmatprep.subr.mxu0 0.0
      %5288 = vmatpush1.msra.mxu0 0.0
      %5289 = vmatprep.subr.mxu0 0.0
      %5290 = vmatpush1.msra.mxu0 0.0
      %5291 = vmatprep.subr.mxu0 0.0
      %5292 = vmatpush1.msra.mxu0 0.0
      %5293 = vmatprep.subr.mxu0 0.0
      %5294 = vmatpush1.msra.mxu0 0.0
      %5295 = vmatprep.subr.mxu0 0.0
      %5296 = vmatpush1.msra.mxu0 0.0
      %5297 = vmatprep.subr.mxu0 0.0
      %5298 = vmatpush1.msra.mxu0 0.0
      %5299 = vmatprep.subr.mxu0 0.0
      %5300 = vmatpush1.msra.mxu0 %v4608
      %5301 = vmatprep.subr.mxu0 0.0
      %5302 = vmatpush1.msra.mxu0 %v4607
      %5303 = vmatprep.subr.mxu0 0.0
      %5304 = vmatpush2.msra.mxu0 0.0
      %5305 = vmatprep.subr.mxu0 0.0
      %5306 = vmatpush2.msra.mxu0 0.0
      %5307 = vmatprep.subr.mxu0 0.0
      %5308 = vmatpush2.msra.mxu0 0.0
      %5309 = vmatprep.subr.mxu0 0.0
      %5310 = vmatpush2.msra.mxu0 0.0
      %5311 = vmatprep.subr.mxu0 0.0
      %5312 = vmatpush2.msra.mxu0 0.0
      %5313 = vmatprep.subr.mxu0 0.0
      %5314 = vmatpush2.msra.mxu0 0.0
      %5315 = vmatprep.subr.mxu0 0.0
      %5316 = vmatpush2.msra.mxu0 0.0
      %5317 = vmatprep.subr.mxu0 0.0
      %5318 = vmatpush2.msra.mxu0 0.0
      %5319 = vmatprep.subr.mxu0 0.0
      %5320 = vmatpush2.msra.mxu0 0.0
      %5321 = vmatprep.subr.mxu0 0.0
      %5322 = vmatpush2.msra.mxu0 0.0
      %5323 = vmatprep.subr.mxu0 0.0
      %5324 = vmatpush2.msra.mxu0 0.0
      %5325 = vmatprep.subr.mxu0 0.0
      %5326 = vmatpush2.msra.mxu0 0.0
      %5327 = vmatprep.subr.mxu0 0.0
      %5328 = vmatpush2.msra.mxu0 0.0
      %5329 = vmatprep.subr.mxu0 0.0
      %5330 = vmatpush2.msra.mxu0 0.0
      %5331 = vmatprep.subr.mxu0 0.0
      %5332 = vmatpush2.msra.mxu0 0.0
      %5333 = vmatprep.subr.mxu0 0.0
      %5334 = vmatpush2.msra.mxu0 0.0
      %5335 = vmatprep.mubr.f32.mxu0 0.0
      %5336 = vmatmul.mubr.f32.gmra.mxu0 %v5269
      %v5337 = vpop.f32.mrf.mxu0
      %v5338 = vadd.f32 0.0, %v5337
      %v5339 = vpop.f32.mrf.mxu0
      %5340 = vdwg.mxu0
      %v5341 = vsel %vm74, %v4569, 0
      %5343 = vmatprep.subr.mxu0 0.0
      %5344 = vmatpush1.msra.mxu0 0.0
      %5345 = vmatprep.subr.mxu0 0.0
      %5346 = vmatpush1.msra.mxu0 0.0
      %5347 = vmatprep.subr.mxu0 0.0
      %5348 = vmatpush1.msra.mxu0 0.0
      %5349 = vmatprep.subr.mxu0 0.0
      %5350 = vmatpush1.msra.mxu0 0.0
      %5351 = vmatprep.subr.mxu0 0.0
      %5352 = vmatpush1.msra.mxu0 0.0
      %5353 = vmatprep.subr.mxu0 0.0
      %5354 = vmatpush1.msra.mxu0 0.0
      %5355 = vmatprep.subr.mxu0 0.0
      %5356 = vmatpush1.msra.mxu0 0.0
      %5357 = vmatprep.subr.mxu0 0.0
      %5358 = vmatpush1.msra.mxu0 0.0
      %5359 = vmatprep.subr.mxu0 0.0
      %5360 = vmatpush1.msra.mxu0 0.0
      %5361 = vmatprep.subr.mxu0 0.0
      %5362 = vmatpush1.msra.mxu0 0.0
      %5363 = vmatprep.subr.mxu0 0.0
      %5364 = vmatpush1.msra.mxu0 0.0
      %5365 = vmatprep.subr.mxu0 0.0
      %5366 = vmatpush1.msra.mxu0 0.0
      %5367 = vmatprep.subr.mxu0 0.0
      %5368 = vmatpush1.msra.mxu0 0.0
      %5369 = vmatprep.subr.mxu0 0.0
      %5370 = vmatpush1.msra.mxu0 0.0
      %5371 = vmatprep.subr.mxu0 0.0
      %5372 = vmatpush1.msra.mxu0 %v4610
      %5373 = vmatprep.subr.mxu0 0.0
      %5374 = vmatpush1.msra.mxu0 %v4609
      %5375 = vmatprep.subr.mxu0 0.0
      %5376 = vmatpush2.msra.mxu0 0.0
      %5377 = vmatprep.subr.mxu0 0.0
      %5378 = vmatpush2.msra.mxu0 0.0
      %5379 = vmatprep.subr.mxu0 0.0
      %5380 = vmatpush2.msra.mxu0 0.0
      %5381 = vmatprep.subr.mxu0 0.0
      %5382 = vmatpush2.msra.mxu0 0.0
      %5383 = vmatprep.subr.mxu0 0.0
      %5384 = vmatpush2.msra.mxu0 0.0
      %5385 = vmatprep.subr.mxu0 0.0
      %5386 = vmatpush2.msra.mxu0 0.0
      %5387 = vmatprep.subr.mxu0 0.0
      %5388 = vmatpush2.msra.mxu0 0.0
      %5389 = vmatprep.subr.mxu0 0.0
      %5390 = vmatpush2.msra.mxu0 0.0
      %5391 = vmatprep.subr.mxu0 0.0
      %5392 = vmatpush2.msra.mxu0 0.0
      %5393 = vmatprep.subr.mxu0 0.0
      %5394 = vmatpush2.msra.mxu0 0.0
      %5395 = vmatprep.subr.mxu0 0.0
      %5396 = vmatpush2.msra.mxu0 0.0
      %5397 = vmatprep.subr.mxu0 0.0
      %5398 = vmatpush2.msra.mxu0 0.0
      %5399 = vmatprep.subr.mxu0 0.0
      %5400 = vmatpush2.msra.mxu0 0.0
      %5401 = vmatprep.subr.mxu0 0.0
      %5402 = vmatpush2.msra.mxu0 0.0
      %5403 = vmatprep.subr.mxu0 0.0
      %5404 = vmatpush2.msra.mxu0 0.0
      %5405 = vmatprep.subr.mxu0 0.0
      %5406 = vmatpush2.msra.mxu0 0.0
      %5407 = vmatprep.mubr.f32.mxu0 0.0
      %5408 = vmatmul.mubr.f32.gmra.mxu0 %v5341
      %v5409 = vpop.f32.mrf.mxu0
      %v5410 = vadd.f32 0.0, %v5409
      %v5411 = vpop.f32.mrf.mxu0
      %5412 = vdwg.mxu0
      %v5413 = vsel %vm74, %v4571, 0
      %5415 = vmatprep.subr.mxu0 0.0
      %5416 = vmatpush1.msra.mxu0 0.0
      %5417 = vmatprep.subr.mxu0 0.0
      %5418 = vmatpush1.msra.mxu0 0.0
      %5419 = vmatprep.subr.mxu0 0.0
      %5420 = vmatpush1.msra.mxu0 0.0
      %5421 = vmatprep.subr.mxu0 0.0
      %5422 = vmatpush1.msra.mxu0 0.0
      %5423 = vmatprep.subr.mxu0 0.0
      %5424 = vmatpush1.msra.mxu0 0.0
      %5425 = vmatprep.subr.mxu0 0.0
      %5426 = vmatpush1.msra.mxu0 0.0
      %5427 = vmatprep.subr.mxu0 0.0
      %5428 = vmatpush1.msra.mxu0 0.0
      %5429 = vmatprep.subr.mxu0 0.0
      %5430 = vmatpush1.msra.mxu0 0.0
      %5431 = vmatprep.subr.mxu0 0.0
      %5432 = vmatpush1.msra.mxu0 0.0
      %5433 = vmatprep.subr.mxu0 0.0
      %5434 = vmatpush1.msra.mxu0 0.0
      %5435 = vmatprep.subr.mxu0 0.0
      %5436 = vmatpush1.msra.mxu0 0.0
      %5437 = vmatprep.subr.mxu0 0.0
      %5438 = vmatpush1.msra.mxu0 0.0
      %5439 = vmatprep.subr.mxu0 0.0
      %5440 = vmatpush1.msra.mxu0 0.0
      %5441 = vmatprep.subr.mxu0 0.0
      %5442 = vmatpush1.msra.mxu0 0.0
      %5443 = vmatprep.subr.mxu0 0.0
      %5444 = vmatpush1.msra.mxu0 %v4612
      %5445 = vmatprep.subr.mxu0 0.0
      %5446 = vmatpush1.msra.mxu0 %v4611
      %5447 = vmatprep.subr.mxu0 0.0
      %5448 = vmatpush2.msra.mxu0 0.0
      %5449 = vmatprep.subr.mxu0 0.0
      %5450 = vmatpush2.msra.mxu0 0.0
      %5451 = vmatprep.subr.mxu0 0.0
      %5452 = vmatpush2.msra.mxu0 0.0
      %5453 = vmatprep.subr.mxu0 0.0
      %5454 = vmatpush2.msra.mxu0 0.0
      %5455 = vmatprep.subr.mxu0 0.0
      %5456 = vmatpush2.msra.mxu0 0.0
      %5457 = vmatprep.subr.mxu0 0.0
      %5458 = vmatpush2.msra.mxu0 0.0
      %5459 = vmatprep.subr.mxu0 0.0
      %5460 = vmatpush2.msra.mxu0 0.0
      %5461 = vmatprep.subr.mxu0 0.0
      %5462 = vmatpush2.msra.mxu0 0.0
      %5463 = vmatprep.subr.mxu0 0.0
      %5464 = vmatpush2.msra.mxu0 0.0
      %5465 = vmatprep.subr.mxu0 0.0
      %5466 = vmatpush2.msra.mxu0 0.0
      %5467 = vmatprep.subr.mxu0 0.0
      %5468 = vmatpush2.msra.mxu0 0.0
      %5469 = vmatprep.subr.mxu0 0.0
      %5470 = vmatpush2.msra.mxu0 0.0
      %5471 = vmatprep.subr.mxu0 0.0
      %5472 = vmatpush2.msra.mxu0 0.0
      %5473 = vmatprep.subr.mxu0 0.0
      %5474 = vmatpush2.msra.mxu0 0.0
      %5475 = vmatprep.subr.mxu0 0.0
      %5476 = vmatpush2.msra.mxu0 0.0
      %5477 = vmatprep.subr.mxu0 0.0
      %5478 = vmatpush2.msra.mxu0 0.0
      %5479 = vmatprep.mubr.f32.mxu0 0.0
      %5480 = vmatmul.mubr.f32.gmra.mxu0 %v5413
      %v5481 = vpop.f32.mrf.mxu0
      %v5482 = vadd.f32 0.0, %v5481
      %v5483 = vpop.f32.mrf.mxu0
      %5484 = vdwg.mxu0
      %v5485 = vsel %vm74, %v4579, 0
      %5487 = vmatprep.subr.mxu0 0.0
      %5488 = vmatpush1.msra.mxu0 0.0
      %5489 = vmatprep.subr.mxu0 0.0
      %5490 = vmatpush1.msra.mxu0 0.0
      %5491 = vmatprep.subr.mxu0 0.0
      %5492 = vmatpush1.msra.mxu0 0.0
      %5493 = vmatprep.subr.mxu0 0.0
      %5494 = vmatpush1.msra.mxu0 0.0
      %5495 = vmatprep.subr.mxu0 0.0
      %5496 = vmatpush1.msra.mxu0 0.0
      %5497 = vmatprep.subr.mxu0 0.0
      %5498 = vmatpush1.msra.mxu0 0.0
      %5499 = vmatprep.subr.mxu0 0.0
      %5500 = vmatpush1.msra.mxu0 0.0
      %5501 = vmatprep.subr.mxu0 0.0
      %5502 = vmatpush1.msra.mxu0 0.0
      %5503 = vmatprep.subr.mxu0 0.0
      %5504 = vmatpush1.msra.mxu0 0.0
      %5505 = vmatprep.subr.mxu0 0.0
      %5506 = vmatpush1.msra.mxu0 0.0
      %5507 = vmatprep.subr.mxu0 0.0
      %5508 = vmatpush1.msra.mxu0 0.0
      %5509 = vmatprep.subr.mxu0 0.0
      %5510 = vmatpush1.msra.mxu0 0.0
      %5511 = vmatprep.subr.mxu0 0.0
      %5512 = vmatpush1.msra.mxu0 0.0
      %5513 = vmatprep.subr.mxu0 0.0
      %5514 = vmatpush1.msra.mxu0 0.0
      %5515 = vmatprep.subr.mxu0 0.0
      %5516 = vmatpush1.msra.mxu0 %v4614
      %5517 = vmatprep.subr.mxu0 0.0
      %5518 = vmatpush1.msra.mxu0 %v4613
      %5519 = vmatprep.subr.mxu0 0.0
      %5520 = vmatpush2.msra.mxu0 0.0
      %5521 = vmatprep.subr.mxu0 0.0
      %5522 = vmatpush2.msra.mxu0 0.0
      %5523 = vmatprep.subr.mxu0 0.0
      %5524 = vmatpush2.msra.mxu0 0.0
      %5525 = vmatprep.subr.mxu0 0.0
      %5526 = vmatpush2.msra.mxu0 0.0
      %5527 = vmatprep.subr.mxu0 0.0
      %5528 = vmatpush2.msra.mxu0 0.0
      %5529 = vmatprep.subr.mxu0 0.0
      %5530 = vmatpush2.msra.mxu0 0.0
      %5531 = vmatprep.subr.mxu0 0.0
      %5532 = vmatpush2.msra.mxu0 0.0
      %5533 = vmatprep.subr.mxu0 0.0
      %5534 = vmatpush2.msra.mxu0 0.0
      %5535 = vmatprep.subr.mxu0 0.0
      %5536 = vmatpush2.msra.mxu0 0.0
      %5537 = vmatprep.subr.mxu0 0.0
      %5538 = vmatpush2.msra.mxu0 0.0
      %5539 = vmatprep.subr.mxu0 0.0
      %5540 = vmatpush2.msra.mxu0 0.0
      %5541 = vmatprep.subr.mxu0 0.0
      %5542 = vmatpush2.msra.mxu0 0.0
      %5543 = vmatprep.subr.mxu0 0.0
      %5544 = vmatpush2.msra.mxu0 0.0
      %5545 = vmatprep.subr.mxu0 0.0
      %5546 = vmatpush2.msra.mxu0 0.0
      %5547 = vmatprep.subr.mxu0 0.0
      %5548 = vmatpush2.msra.mxu0 0.0
      %5549 = vmatprep.subr.mxu0 0.0
      %5550 = vmatpush2.msra.mxu0 0.0
      %5551 = vmatprep.mubr.f32.mxu0 0.0
      %5552 = vmatmul.mubr.f32.gmra.mxu0 %v5485
      %v5553 = vpop.f32.mrf.mxu0
      %v5554 = vadd.f32 0.0, %v5553
      %v5555 = vpop.f32.mrf.mxu0
      %5556 = vdwg.mxu0
      %v5557 = vsel %vm74, %v4587, 0
      %5559 = vmatprep.subr.mxu0 0.0
      %5560 = vmatpush1.msra.mxu0 0.0
      %5561 = vmatprep.subr.mxu0 0.0
      %5562 = vmatpush1.msra.mxu0 0.0
      %5563 = vmatprep.subr.mxu0 0.0
      %5564 = vmatpush1.msra.mxu0 0.0
      %5565 = vmatprep.subr.mxu0 0.0
      %5566 = vmatpush1.msra.mxu0 0.0
      %5567 = vmatprep.subr.mxu0 0.0
      %5568 = vmatpush1.msra.mxu0 0.0
      %5569 = vmatprep.subr.mxu0 0.0
      %5570 = vmatpush1.msra.mxu0 0.0
      %5571 = vmatprep.subr.mxu0 0.0
      %5572 = vmatpush1.msra.mxu0 0.0
      %5573 = vmatprep.subr.mxu0 0.0
      %5574 = vmatpush1.msra.mxu0 0.0
      %5575 = vmatprep.subr.mxu0 0.0
      %5576 = vmatpush1.msra.mxu0 0.0
      %5577 = vmatprep.subr.mxu0 0.0
      %5578 = vmatpush1.msra.mxu0 0.0
      %5579 = vmatprep.subr.mxu0 0.0
      %5580 = vmatpush1.msra.mxu0 0.0
      %5581 = vmatprep.subr.mxu0 0.0
      %5582 = vmatpush1.msra.mxu0 0.0
      %5583 = vmatprep.subr.mxu0 0.0
      %5584 = vmatpush1.msra.mxu0 0.0
      %5585 = vmatprep.subr.mxu0 0.0
      %5586 = vmatpush1.msra.mxu0 0.0
      %5587 = vmatprep.subr.mxu0 0.0
      %5588 = vmatpush1.msra.mxu0 %v4616
      %5589 = vmatprep.subr.mxu0 0.0
      %5590 = vmatpush1.msra.mxu0 %v4615
      %5591 = vmatprep.subr.mxu0 0.0
      %5592 = vmatpush2.msra.mxu0 0.0
      %5593 = vmatprep.subr.mxu0 0.0
      %5594 = vmatpush2.msra.mxu0 0.0
      %5595 = vmatprep.subr.mxu0 0.0
      %5596 = vmatpush2.msra.mxu0 0.0
      %5597 = vmatprep.subr.mxu0 0.0
      %5598 = vmatpush2.msra.mxu0 0.0
      %5599 = vmatprep.subr.mxu0 0.0
      %5600 = vmatpush2.msra.mxu0 0.0
      %5601 = vmatprep.subr.mxu0 0.0
      %5602 = vmatpush2.msra.mxu0 0.0
      %5603 = vmatprep.subr.mxu0 0.0
      %5604 = vmatpush2.msra.mxu0 0.0
      %5605 = vmatprep.subr.mxu0 0.0
      %5606 = vmatpush2.msra.mxu0 0.0
      %5607 = vmatprep.subr.mxu0 0.0
      %5608 = vmatpush2.msra.mxu0 0.0
      %5609 = vmatprep.subr.mxu0 0.0
      %5610 = vmatpush2.msra.mxu0 0.0
      %5611 = vmatprep.subr.mxu0 0.0
      %5612 = vmatpush2.msra.mxu0 0.0
      %5613 = vmatprep.subr.mxu0 0.0
      %5614 = vmatpush2.msra.mxu0 0.0
      %5615 = vmatprep.subr.mxu0 0.0
      %5616 = vmatpush2.msra.mxu0 0.0
      %5617 = vmatprep.subr.mxu0 0.0
      %5618 = vmatpush2.msra.mxu0 0.0
      %5619 = vmatprep.subr.mxu0 0.0
      %5620 = vmatpush2.msra.mxu0 0.0
      %5621 = vmatprep.subr.mxu0 0.0
      %5622 = vmatpush2.msra.mxu0 0.0
      %5623 = vmatprep.mubr.f32.mxu0 0.0
      %5624 = vmatmul.mubr.f32.gmra.mxu0 %v5557
      %v5625 = vpop.f32.mrf.mxu0
      %v5626 = vadd.f32 0.0, %v5625
      %v5627 = vpop.f32.mrf.mxu0
      %5628 = vdwg.mxu0
      %v5629 = vsel %vm74, %v4586, 0
      %5631 = vmatprep.subr.mxu0 0.0
      %5632 = vmatpush1.msra.mxu0 0.0
      %5633 = vmatprep.subr.mxu0 0.0
      %5634 = vmatpush1.msra.mxu0 0.0
      %5635 = vmatprep.subr.mxu0 0.0
      %5636 = vmatpush1.msra.mxu0 0.0
      %5637 = vmatprep.subr.mxu0 0.0
      %5638 = vmatpush1.msra.mxu0 0.0
      %5639 = vmatprep.subr.mxu0 0.0
      %5640 = vmatpush1.msra.mxu0 0.0
      %5641 = vmatprep.subr.mxu0 0.0
      %5642 = vmatpush1.msra.mxu0 0.0
      %5643 = vmatprep.subr.mxu0 0.0
      %5644 = vmatpush1.msra.mxu0 0.0
      %5645 = vmatprep.subr.mxu0 0.0
      %5646 = vmatpush1.msra.mxu0 0.0
      %5647 = vmatprep.subr.mxu0 0.0
      %5648 = vmatpush1.msra.mxu0 0.0
      %5649 = vmatprep.subr.mxu0 0.0
      %5650 = vmatpush1.msra.mxu0 0.0
      %5651 = vmatprep.subr.mxu0 0.0
      %5652 = vmatpush1.msra.mxu0 0.0
      %5653 = vmatprep.subr.mxu0 0.0
      %5654 = vmatpush1.msra.mxu0 0.0
      %5655 = vmatprep.subr.mxu0 0.0
      %5656 = vmatpush1.msra.mxu0 0.0
      %5657 = vmatprep.subr.mxu0 0.0
      %5658 = vmatpush1.msra.mxu0 0.0
      %5659 = vmatprep.subr.mxu0 0.0
      %5660 = vmatpush1.msra.mxu0 %v4618
      %5661 = vmatprep.subr.mxu0 0.0
      %5662 = vmatpush1.msra.mxu0 %v4617
      %5663 = vmatprep.subr.mxu0 0.0
      %5664 = vmatpush2.msra.mxu0 0.0
      %5665 = vmatprep.subr.mxu0 0.0
      %5666 = vmatpush2.msra.mxu0 0.0
      %5667 = vmatprep.subr.mxu0 0.0
      %5668 = vmatpush2.msra.mxu0 0.0
      %5669 = vmatprep.subr.mxu0 0.0
      %5670 = vmatpush2.msra.mxu0 0.0
      %5671 = vmatprep.subr.mxu0 0.0
      %5672 = vmatpush2.msra.mxu0 0.0
      %5673 = vmatprep.subr.mxu0 0.0
      %5674 = vmatpush2.msra.mxu0 0.0
      %5675 = vmatprep.subr.mxu0 0.0
      %5676 = vmatpush2.msra.mxu0 0.0
      %5677 = vmatprep.subr.mxu0 0.0
      %5678 = vmatpush2.msra.mxu0 0.0
      %5679 = vmatprep.subr.mxu0 0.0
      %5680 = vmatpush2.msra.mxu0 0.0
      %5681 = vmatprep.subr.mxu0 0.0
      %5682 = vmatpush2.msra.mxu0 0.0
      %5683 = vmatprep.subr.mxu0 0.0
      %5684 = vmatpush2.msra.mxu0 0.0
      %5685 = vmatprep.subr.mxu0 0.0
      %5686 = vmatpush2.msra.mxu0 0.0
      %5687 = vmatprep.subr.mxu0 0.0
      %5688 = vmatpush2.msra.mxu0 0.0
      %5689 = vmatprep.subr.mxu0 0.0
      %5690 = vmatpush2.msra.mxu0 0.0
      %5691 = vmatprep.subr.mxu0 0.0
      %5692 = vmatpush2.msra.mxu0 0.0
      %5693 = vmatprep.subr.mxu0 0.0
      %5694 = vmatpush2.msra.mxu0 0.0
      %5695 = vmatprep.mubr.f32.mxu0 0.0
      %5696 = vmatmul.mubr.f32.gmra.mxu0 %v5629
      %v5697 = vpop.f32.mrf.mxu0
      %v5698 = vadd.f32 0.0, %v5697
      %v5699 = vpop.f32.mrf.mxu0
      %5700 = vdwg.mxu0
      %v5701 = vsel %vm74, %v4588, 0
      %5703 = vmatprep.subr.mxu0 0.0
      %5704 = vmatpush1.msra.mxu0 0.0
      %5705 = vmatprep.subr.mxu0 0.0
      %5706 = vmatpush1.msra.mxu0 0.0
      %5707 = vmatprep.subr.mxu0 0.0
      %5708 = vmatpush1.msra.mxu0 0.0
      %5709 = vmatprep.subr.mxu0 0.0
      %5710 = vmatpush1.msra.mxu0 0.0
      %5711 = vmatprep.subr.mxu0 0.0
      %5712 = vmatpush1.msra.mxu0 0.0
      %5713 = vmatprep.subr.mxu0 0.0
      %5714 = vmatpush1.msra.mxu0 0.0
      %5715 = vmatprep.subr.mxu0 0.0
      %5716 = vmatpush1.msra.mxu0 0.0
      %5717 = vmatprep.subr.mxu0 0.0
      %5718 = vmatpush1.msra.mxu0 0.0
      %5719 = vmatprep.subr.mxu0 0.0
      %5720 = vmatpush1.msra.mxu0 0.0
      %5721 = vmatprep.subr.mxu0 0.0
      %5722 = vmatpush1.msra.mxu0 0.0
      %5723 = vmatprep.subr.mxu0 0.0
      %5724 = vmatpush1.msra.mxu0 0.0
      %5725 = vmatprep.subr.mxu0 0.0
      %5726 = vmatpush1.msra.mxu0 0.0
      %5727 = vmatprep.subr.mxu0 0.0
      %5728 = vmatpush1.msra.mxu0 0.0
      %5729 = vmatprep.subr.mxu0 0.0
      %5730 = vmatpush1.msra.mxu0 0.0
      %5731 = vmatprep.subr.mxu0 0.0
      %5732 = vmatpush1.msra.mxu0 %v4620
      %5733 = vmatprep.subr.mxu0 0.0
      %5734 = vmatpush1.msra.mxu0 %v4619
      %5735 = vmatprep.subr.mxu0 0.0
      %5736 = vmatpush2.msra.mxu0 0.0
      %5737 = vmatprep.subr.mxu0 0.0
      %5738 = vmatpush2.msra.mxu0 0.0
      %5739 = vmatprep.subr.mxu0 0.0
      %5740 = vmatpush2.msra.mxu0 0.0
      %5741 = vmatprep.subr.mxu0 0.0
      %5742 = vmatpush2.msra.mxu0 0.0
      %5743 = vmatprep.subr.mxu0 0.0
      %5744 = vmatpush2.msra.mxu0 0.0
      %5745 = vmatprep.subr.mxu0 0.0
      %5746 = vmatpush2.msra.mxu0 0.0
      %5747 = vmatprep.subr.mxu0 0.0
      %5748 = vmatpush2.msra.mxu0 0.0
      %5749 = vmatprep.subr.mxu0 0.0
      %5750 = vmatpush2.msra.mxu0 0.0
      %5751 = vmatprep.subr.mxu0 0.0
      %5752 = vmatpush2.msra.mxu0 0.0
      %5753 = vmatprep.subr.mxu0 0.0
      %5754 = vmatpush2.msra.mxu0 0.0
      %5755 = vmatprep.subr.mxu0 0.0
      %5756 = vmatpush2.msra.mxu0 0.0
      %5757 = vmatprep.subr.mxu0 0.0
      %5758 = vmatpush2.msra.mxu0 0.0
      %5759 = vmatprep.subr.mxu0 0.0
      %5760 = vmatpush2.msra.mxu0 0.0
      %5761 = vmatprep.subr.mxu0 0.0
      %5762 = vmatpush2.msra.mxu0 0.0
      %5763 = vmatprep.subr.mxu0 0.0
      %5764 = vmatpush2.msra.mxu0 0.0
      %5765 = vmatprep.subr.mxu0 0.0
      %5766 = vmatpush2.msra.mxu0 0.0
      %5767 = vmatprep.mubr.f32.mxu0 0.0
      %5768 = vmatmul.mubr.f32.gmra.mxu0 %v5701
      %v5769 = vpop.f32.mrf.mxu0
      %v5770 = vadd.f32 0.0, %v5769
      %v5771 = vpop.f32.mrf.mxu0
      %5772 = vdwg.mxu0
      %v5773 = vsel %vm4446, %v4690, 0.0
      %v5774 = vsel %vm4446, %v5266, 0.0
      %v5775 = vadd.f32 %v5773, %v5774
      %v5776 = vsel %vm4446, %v4762, 0.0
      %v5777 = vsel %vm4446, %v5338, 0.0
      %v5778 = vadd.f32 %v5776, %v5777
      %v5779 = vsel %vm4446, %v4834, 0.0
      %v5780 = vsel %vm4446, %v5410, 0.0
      %v5781 = vadd.f32 %v5779, %v5780
      %v5782 = vsel %vm4446, %v4906, 0.0
      %v5783 = vsel %vm4446, %v5482, 0.0
      %v5784 = vadd.f32 %v5782, %v5783
      %v5785 = vsel %vm4446, %v4978, 0.0
      %v5786 = vsel %vm4446, %v5554, 0.0
      %v5787 = vadd.f32 %v5785, %v5786
      %v5788 = vsel %vm4446, %v5050, 0.0
      %v5789 = vsel %vm4446, %v5626, 0.0
      %v5790 = vadd.f32 %v5788, %v5789
      %v5791 = vsel %vm4446, %v5122, 0.0
      %v5792 = vsel %vm4446, %v5698, 0.0
      %v5793 = vadd.f32 %v5791, %v5792
      %v5794 = vsel %vm4446, %v5194, 0.0
      %v5795 = vsel %vm4446, %v5770, 0.0
      %v5796 = vadd.f32 %v5794, %v5795
      %v5805 = vcombine.low %v5775, %v5778
      %v5806 = vcombine.low %v5781, %v5784
      %v5808 = vunpack.c.l.s4 1983009808
      %v5809 = vunpack.c.0.s8 %v5808
      %v5810 = vlaneseq
      %v5811 = vshrl.u32 %v5810, 7
      %v5812 = vsub.s32 %v5809, %v5811
      %v5813 = vrot.slane %v5805, %v5812
      %v5815 = vunpack.c.l.s4 1983009808
      %v5816 = vunpack.c.0.s8 %v5815
      %v5817 = vlaneseq
      %v5818 = vshrl.u32 %v5817, 7
      %v5819 = vsub.s32 %v5816, %v5818
      %v5820 = vrot.slane %v5806, %v5819
      %v5821 = vcombine.low %v5813, %v5820
      %v5822 = vcombine.low %v5787, %v5790
      %v5823 = vcombine.low %v5793, %v5796
      %v5825 = vunpack.c.l.s4 1983009808
      %v5826 = vunpack.c.0.s8 %v5825
      %v5827 = vlaneseq
      %v5828 = vshrl.u32 %v5827, 7
      %v5829 = vsub.s32 %v5826, %v5828
      %v5830 = vrot.slane %v5822, %v5829
      %v5832 = vunpack.c.l.s4 1983009808
      %v5833 = vunpack.c.0.s8 %v5832
      %v5834 = vlaneseq
      %v5835 = vshrl.u32 %v5834, 7
      %v5836 = vsub.s32 %v5833, %v5835
      %v5837 = vrot.slane %v5823, %v5836
      %v5838 = vcombine.low %v5830, %v5837
      %v5841 = vadd.f32 %v4515, %v5821
      %v5842 = vadd.f32 %v4516, %v5838
      %v5843 = vtanh.pop %v5841
      %v5844 = vtanh.pop %v5842
      %5845 = vrot.lane.b32.xlu0 %v87, 16
      %v5846 = vpop.permute.xlu0 %5845
      %5847 = vrot.lane.b32.xlu0 %v88, 16
      %v5848 = vpop.permute.xlu0 %5847
      %v5851 = vmul.f32 %v3170, %v5846
      %v5852 = vmul.f32 %v3172, %v5848
      %v5853 = vsub.f32 1.0, %v3170
      %v5854 = vsub.f32 1.0, %v3172
      %5857 = vrot.lane.b32.xlu0 %v5843, 16
      %v5858 = vpop.permute.xlu0 %5857
      %5859 = vrot.lane.b32.xlu0 %v5844, 16
      %v5860 = vpop.permute.xlu0 %5859
      %v5863 = vmul.f32 %v5853, %v5858
      %v5864 = vmul.f32 %v5854, %v5860
      %v5865 = vadd.f32 %v5851, %v5863
      %v5866 = vadd.f32 %v5852, %v5864
      %5869 = vrot.lane.b32.xlu0 %v5865, 112
      %v5870 = vpop.permute.xlu0 %5869
      %5871 = vrot.lane.b32.xlu0 %v5866, 112
      %v5872 = vpop.permute.xlu0 %5871
      %5875 = vst.msk [vmem:[#allocation2] sm:$0xff] %vm74, %v5870
      %5876 = vst.msk [vmem:[#allocation2 + $0x8] sm:$0xff] %vm74, %v5872
      %s5877 = scalar_lea.vmem [#allocation8], %s83
      %5878 = vst.msk [vmem:[%s5877] sm:$0xff] %vm74, %v5870
      %5879 = vst.msk [vmem:[%s5877 + $0x8] sm:$0xff] %vm74, %v5872
      %s5880 = scalar_lea.vmem %s13, %s83
      %vm5881 = vcmask 7168
      %5882 = vst.msk [vmem:[%s5880] sm:$0xff] %vm5881, %v277
      %5883 = vst.msk [vmem:[%s5880 + $0x8] sm:$0xff] %vm5881, %v279
    $region62: #{tpu_custom_call.1} parent=1 // loop_footer
      %s82 = sadd.s32 1, %s78
    $region63: #{tpu_custom_call.1} parent=1 // loop_footer_branch
      %77 = sbr.rel target = $region59
    $region64: #{tpu_custom_call.1} parent=1 // loop_exit
      _
    // Predicated region
    $region65: #{tpu_custom_call.1} parent=1 // pred_check
      _
    $region66: #{tpu_custom_call.1} parent=1 // pred_check_branch
      %5885 = sbr.rel (0) target = $region68
    $region67: #{tpu_custom_call.1} parent=1 // pred_region
      %s5887 = ssub.s32 2048, 2048
      %5888 = vsyncadd [#allocation5], %s5887
      %s5889 = sshll.u32 [#allocation8], 4
      %s5890 = int_to_ptr.vmem [resolvable:$true] %s5889
      %5895 = dma.vmem_to_hbm [thread:$0]  %s5890, 2048, %s12, [#allocation5], 128, 128, 8
    $region68: #{tpu_custom_call.1} parent=1 // pred_fallthru
      _
    // Predicated region
    $region69: #{tpu_custom_call.1} parent=1 // pred_check
      _
    $region70: #{tpu_custom_call.1} parent=1 // pred_check_branch
      %5897 = sbr.rel (0) target = $region72
    $region71: #{tpu_custom_call.1} parent=1 // pred_region
      _
    $region72: #{tpu_custom_call.1} parent=1 // pred_fallthru
      _
    // Predicated region
    $region73: #{tpu_custom_call.1} parent=1 // pred_check
      _
    $region74: #{tpu_custom_call.1} parent=1 // pred_check_branch
      %5899 = sbr.rel (0) target = $region76
    $region75: #{tpu_custom_call.1} parent=1 // pred_region
      %5900 = dma.done [#allocation5], 2048
    $region76: #{tpu_custom_call.1} parent=1 // pred_fallthru
      _
    // Predicated region
    $region77: #{tpu_custom_call.1} parent=1 // pred_check
      _
    $region78: #{tpu_custom_call.1} parent=1 // pred_check_branch
      %5902 = sbr.rel (0) target = $region80
    $region79: #{tpu_custom_call.1} parent=1 // pred_region
      _
    $region80: #{tpu_custom_call.1} parent=1 // pred_fallthru
      _
    %5903 = vsyncpa [#allocation4], 1
    %5904 = vsyncpa [#allocation7], 1
    %5905 = vsyncpa [#allocation5], 1

</llo_original>
